<compile_context>
chip_gen: v7x
topology: tpu7x:2x2x1
jax: 0.10.0
libtpu: 0.0.40
codegen_flags: <defaults>
</compile_context>

<pallas_src>
import functools

import numpy as np

import jax
import jax.numpy as jnp
from jax.experimental import pallas as pl
from jax.experimental.pallas import tpu as pltpu


# ------------------------- model geometry (stand-in backbone) -----------------
HIN = WIN = 16                # input spatial
CIN = 3                       # input channels
C1 = 8                        # conv1 / layer1 channels
C2 = 16                       # layer2 channels
HPOOL = HIN // 2              # spatial after 2x2/2 maxpool (8)
H2 = HPOOL // 2               # spatial after layer2 stride-2 conv (4)

LEAD = 8                      # leading zero rows (top pad of image 0 + alignment)
BLK0 = 24                     # rows/image in conv1 input buffer   (16 data + 8 pad)
BLK1 = 16                     # rows/image in pooled/layer1 buffers ( 8 data + 8 pad)
BLK2 = 8                      # rows/image in layer2 buffers        ( 4 data + 4 pad)

LANES_IN = CIN * WIN          # 48  : conv1 input lanes   (c, w)
LANES1 = HPOOL * C1           # 64  : pooled/layer1 lanes (w, c)
LANES2 = H2 * C2              # 64  : layer2 lanes        (w, c)
FEAT = H2 * LANES2            # 256 : flattened feature lanes (ho, wo, c)

FC_DIM = 32
OUT_DIM = 8

# ----------------------- packed weight-slab row offsets -----------------------
OFF_C1 = 0                            # conv1 banded      : 3 x 48 rows, 128 cols
OFF_A = OFF_C1 + 3 * LANES_IN         # layer1a banded    : 3 x 64 rows,  64 cols
OFF_B = OFF_A + 3 * LANES1            # layer1b banded    : 3 x 64 rows,  64 cols
OFF_2A = OFF_B + 3 * LANES1           # layer2a + fused ds: 3 x 64 rows, 128 cols
OFF_2B = OFF_2A + 3 * LANES1          # layer2b banded    : 3 x 64 rows,  64 cols
OFF_F1 = OFF_2B + 3 * LANES2          # fc1 (flatten-permuted): 256 rows, 32 cols
OFF_F2 = OFF_F1 + FEAT                # fc2               :  32 rows, 32 cols
OFF_F3 = OFF_F2 + FC_DIM              # fc3               :  32 rows,  8 cols
W_ROWS = OFF_F3 + FC_DIM              # 1232 (multiple of 16 -> vreg-aligned bf16 loads)
S_ROWS = 8                            # shift/bias slab rows


# ------------------------------ fused kernel ----------------------------------

def _siamese_fused_kernel(
        x1_ref, x2_ref, w_ref, s_ref,
        o1_ref, o2_ref,
        xin_ref, pool_ref, bufp_ref, bufq_ref, bufr_ref,
        bufev_ref, bufod_ref, bufs_ref, bufz_ref, feat_ref,
        *, n_img):
    """Whole SiameseNetwork forward (both branches batched) fully VMEM-resident."""
    bf16 = jnp.bfloat16
    f32 = jnp.float32
    n_half = n_img // 2
    R0 = LEAD + n_img * BLK0
    R1 = LEAD + n_img * BLK1
    R2 = LEAD + n_img * BLK2

    def mm(a, w):
        # bf16 MXU operands, f32 accumulation.
        return jnp.dot(a.astype(w.dtype), w, preferred_element_type=f32)

    def zero_pads(ref, blk, ndata, lanes):
        # zero only leading rows + per-image tail rows (data rows are written once).
        ref[0:LEAD, :] = jnp.zeros((LEAD, lanes), f32)
        for n in range(n_img):
            d = LEAD + n * blk
            ref[d + ndata:d + blk, :] = jnp.zeros((blk - ndata, lanes), f32)

    # ---- stage raw NCHW inputs into lane-folded (c, w), h-padded layout -------
    zero_pads(xin_ref, BLK0, HIN, LANES_IN)
    for n in range(n_img):
        d = LEAD + n * BLK0
        src = x1_ref if n < n_half else x2_ref
        i = n if n < n_half else n - n_half
        for c in range(CIN):
            r = (i * CIN + c) * HIN
            xin_ref[d:d + HIN, c * WIN:(c + 1) * WIN] = src[r:r + HIN, :]

    # ---- conv1 (3x3 s1 p1, 3->8) + folded BN + ReLU ---------------------------
    # output lanes are w-parity split so the maxpool w-reduction is a lane-half max.
    xb = xin_ref[...].astype(bf16)                                  # cast ONCE
    a1 = (mm(xb[0:R0 - 2, :], w_ref[OFF_C1:OFF_C1 + LANES_IN, :]) +
          mm(xb[1:R0 - 1, :], w_ref[OFF_C1 + LANES_IN:OFF_C1 + 2 * LANES_IN, :]) +
          mm(xb[2:R0, :], w_ref[OFF_C1 + 2 * LANES_IN:OFF_C1 + 3 * LANES_IN, :]))
    a1 = jnp.maximum(a1 + s_ref[0:1, :], 0.0)                       # [R0-2, 128]

    # ---- fused 2x2/2 maxpool: lane-half max (w) + adjacent-row max (h) --------
    wmax = jnp.maximum(a1[:, 0:LANES1], a1[:, LANES1:2 * LANES1])   # [R0-2, 64]
    pool_ref[0:R0 - 3, :] = jnp.maximum(wmax[0:R0 - 3, :], wmax[1:R0 - 2, :])
    pool_ref[R0 - 3:R0, :] = jnp.zeros((3, LANES1), f32)
    zero_pads(bufp_ref, BLK1, HPOOL, LANES1)
    for n in range(n_img):                                          # even-h subsample
        d0 = LEAD + n * BLK0
        d1 = LEAD + n * BLK1
        bufp_ref[d1:d1 + HPOOL, :] = pool_ref[pl.ds(d0 - 1, HPOOL, stride=2), :]

    # ---- layer1: basic block (two 3x3 s1 convs, 8->8, identity skip) ----------
    xpb = bufp_ref[...].astype(bf16)
    h = (mm(xpb[0:R1 - 2, :], w_ref[OFF_A:OFF_A + LANES1, 0:LANES1]) +
         mm(xpb[1:R1 - 1, :], w_ref[OFF_A + LANES1:OFF_A + 2 * LANES1, 0:LANES1]) +
         mm(xpb[2:R1, :], w_ref[OFF_A + 2 * LANES1:OFF_A + 3 * LANES1, 0:LANES1]))
    h = jnp.maximum(h + s_ref[1:2, 0:LANES1], 0.0)
    zero_pads(bufq_ref, BLK1, HPOOL, LANES1)
    for n in range(n_img):
        d = LEAD + n * BLK1
        bufq_ref[d:d + HPOOL, :] = h[d - 1:d - 1 + HPOOL, :]

    xqb = bufq_ref[...].astype(bf16)
    h = (mm(xqb[0:R1 - 2, :], w_ref[OFF_B:OFF_B + LANES1, 0:LANES1]) +
         mm(xqb[1:R1 - 1, :], w_ref[OFF_B + LANES1:OFF_B + 2 * LANES1, 0:LANES1]) +
         mm(xqb[2:R1, :], w_ref[OFF_B + 2 * LANES1:OFF_B + 3 * LANES1, 0:LANES1]))
    h = jnp.maximum(h + s_ref[2:3, 0:LANES1] + bufp_ref[1:R1 - 1, :], 0.0)   # residual
    zero_pads(bufr_ref, BLK1, HPOOL, LANES1)
    for n in range(n_img):
        d = LEAD + n * BLK1
        bufr_ref[d:d + HPOOL, :] = h[d - 1:d - 1 + HPOOL, :]

    # ---- layer2: h-parity split of layer1 output ------------------------------
    zero_pads(bufev_ref, BLK2, H2, LANES1)
    zero_pads(bufod_ref, BLK2, H2, LANES1)
    for n in range(n_img):
        d1 = LEAD + n * BLK1
        d2 = LEAD + n * BLK2
        bufev_ref[d2:d2 + H2, :] = bufr_ref[pl.ds(d1, H2, stride=2), :]       # h = 0,2,4,6
        bufod_ref[d2:d2 + H2, :] = bufr_ref[pl.ds(d1 + 1, H2, stride=2), :]   # h = 1,3,5,7

    # ---- layer2a: 3x3 s2 (8->16) with 1x1 s2 downsample fused into tap 1 ------
    xeb = bufev_ref[...].astype(bf16)
    xob = bufod_ref[...].astype(bf16)
    comb = (mm(xob[0:R2 - 2, :], w_ref[OFF_2A:OFF_2A + LANES1, :]) +
            mm(xeb[1:R2 - 1, :], w_ref[OFF_2A + LANES1:OFF_2A + 2 * LANES1, :]) +
            mm(xob[1:R2 - 1, :], w_ref[OFF_2A + 2 * LANES1:OFF_2A + 3 * LANES1, :]))
    comb = comb + s_ref[3:4, :]                       # [conv shift | downsample shift]
    g = jnp.maximum(comb[:, 0:LANES2], 0.0)           # conv path (post BN+ReLU)
    ds = comb[:, LANES2:2 * LANES2]                   # 1x1/2 downsample path (no ReLU)

    zero_pads(bufs_ref, BLK2, H2, LANES2)
    for n in range(n_img):
        d2 = LEAD + n * BLK2
        bufs_ref[d2:d2 + H2, :] = g[d2 - 1:d2 - 1 + H2, :]

    # ---- layer2b: 3x3 s1 (16->16) + downsample residual + ReLU ----------------
    xsb = bufs_ref[...].astype(bf16)
    h2 = (mm(xsb[0:R2 - 2, :], w_ref[OFF_2B:OFF_2B + LANES2, 0:LANES2]) +
          mm(xsb[1:R2 - 1, :], w_ref[OFF_2B + LANES2:OFF_2B + 2 * LANES2, 0:LANES2]) +
          mm(xsb[2:R2, :], w_ref[OFF_2B + 2 * LANES2:OFF_2B + 3 * LANES2, 0:LANES2]))
    h2 = jnp.maximum(h2 + s_ref[4:5, 0:LANES2] + ds, 0.0)
    bufz_ref[0:R2 - 2, :] = h2
    bufz_ref[R2 - 2:R2, :] = jnp.zeros((2, LANES2), f32)

    # ---- FC head: gather lane-dense [n, 256] features, fc1 as ONE matmul ------
    feat_ref[...] = jnp.zeros(feat_ref.shape, f32)
    for ho in range(H2):
        feat_ref[0:n_img, ho * LANES2:(ho + 1) * LANES2] = \
            bufz_ref[pl.ds(LEAD - 1 + ho, n_img, stride=BLK2), :]
    z = jnp.maximum(mm(feat_ref[...], w_ref[OFF_F1:OFF_F1 + FEAT, 0:FC_DIM])
                    + s_ref[5:6, 0:FC_DIM], 0.0)
    z = jnp.maximum(mm(z, w_ref[OFF_F2:OFF_F2 + FC_DIM, 0:FC_DIM])
                    + s_ref[6:7, 0:FC_DIM], 0.0)
    out = mm(z, w_ref[OFF_F3:OFF_F3 + FC_DIM, 0:OUT_DIM]) + s_ref[7:8, 0:OUT_DIM]
    o1_ref[...] = out[0:n_half, :]
    o2_ref[...] = out[n_half:n_img, :]


# ------------------------------ JAX wrapper ------------------------------------

def siamese_forward(input1, input2, wslab, sslab):
    """Runs both siamese branches (shared weights) in one fused Pallas kernel call."""
    assert input1.shape == input2.shape
    n_half = input1.shape[0]
    n = 2 * n_half
    # free, layout-preserving reshapes only (no transpose / pad / concat on host)
    x1 = input1.astype(jnp.float32).reshape(n_half * CIN * HIN, WIN)
    x2 = input2.astype(jnp.float32).reshape(n_half * CIN * HIN, WIN)

    R0 = LEAD + n * BLK0
    R1 = LEAD + n * BLK1
    R2 = LEAD + n * BLK2
    feat_rows = max(8, ((n + 7) // 8) * 8)
    vspec = pl.BlockSpec(memory_space=pltpu.MemorySpace.VMEM)

    out1, out2 = pl.pallas_call(
        functools.partial(_siamese_fused_kernel, n_img=n),
        out_shape=(jax.ShapeDtypeStruct((n_half, OUT_DIM), jnp.float32),
                   jax.ShapeDtypeStruct((n_half, OUT_DIM), jnp.float32)),
        in_specs=[vspec] * 4,
        out_specs=(vspec, vspec),
        scratch_shapes=[
            pltpu.VMEM((R0, LANES_IN), jnp.float32),   # xin   : conv1 input (h-padded)
            pltpu.VMEM((R0, LANES1), jnp.float32),     # pool  : pooled rows pre-subsample
            pltpu.VMEM((R1, LANES1), jnp.float32),     # bufp  : layer1 input
            pltpu.VMEM((R1, LANES1), jnp.float32),     # bufq  : layer1 conv-a out
            pltpu.VMEM((R1, LANES1), jnp.float32),     # bufr  : layer1 block out
            pltpu.VMEM((R2, LANES1), jnp.float32),     # bufev : even-h rows of bufr
            pltpu.VMEM((R2, LANES1), jnp.float32),     # bufod : odd-h rows of bufr
            pltpu.VMEM((R2, LANES2), jnp.float32),     # bufs  : layer2 conv-a out
            pltpu.VMEM((R2, LANES2), jnp.float32),     # bufz  : layer2 block out
            pltpu.VMEM((feat_rows, FEAT), jnp.float32),  # feat : flattened features
        ],
    )(x1, x2, wslab, sslab)
    return out1, out2


# --------------------------- parameters & offline prep -------------------------

def init_params(key):
    """Deterministic stand-in parameters in PyTorch layouts (conv: [Cout,Cin,kh,kw])."""
    ks = iter(jax.random.split(key, 40))

    def rnd(shape, scale=0.1):
        return jax.random.normal(next(ks), shape, jnp.float32) * scale

    def bn(c):
        return dict(
            gamma=1.0 + 0.1 * jax.random.normal(next(ks), (c,), jnp.float32),
            beta=0.1 * jax.random.normal(next(ks), (c,), jnp.float32),
            mean=0.1 * jax.random.normal(next(ks), (c,), jnp.float32),
            var=0.5 + jax.random.uniform(next(ks), (c,), jnp.float32))

    p = {}
    p["conv1_w"], p["conv1_bn"] = rnd((C1, CIN, 3, 3)), bn(C1)
    p["l1a_w"], p["l1a_bn"] = rnd((C1, C1, 3, 3)), bn(C1)
    p["l1b_w"], p["l1b_bn"] = rnd((C1, C1, 3, 3)), bn(C1)
    p["l2a_w"], p["l2a_bn"] = rnd((C2, C1, 3, 3)), bn(C2)
    p["l2b_w"], p["l2b_bn"] = rnd((C2, C2, 3, 3)), bn(C2)
    p["l2d_w"], p["l2d_bn"] = rnd((C2, CIN * 0 + C1, 1, 1)), bn(C2)
    feat = C2 * H2 * H2
    p["fc1_w"], p["fc1_b"] = rnd((feat, FC_DIM)), rnd((FC_DIM,))
    p["fc2_w"], p["fc2_b"] = rnd((FC_DIM, FC_DIM)), rnd((FC_DIM,))
    p["fc3_w"], p["fc3_b"] = rnd((FC_DIM, OUT_DIM)), rnd((OUT_DIM,))
    return p


def prepare_params(p):
    """Offline prep: fold BN into conv weights, build banded (w-tap + channel) matrices,
    fold NCHW flatten into fc1's rows, pack everything into 2 slabs (bf16 W, f32 shifts)."""

    def npf(a):
        return np.asarray(a, np.float32)

    def fold(wk, bk):
        w, b = npf(p[wk]), p[bk]
        s = npf(b["gamma"]) / np.sqrt(npf(b["var"]) + 1e-5)
        return w * s[:, None, None, None], npf(b["beta"]) - npf(b["mean"]) * s

    def band3(w, win, wout, stride, in_lane, out_group):
        # w: [cout, cin, 3, 3] -> per-kh banded matrices [3, win*cin, wout*cout]
        cout, cin = w.shape[0], w.shape[1]
        wb = np.zeros((3, win * cin, wout * cout), np.float32)
        for i in range(3):
            for wo in range(wout):
                g = out_group(wo)
                for j in range(3):
                    wi = stride * wo + j - 1
                    if 0 <= wi < win:       # out-of-range taps == zero w-padding
                        for ci in range(cin):
                            wb[i, in_lane(wi, ci), g * cout:(g + 1) * cout] += w[:, ci, i, j]
        return wb

    w1, t1 = fold("conv1_w", "conv1_bn")
    wa, ta = fold("l1a_w", "l1a_bn")
    wbv, tb = fold("l1b_w", "l1b_bn")
    w2a, t2a = fold("l2a_w", "l2a_bn")
    w2b, t2b = fold("l2b_w", "l2b_bn")
    wd, td = fold("l2d_w", "l2d_bn")

    parity = lambda wo: (wo % 2) * (WIN // 2) + (wo // 2)     # even w -> groups 0..7
    # conv1 consumes raw (c, w) lanes; its band folds the NCHW permutation in.
    wb1 = band3(w1, WIN, WIN, 1, lambda wi, ci: ci * WIN + wi, parity)          # [3, 48,128]
    wba = band3(wa, HPOOL, HPOOL, 1, lambda wi, ci: wi * C1 + ci, lambda w_: w_)  # [3, 64, 64]
    wbb = band3(wbv, HPOOL, HPOOL, 1, lambda wi, ci: wi * C1 + ci, lambda w_: w_)
    w2ab = band3(w2a, HPOOL, H2, 2, lambda wi, ci: wi * C1 + ci, lambda w_: w_)   # [3, 64, 64]
    w2bb = band3(w2b, H2, H2, 1, lambda wi, ci: wi * C2 + ci, lambda w_: w_)      # [3, 64, 64]

    wbd = np.zeros((HPOOL * C1, H2 * C2), np.float32)          # 1x1 stride-2 downsample
    for wo in range(H2):
        for ci in range(C1):
            wbd[(2 * wo) * C1 + ci, wo * C2:(wo + 1) * C2] = wd[:, ci, 0, 0]

    # layer2a with the downsample fused onto output lanes 64..127 of the middle tap
    w2a_f = np.zeros((3, HPOOL * C1, 2 * H2 * C2), np.float32)
    w2a_f[:, :, 0:H2 * C2] = w2ab
    w2a_f[1, :, H2 * C2:] = wbd

    # fc1 consumes the NCHW flatten (c*H2*W2 + ho*W2 + wo); fold it into a row permute.
    fc1 = npf(p["fc1_w"])
    w1h = np.zeros((FEAT, FC_DIM), np.float32)
    for ho in range(H2):
        for wo in range(H2):
            for c in range(C2):
                w1h[ho * LANES2 + wo * C2 + c, :] = fc1[c * H2 * H2 + ho * H2 + wo, :]

    # ---- pack: one bf16 weight slab + one f32 shift/bias slab ----
    wslab = np.zeros((W_ROWS, 128), np.float32)

    def put(off, mat):
        wslab[off:off + mat.shape[0], 0:mat.shape[1]] = mat

    put(OFF_C1, wb1.reshape(-1, wb1.shape[-1]))
    put(OFF_A, wba.reshape(-1, wba.shape[-1]))
    put(OFF_B, wbb.reshape(-1, wbb.shape[-1]))
    put(OFF_2A, w2a_f.reshape(-1, w2a_f.shape[-1]))
    put(OFF_2B, w2bb.reshape(-1, w2bb.shape[-1]))
    put(OFF_F1, w1h)
    put(OFF_F2, npf(p["fc2_w"]))
    put(OFF_F3, npf(p["fc3_w"]))

    sslab = np.zeros((S_ROWS, 128), np.float32)
    sslab[0, 0:2 * LANES1] = np.tile(t1, WIN)
    sslab[1, 0:LANES1] = np.tile(ta, HPOOL)
    sslab[2, 0:LANES1] = np.tile(tb, HPOOL)
    sslab[3, 0:LANES2] = np.tile(t2a, H2)
    sslab[3, LANES2:2 * LANES2] = np.tile(td, H2)
    sslab[4, 0:LANES2] = np.tile(t2b, H2)
    sslab[5, 0:FC_DIM] = npf(p["fc1_b"])
    sslab[6, 0:FC_DIM] = npf(p["fc2_b"])
    sslab[7, 0:OUT_DIM] = npf(p["fc3_b"])

    return jnp.asarray(wslab, jnp.bfloat16), jnp.asarray(sslab, jnp.float32)


# ------------------------- pure-JAX f32 reference ------------------------------

def _reference_forward(x, p):
    def conv(v, w, stride=1, pad=1):
        return jax.lax.conv_general_dilated(
            v, w, (stride, stride), [(pad, pad), (pad, pad)],
            dimension_numbers=("NCHW", "OIHW", "NCHW"))

    def bn(v, b, relu):
        s = b["gamma"] / jnp.sqrt(b["var"] + 1e-5)
        y = (v - b["mean"][None, :, None, None]) * s[None, :, None, None] \
            + b["beta"][None, :, None, None]
        return jnp.maximum(y, 0.0) if relu else y

    y = bn(conv(x, p["conv1_w"]), p["conv1_bn"], True)
    y = y.reshape(y.shape[0], y.shape[1], HPOOL, 2, HPOOL, 2).max(axis=(3, 5))  # 2x2/2 pool
    h = bn(conv(y, p["l1a_w"]), p["l1a_bn"], True)
    h = bn(conv(h, p["l1b_w"]), p["l1b_bn"], False)
    y = jnp.maximum(h + y, 0.0)
    h = bn(conv(y, p["l2a_w"], stride=2), p["l2a_bn"], True)
    h = bn(conv(h, p["l2b_w"]), p["l2b_bn"], False)
    d = bn(conv(y, p["l2d_w"], stride=2, pad=0), p["l2d_bn"], False)
    y = jnp.maximum(h + d, 0.0)
    f = y.reshape(y.shape[0], -1)
    z = jnp.maximum(f @ p["fc1_w"] + p["fc1_b"], 0.0)
    z = jnp.maximum(z @ p["fc2_w"] + p["fc2_b"], 0.0)
    return z @ p["fc3_w"] + p["fc3_b"]


# ----------------------------------- main ---------------------------------------

if __name__ == "__main__":
    key = jax.random.PRNGKey(0)
    k1, k2, kp = jax.random.split(key, 3)

    # PyTorch-style NCHW inputs for both siamese branches (batch=2, 3x16x16).
    input1 = jax.random.normal(k1, (2, CIN, HIN, WIN), jnp.float32)
    input2 = jax.random.normal(k2, (2, CIN, HIN, WIN), jnp.float32)

    params = init_params(kp)
    wslab, sslab = prepare_params(params)

    fwd = jax.jit(siamese_forward)
    out1, out2 = fwd(input1, input2, wslab, sslab)
    jax.block_until_ready((out1, out2))

    # numerical check against the pure-JAX f32 reference (bf16 MXU operands in kernel)
    ref1 = _reference_forward(input1, params)
    ref2 = _reference_forward(input2, params)
    np.testing.assert_allclose(np.asarray(out1), np.asarray(ref1), rtol=5e-2, atol=5e-2)
    np.testing.assert_allclose(np.asarray(out2), np.asarray(ref2), rtol=5e-2, atol=5e-2)

    assert out1.shape == (2, OUT_DIM) and out2.shape == (2, OUT_DIM)
    print("KERNEL_OK")
</pallas_src>

<mosaic_0001>
module attributes {stable_mosaic.version = 11 : i64} {
  func.func @_siamese_fused_kernel(%arg0: memref<96x16xf32, #tpu.memory_space<vmem>>, %arg1: memref<96x16xf32, #tpu.memory_space<vmem>>, %arg2: memref<1232x128xbf16, #tpu.memory_space<vmem>>, %arg3: memref<8x128xf32, #tpu.memory_space<vmem>>, %arg4: memref<2x8xf32, #tpu.memory_space<vmem>>, %arg5: memref<2x8xf32, #tpu.memory_space<vmem>>, %arg6: memref<104x48xf32, #tpu.memory_space<vmem>>, %arg7: memref<104x64xf32, #tpu.memory_space<vmem>>, %arg8: memref<72x64xf32, #tpu.memory_space<vmem>>, %arg9: memref<72x64xf32, #tpu.memory_space<vmem>>, %arg10: memref<72x64xf32, #tpu.memory_space<vmem>>, %arg11: memref<40x64xf32, #tpu.memory_space<vmem>>, %arg12: memref<40x64xf32, #tpu.memory_space<vmem>>, %arg13: memref<40x64xf32, #tpu.memory_space<vmem>>, %arg14: memref<40x64xf32, #tpu.memory_space<vmem>>, %arg15: memref<8x256xf32, #tpu.memory_space<vmem>>) attributes {dimension_semantics = [], scalar_prefetch = 0 : i64, scratch_operands = 10 : i64, tpu.core_type = #tpu.core_type<tc>} {
    %cst = arith.constant 0.000000e+00 : f32
    %0 = vector.broadcast %cst : f32 to vector<8x48xf32>
    %c0 = arith.constant 0 : index
    %c0_0 = arith.constant 0 : index
    %1 = vector.load %arg6[%c0, %c0_0] : memref<104x48xf32, #tpu.memory_space<vmem>>, vector<8x48xf32>
    tpu.vector_store %arg6[%c0, %c0_0], %0 {strides = array<i32>} : memref<104x48xf32, #tpu.memory_space<vmem>>, vector<8x48xf32>,
    %cst_1 = arith.constant 0.000000e+00 : f32
    %2 = vector.broadcast %cst_1 : f32 to vector<8x48xf32>
    %c24 = arith.constant 24 : index
    %c0_2 = arith.constant 0 : index
    %3 = vector.load %arg6[%c24, %c0_2] : memref<104x48xf32, #tpu.memory_space<vmem>>, vector<8x48xf32>
    tpu.vector_store %arg6[%c24, %c0_2], %2 {strides = array<i32>} : memref<104x48xf32, #tpu.memory_space<vmem>>, vector<8x48xf32>,
    %cst_3 = arith.constant 0.000000e+00 : f32
    %4 = vector.broadcast %cst_3 : f32 to vector<8x48xf32>
    %c48 = arith.constant 48 : index
    %c0_4 = arith.constant 0 : index
    %5 = vector.load %arg6[%c48, %c0_4] : memref<104x48xf32, #tpu.memory_space<vmem>>, vector<8x48xf32>
    tpu.vector_store %arg6[%c48, %c0_4], %4 {strides = array<i32>} : memref<104x48xf32, #tpu.memory_space<vmem>>, vector<8x48xf32>,
    %cst_5 = arith.constant 0.000000e+00 : f32
    %6 = vector.broadcast %cst_5 : f32 to vector<8x48xf32>
    %c72 = arith.constant 72 : index
    %c0_6 = arith.constant 0 : index
    %7 = vector.load %arg6[%c72, %c0_6] : memref<104x48xf32, #tpu.memory_space<vmem>>, vector<8x48xf32>
    tpu.vector_store %arg6[%c72, %c0_6], %6 {strides = array<i32>} : memref<104x48xf32, #tpu.memory_space<vmem>>, vector<8x48xf32>,
    %cst_7 = arith.constant 0.000000e+00 : f32
    %8 = vector.broadcast %cst_7 : f32 to vector<8x48xf32>
    %c96 = arith.constant 96 : index
    %c0_8 = arith.constant 0 : index
    %9 = vector.load %arg6[%c96, %c0_8] : memref<104x48xf32, #tpu.memory_space<vmem>>, vector<8x48xf32>
    tpu.vector_store %arg6[%c96, %c0_8], %8 {strides = array<i32>} : memref<104x48xf32, #tpu.memory_space<vmem>>, vector<8x48xf32>,
    %c0_9 = arith.constant 0 : index
    %c0_10 = arith.constant 0 : index
    %10 = vector.load %arg0[%c0_9, %c0_10] : memref<96x16xf32, #tpu.memory_space<vmem>>, vector<16x16xf32>
    %c8 = arith.constant 8 : index
    %c0_11 = arith.constant 0 : index
    %11 = vector.load %arg6[%c8, %c0_11] : memref<104x48xf32, #tpu.memory_space<vmem>>, vector<16x16xf32>
    tpu.vector_store %arg6[%c8, %c0_11], %10 {strides = array<i32>} : memref<104x48xf32, #tpu.memory_space<vmem>>, vector<16x16xf32>,
    %c16 = arith.constant 16 : index
    %c0_12 = arith.constant 0 : index
    %12 = vector.load %arg0[%c16, %c0_12] : memref<96x16xf32, #tpu.memory_space<vmem>>, vector<16x16xf32>
    %c8_13 = arith.constant 8 : index
    %c16_14 = arith.constant 16 : index
    %13 = vector.load %arg6[%c8_13, %c16_14] : memref<104x48xf32, #tpu.memory_space<vmem>>, vector<16x16xf32>
    tpu.vector_store %arg6[%c8_13, %c16_14], %12 {strides = array<i32>} : memref<104x48xf32, #tpu.memory_space<vmem>>, vector<16x16xf32>,
    %c32 = arith.constant 32 : index
    %c0_15 = arith.constant 0 : index
    %14 = vector.load %arg0[%c32, %c0_15] : memref<96x16xf32, #tpu.memory_space<vmem>>, vector<16x16xf32>
    %c8_16 = arith.constant 8 : index
    %c32_17 = arith.constant 32 : index
    %15 = vector.load %arg6[%c8_16, %c32_17] : memref<104x48xf32, #tpu.memory_space<vmem>>, vector<16x16xf32>
    tpu.vector_store %arg6[%c8_16, %c32_17], %14 {strides = array<i32>} : memref<104x48xf32, #tpu.memory_space<vmem>>, vector<16x16xf32>,
    %c48_18 = arith.constant 48 : index
    %c0_19 = arith.constant 0 : index
    %16 = vector.load %arg0[%c48_18, %c0_19] : memref<96x16xf32, #tpu.memory_space<vmem>>, vector<16x16xf32>
    %c32_20 = arith.constant 32 : index
    %c0_21 = arith.constant 0 : index
    %17 = vector.load %arg6[%c32_20, %c0_21] : memref<104x48xf32, #tpu.memory_space<vmem>>, vector<16x16xf32>
    tpu.vector_store %arg6[%c32_20, %c0_21], %16 {strides = array<i32>} : memref<104x48xf32, #tpu.memory_space<vmem>>, vector<16x16xf32>,
    %c64 = arith.constant 64 : index
    %c0_22 = arith.constant 0 : index
    %18 = vector.load %arg0[%c64, %c0_22] : memref<96x16xf32, #tpu.memory_space<vmem>>, vector<16x16xf32>
    %c32_23 = arith.constant 32 : index
    %c16_24 = arith.constant 16 : index
    %19 = vector.load %arg6[%c32_23, %c16_24] : memref<104x48xf32, #tpu.memory_space<vmem>>, vector<16x16xf32>
    tpu.vector_store %arg6[%c32_23, %c16_24], %18 {strides = array<i32>} : memref<104x48xf32, #tpu.memory_space<vmem>>, vector<16x16xf32>,
    %c80 = arith.constant 80 : index
    %c0_25 = arith.constant 0 : index
    %20 = vector.load %arg0[%c80, %c0_25] : memref<96x16xf32, #tpu.memory_space<vmem>>, vector<16x16xf32>
    %c32_26 = arith.constant 32 : index
    %c32_27 = arith.constant 32 : index
    %21 = vector.load %arg6[%c32_26, %c32_27] : memref<104x48xf32, #tpu.memory_space<vmem>>, vector<16x16xf32>
    tpu.vector_store %arg6[%c32_26, %c32_27], %20 {strides = array<i32>} : memref<104x48xf32, #tpu.memory_space<vmem>>, vector<16x16xf32>,
    %c0_28 = arith.constant 0 : index
    %c0_29 = arith.constant 0 : index
    %22 = vector.load %arg1[%c0_28, %c0_29] : memref<96x16xf32, #tpu.memory_space<vmem>>, vector<16x16xf32>
    %c56 = arith.constant 56 : index
    %c0_30 = arith.constant 0 : index
    %23 = vector.load %arg6[%c56, %c0_30] : memref<104x48xf32, #tpu.memory_space<vmem>>, vector<16x16xf32>
    tpu.vector_store %arg6[%c56, %c0_30], %22 {strides = array<i32>} : memref<104x48xf32, #tpu.memory_space<vmem>>, vector<16x16xf32>,
    %c16_31 = arith.constant 16 : index
    %c0_32 = arith.constant 0 : index
    %24 = vector.load %arg1[%c16_31, %c0_32] : memref<96x16xf32, #tpu.memory_space<vmem>>, vector<16x16xf32>
    %c56_33 = arith.constant 56 : index
    %c16_34 = arith.constant 16 : index
    %25 = vector.load %arg6[%c56_33, %c16_34] : memref<104x48xf32, #tpu.memory_space<vmem>>, vector<16x16xf32>
    tpu.vector_store %arg6[%c56_33, %c16_34], %24 {strides = array<i32>} : memref<104x48xf32, #tpu.memory_space<vmem>>, vector<16x16xf32>,
    %c32_35 = arith.constant 32 : index
    %c0_36 = arith.constant 0 : index
    %26 = vector.load %arg1[%c32_35, %c0_36] : memref<96x16xf32, #tpu.memory_space<vmem>>, vector<16x16xf32>
    %c56_37 = arith.constant 56 : index
    %c32_38 = arith.constant 32 : index
    %27 = vector.load %arg6[%c56_37, %c32_38] : memref<104x48xf32, #tpu.memory_space<vmem>>, vector<16x16xf32>
    tpu.vector_store %arg6[%c56_37, %c32_38], %26 {strides = array<i32>} : memref<104x48xf32, #tpu.memory_space<vmem>>, vector<16x16xf32>,
    %c48_39 = arith.constant 48 : index
    %c0_40 = arith.constant 0 : index
    %28 = vector.load %arg1[%c48_39, %c0_40] : memref<96x16xf32, #tpu.memory_space<vmem>>, vector<16x16xf32>
    %c80_41 = arith.constant 80 : index
    %c0_42 = arith.constant 0 : index
    %29 = vector.load %arg6[%c80_41, %c0_42] : memref<104x48xf32, #tpu.memory_space<vmem>>, vector<16x16xf32>
    tpu.vector_store %arg6[%c80_41, %c0_42], %28 {strides = array<i32>} : memref<104x48xf32, #tpu.memory_space<vmem>>, vector<16x16xf32>,
    %c64_43 = arith.constant 64 : index
    %c0_44 = arith.constant 0 : index
    %30 = vector.load %arg1[%c64_43, %c0_44] : memref<96x16xf32, #tpu.memory_space<vmem>>, vector<16x16xf32>
    %c80_45 = arith.constant 80 : index
    %c16_46 = arith.constant 16 : index
    %31 = vector.load %arg6[%c80_45, %c16_46] : memref<104x48xf32, #tpu.memory_space<vmem>>, vector<16x16xf32>
    tpu.vector_store %arg6[%c80_45, %c16_46], %30 {strides = array<i32>} : memref<104x48xf32, #tpu.memory_space<vmem>>, vector<16x16xf32>,
    %c80_47 = arith.constant 80 : index
    %c0_48 = arith.constant 0 : index
    %32 = vector.load %arg1[%c80_47, %c0_48] : memref<96x16xf32, #tpu.memory_space<vmem>>, vector<16x16xf32>
    %c80_49 = arith.constant 80 : index
    %c32_50 = arith.constant 32 : index
    %33 = vector.load %arg6[%c80_49, %c32_50] : memref<104x48xf32, #tpu.memory_space<vmem>>, vector<16x16xf32>
    tpu.vector_store %arg6[%c80_49, %c32_50], %32 {strides = array<i32>} : memref<104x48xf32, #tpu.memory_space<vmem>>, vector<16x16xf32>,
    %c0_51 = arith.constant 0 : index
    %c0_52 = arith.constant 0 : index
    %34 = vector.load %arg6[%c0_51, %c0_52] : memref<104x48xf32, #tpu.memory_space<vmem>>, vector<104x48xf32>
    %35 = arith.truncf %34 : vector<104x48xf32> to vector<104x48xbf16>
    %36 = vector.extract_strided_slice %35 {offsets = [0, 0], sizes = [102, 48], strides = [1, 1]} : vector<104x48xbf16> to vector<102x48xbf16>
    %c0_53 = arith.constant 0 : index
    %c0_54 = arith.constant 0 : index
    %37 = vector.load %arg2[%c0_53, %c0_54] : memref<1232x128xbf16, #tpu.memory_space<vmem>>, vector<48x128xbf16>
    %cst_55 = arith.constant dense<0.000000e+00> : vector<102x128xf32>
    %38 = tpu.matmul %36, %37, %cst_55 {dimension_numbers = #tpu.dot_dimension_numbers<[1], [0], [0], [1], [0, 0, 1, 1], [], []>} : vector<102x48xbf16>, vector<48x128xbf16>, vector<102x128xf32> -> vector<102x128xf32>
    %39 = vector.extract_strided_slice %35 {offsets = [1, 0], sizes = [102, 48], strides = [1, 1]} : vector<104x48xbf16> to vector<102x48xbf16>
    %c48_56 = arith.constant 48 : index
    %c0_57 = arith.constant 0 : index
    %40 = vector.load %arg2[%c48_56, %c0_57] : memref<1232x128xbf16, #tpu.memory_space<vmem>>, vector<48x128xbf16>
    %cst_58 = arith.constant dense<0.000000e+00> : vector<102x128xf32>
    %41 = tpu.matmul %39, %40, %cst_58 {dimension_numbers = #tpu.dot_dimension_numbers<[1], [0], [0], [1], [0, 0, 1, 1], [], []>} : vector<102x48xbf16>, vector<48x128xbf16>, vector<102x128xf32> -> vector<102x128xf32>
    %42 = arith.addf %38, %41 : vector<102x128xf32>
    %43 = vector.extract_strided_slice %35 {offsets = [2, 0], sizes = [102, 48], strides = [1, 1]} : vector<104x48xbf16> to vector<102x48xbf16>
    %c96_59 = arith.constant 96 : index
    %c0_60 = arith.constant 0 : index
    %44 = vector.load %arg2[%c96_59, %c0_60] : memref<1232x128xbf16, #tpu.memory_space<vmem>>, vector<48x128xbf16>
    %cst_61 = arith.constant dense<0.000000e+00> : vector<102x128xf32>
    %45 = tpu.matmul %43, %44, %cst_61 {dimension_numbers = #tpu.dot_dimension_numbers<[1], [0], [0], [1], [0, 0, 1, 1], [], []>} : vector<102x48xbf16>, vector<48x128xbf16>, vector<102x128xf32> -> vector<102x128xf32>
    %46 = arith.addf %42, %45 : vector<102x128xf32>
    %c0_62 = arith.constant 0 : index
    %c0_63 = arith.constant 0 : index
    %47 = vector.load %arg3[%c0_62, %c0_63] : memref<8x128xf32, #tpu.memory_space<vmem>>, vector<1x128xf32>
    %48 = vector.broadcast %47 : vector<1x128xf32> to vector<102x128xf32>
    %49 = arith.addf %46, %48 : vector<102x128xf32>
    %cst_64 = arith.constant 0.000000e+00 : f32
    %50 = vector.broadcast %cst_64 : f32 to vector<102x128xf32>
    %51 = arith.maximumf %49, %50 : vector<102x128xf32>
    %52 = vector.extract_strided_slice %51 {offsets = [0, 0], sizes = [102, 64], strides = [1, 1]} : vector<102x128xf32> to vector<102x64xf32>
    %53 = vector.extract_strided_slice %51 {offsets = [0, 64], sizes = [102, 64], strides = [1, 1]} : vector<102x128xf32> to vector<102x64xf32>
    %54 = arith.maximumf %52, %53 : vector<102x64xf32>
    %55 = vector.extract_strided_slice %54 {offsets = [0, 0], sizes = [101, 64], strides = [1, 1]} : vector<102x64xf32> to vector<101x64xf32>
    %56 = vector.extract_strided_slice %54 {offsets = [1, 0], sizes = [101, 64], strides = [1, 1]} : vector<102x64xf32> to vector<101x64xf32>
    %57 = arith.maximumf %55, %56 : vector<101x64xf32>
    %c0_65 = arith.constant 0 : index
    %c0_66 = arith.constant 0 : index
    %58 = vector.load %arg7[%c0_65, %c0_66] : memref<104x64xf32, #tpu.memory_space<vmem>>, vector<101x64xf32>
    tpu.vector_store %arg7[%c0_65, %c0_66], %57 {strides = array<i32>} : memref<104x64xf32, #tpu.memory_space<vmem>>, vector<101x64xf32>,
    %cst_67 = arith.constant 0.000000e+00 : f32
    %59 = vector.broadcast %cst_67 : f32 to vector<3x64xf32>
    %c101 = arith.constant 101 : index
    %c0_68 = arith.constant 0 : index
    %60 = vector.load %arg7[%c101, %c0_68] : memref<104x64xf32, #tpu.memory_space<vmem>>, vector<3x64xf32>
    tpu.vector_store %arg7[%c101, %c0_68], %59 {strides = array<i32>} : memref<104x64xf32, #tpu.memory_space<vmem>>, vector<3x64xf32>,
    %cst_69 = arith.constant 0.000000e+00 : f32
    %61 = vector.broadcast %cst_69 : f32 to vector<8x64xf32>
    %c0_70 = arith.constant 0 : index
    %c0_71 = arith.constant 0 : index
    %62 = vector.load %arg8[%c0_70, %c0_71] : memref<72x64xf32, #tpu.memory_space<vmem>>, vector<8x64xf32>
    tpu.vector_store %arg8[%c0_70, %c0_71], %61 {strides = array<i32>} : memref<72x64xf32, #tpu.memory_space<vmem>>, vector<8x64xf32>,
    %cst_72 = arith.constant 0.000000e+00 : f32
    %63 = vector.broadcast %cst_72 : f32 to vector<8x64xf32>
    %c16_73 = arith.constant 16 : index
    %c0_74 = arith.constant 0 : index
    %64 = vector.load %arg8[%c16_73, %c0_74] : memref<72x64xf32, #tpu.memory_space<vmem>>, vector<8x64xf32>
    tpu.vector_store %arg8[%c16_73, %c0_74], %63 {strides = array<i32>} : memref<72x64xf32, #tpu.memory_space<vmem>>, vector<8x64xf32>,
    %cst_75 = arith.constant 0.000000e+00 : f32
    %65 = vector.broadcast %cst_75 : f32 to vector<8x64xf32>
    %c32_76 = arith.constant 32 : index
    %c0_77 = arith.constant 0 : index
    %66 = vector.load %arg8[%c32_76, %c0_77] : memref<72x64xf32, #tpu.memory_space<vmem>>, vector<8x64xf32>
    tpu.vector_store %arg8[%c32_76, %c0_77], %65 {strides = array<i32>} : memref<72x64xf32, #tpu.memory_space<vmem>>, vector<8x64xf32>,
    %cst_78 = arith.constant 0.000000e+00 : f32
    %67 = vector.broadcast %cst_78 : f32 to vector<8x64xf32>
    %c48_79 = arith.constant 48 : index
    %c0_80 = arith.constant 0 : index
    %68 = vector.load %arg8[%c48_79, %c0_80] : memref<72x64xf32, #tpu.memory_space<vmem>>, vector<8x64xf32>
    tpu.vector_store %arg8[%c48_79, %c0_80], %67 {strides = array<i32>} : memref<72x64xf32, #tpu.memory_space<vmem>>, vector<8x64xf32>,
    %cst_81 = arith.constant 0.000000e+00 : f32
    %69 = vector.broadcast %cst_81 : f32 to vector<8x64xf32>
    %c64_82 = arith.constant 64 : index
    %c0_83 = arith.constant 0 : index
    %70 = vector.load %arg8[%c64_82, %c0_83] : memref<72x64xf32, #tpu.memory_space<vmem>>, vector<8x64xf32>
    tpu.vector_store %arg8[%c64_82, %c0_83], %69 {strides = array<i32>} : memref<72x64xf32, #tpu.memory_space<vmem>>, vector<8x64xf32>,
    %c7 = arith.constant 7 : index
    %c0_84 = arith.constant 0 : index
    %71 = tpu.strided_load %arg7[%c7, %c0_84] {strides = array<i32: 2, 1>} : memref<104x64xf32, #tpu.memory_space<vmem>>, vector<8x64xf32>
    %c8_85 = arith.constant 8 : index
    %c0_86 = arith.constant 0 : index
    %72 = vector.load %arg8[%c8_85, %c0_86] : memref<72x64xf32, #tpu.memory_space<vmem>>, vector<8x64xf32>
    tpu.vector_store %arg8[%c8_85, %c0_86], %71 {strides = array<i32>} : memref<72x64xf32, #tpu.memory_space<vmem>>, vector<8x64xf32>,
    %c31 = arith.constant 31 : index
    %c0_87 = arith.constant 0 : index
    %73 = tpu.strided_load %arg7[%c31, %c0_87] {strides = array<i32: 2, 1>} : memref<104x64xf32, #tpu.memory_space<vmem>>, vector<8x64xf32>
    %c24_88 = arith.constant 24 : index
    %c0_89 = arith.constant 0 : index
    %74 = vector.load %arg8[%c24_88, %c0_89] : memref<72x64xf32, #tpu.memory_space<vmem>>, vector<8x64xf32>
    tpu.vector_store %arg8[%c24_88, %c0_89], %73 {strides = array<i32>} : memref<72x64xf32, #tpu.memory_space<vmem>>, vector<8x64xf32>,
    %c55 = arith.constant 55 : index
    %c0_90 = arith.constant 0 : index
    %75 = tpu.strided_load %arg7[%c55, %c0_90] {strides = array<i32: 2, 1>} : memref<104x64xf32, #tpu.memory_space<vmem>>, vector<8x64xf32>
    %c40 = arith.constant 40 : index
    %c0_91 = arith.constant 0 : index
    %76 = vector.load %arg8[%c40, %c0_91] : memref<72x64xf32, #tpu.memory_space<vmem>>, vector<8x64xf32>
    tpu.vector_store %arg8[%c40, %c0_91], %75 {strides = array<i32>} : memref<72x64xf32, #tpu.memory_space<vmem>>, vector<8x64xf32>,
    %c79 = arith.constant 79 : index
    %c0_92 = arith.constant 0 : index
    %77 = tpu.strided_load %arg7[%c79, %c0_92] {strides = array<i32: 2, 1>} : memref<104x64xf32, #tpu.memory_space<vmem>>, vector<8x64xf32>
    %c56_93 = arith.constant 56 : index
    %c0_94 = arith.constant 0 : index
    %78 = vector.load %arg8[%c56_93, %c0_94] : memref<72x64xf32, #tpu.memory_space<vmem>>, vector<8x64xf32>
    tpu.vector_store %arg8[%c56_93, %c0_94], %77 {strides = array<i32>} : memref<72x64xf32, #tpu.memory_space<vmem>>, vector<8x64xf32>,
    %c0_95 = arith.constant 0 : index
    %c0_96 = arith.constant 0 : index
    %79 = vector.load %arg8[%c0_95, %c0_96] : memref<72x64xf32, #tpu.memory_space<vmem>>, vector<72x64xf32>
    %80 = arith.truncf %79 : vector<72x64xf32> to vector<72x64xbf16>
    %81 = vector.extract_strided_slice %80 {offsets = [0, 0], sizes = [70, 64], strides = [1, 1]} : vector<72x64xbf16> to vector<70x64xbf16>
    %c144 = arith.constant 144 : index
    %c0_97 = arith.constant 0 : index
    %82 = vector.load %arg2[%c144, %c0_97] : memref<1232x128xbf16, #tpu.memory_space<vmem>>, vector<64x64xbf16>
    %cst_98 = arith.constant dense<0.000000e+00> : vector<70x64xf32>
    %83 = tpu.matmul %81, %82, %cst_98 {dimension_numbers = #tpu.dot_dimension_numbers<[1], [0], [0], [1], [0, 0, 1, 1], [], []>} : vector<70x64xbf16>, vector<64x64xbf16>, vector<70x64xf32> -> vector<70x64xf32>
    %84 = vector.extract_strided_slice %80 {offsets = [1, 0], sizes = [70, 64], strides = [1, 1]} : vector<72x64xbf16> to vector<70x64xbf16>
    %c208 = arith.constant 208 : index
    %c0_99 = arith.constant 0 : index
    %85 = vector.load %arg2[%c208, %c0_99] : memref<1232x128xbf16, #tpu.memory_space<vmem>>, vector<64x64xbf16>
    %cst_100 = arith.constant dense<0.000000e+00> : vector<70x64xf32>
    %86 = tpu.matmul %84, %85, %cst_100 {dimension_numbers = #tpu.dot_dimension_numbers<[1], [0], [0], [1], [0, 0, 1, 1], [], []>} : vector<70x64xbf16>, vector<64x64xbf16>, vector<70x64xf32> -> vector<70x64xf32>
    %87 = arith.addf %83, %86 : vector<70x64xf32>
    %88 = vector.extract_strided_slice %80 {offsets = [2, 0], sizes = [70, 64], strides = [1, 1]} : vector<72x64xbf16> to vector<70x64xbf16>
    %c272 = arith.constant 272 : index
    %c0_101 = arith.constant 0 : index
    %89 = vector.load %arg2[%c272, %c0_101] : memref<1232x128xbf16, #tpu.memory_space<vmem>>, vector<64x64xbf16>
    %cst_102 = arith.constant dense<0.000000e+00> : vector<70x64xf32>
    %90 = tpu.matmul %88, %89, %cst_102 {dimension_numbers = #tpu.dot_dimension_numbers<[1], [0], [0], [1], [0, 0, 1, 1], [], []>} : vector<70x64xbf16>, vector<64x64xbf16>, vector<70x64xf32> -> vector<70x64xf32>
    %91 = arith.addf %87, %90 : vector<70x64xf32>
    %c1 = arith.constant 1 : index
    %c0_103 = arith.constant 0 : index
    %92 = vector.load %arg3[%c1, %c0_103] : memref<8x128xf32, #tpu.memory_space<vmem>>, vector<1x64xf32>
    %93 = vector.broadcast %92 : vector<1x64xf32> to vector<70x64xf32>
    %94 = arith.addf %91, %93 : vector<70x64xf32>
    %cst_104 = arith.constant 0.000000e+00 : f32
    %95 = vector.broadcast %cst_104 : f32 to vector<70x64xf32>
    %96 = arith.maximumf %94, %95 : vector<70x64xf32>
    %cst_105 = arith.constant 0.000000e+00 : f32
    %97 = vector.broadcast %cst_105 : f32 to vector<8x64xf32>
    %c0_106 = arith.constant 0 : index
    %c0_107 = arith.constant 0 : index
    %98 = vector.load %arg9[%c0_106, %c0_107] : memref<72x64xf32, #tpu.memory_space<vmem>>, vector<8x64xf32>
    tpu.vector_store %arg9[%c0_106, %c0_107], %97 {strides = array<i32>} : memref<72x64xf32, #tpu.memory_space<vmem>>, vector<8x64xf32>,
    %cst_108 = arith.constant 0.000000e+00 : f32
    %99 = vector.broadcast %cst_108 : f32 to vector<8x64xf32>
    %c16_109 = arith.constant 16 : index
    %c0_110 = arith.constant 0 : index
    %100 = vector.load %arg9[%c16_109, %c0_110] : memref<72x64xf32, #tpu.memory_space<vmem>>, vector<8x64xf32>
    tpu.vector_store %arg9[%c16_109, %c0_110], %99 {strides = array<i32>} : memref<72x64xf32, #tpu.memory_space<vmem>>, vector<8x64xf32>,
    %cst_111 = arith.constant 0.000000e+00 : f32
    %101 = vector.broadcast %cst_111 : f32 to vector<8x64xf32>
    %c32_112 = arith.constant 32 : index
    %c0_113 = arith.constant 0 : index
    %102 = vector.load %arg9[%c32_112, %c0_113] : memref<72x64xf32, #tpu.memory_space<vmem>>, vector<8x64xf32>
    tpu.vector_store %arg9[%c32_112, %c0_113], %101 {strides = array<i32>} : memref<72x64xf32, #tpu.memory_space<vmem>>, vector<8x64xf32>,
    %cst_114 = arith.constant 0.000000e+00 : f32
    %103 = vector.broadcast %cst_114 : f32 to vector<8x64xf32>
    %c48_115 = arith.constant 48 : index
    %c0_116 = arith.constant 0 : index
    %104 = vector.load %arg9[%c48_115, %c0_116] : memref<72x64xf32, #tpu.memory_space<vmem>>, vector<8x64xf32>
    tpu.vector_store %arg9[%c48_115, %c0_116], %103 {strides = array<i32>} : memref<72x64xf32, #tpu.memory_space<vmem>>, vector<8x64xf32>,
    %cst_117 = arith.constant 0.000000e+00 : f32
    %105 = vector.broadcast %cst_117 : f32 to vector<8x64xf32>
    %c64_118 = arith.constant 64 : index
    %c0_119 = arith.constant 0 : index
    %106 = vector.load %arg9[%c64_118, %c0_119] : memref<72x64xf32, #tpu.memory_space<vmem>>, vector<8x64xf32>
    tpu.vector_store %arg9[%c64_118, %c0_119], %105 {strides = array<i32>} : memref<72x64xf32, #tpu.memory_space<vmem>>, vector<8x64xf32>,
    %107 = vector.extract_strided_slice %96 {offsets = [7, 0], sizes = [8, 64], strides = [1, 1]} : vector<70x64xf32> to vector<8x64xf32>
    %c8_120 = arith.constant 8 : index
    %c0_121 = arith.constant 0 : index
    %108 = vector.load %arg9[%c8_120, %c0_121] : memref<72x64xf32, #tpu.memory_space<vmem>>, vector<8x64xf32>
    tpu.vector_store %arg9[%c8_120, %c0_121], %107 {strides = array<i32>} : memref<72x64xf32, #tpu.memory_space<vmem>>, vector<8x64xf32>,
    %109 = vector.extract_strided_slice %96 {offsets = [23, 0], sizes = [8, 64], strides = [1, 1]} : vector<70x64xf32> to vector<8x64xf32>
    %c24_122 = arith.constant 24 : index
    %c0_123 = arith.constant 0 : index
    %110 = vector.load %arg9[%c24_122, %c0_123] : memref<72x64xf32, #tpu.memory_space<vmem>>, vector<8x64xf32>
    tpu.vector_store %arg9[%c24_122, %c0_123], %109 {strides = array<i32>} : memref<72x64xf32, #tpu.memory_space<vmem>>, vector<8x64xf32>,
    %111 = vector.extract_strided_slice %96 {offsets = [39, 0], sizes = [8, 64], strides = [1, 1]} : vector<70x64xf32> to vector<8x64xf32>
    %c40_124 = arith.constant 40 : index
    %c0_125 = arith.constant 0 : index
    %112 = vector.load %arg9[%c40_124, %c0_125] : memref<72x64xf32, #tpu.memory_space<vmem>>, vector<8x64xf32>
    tpu.vector_store %arg9[%c40_124, %c0_125], %111 {strides = array<i32>} : memref<72x64xf32, #tpu.memory_space<vmem>>, vector<8x64xf32>,
    %113 = vector.extract_strided_slice %96 {offsets = [55, 0], sizes = [8, 64], strides = [1, 1]} : vector<70x64xf32> to vector<8x64xf32>
    %c56_126 = arith.constant 56 : index
    %c0_127 = arith.constant 0 : index
    %114 = vector.load %arg9[%c56_126, %c0_127] : memref<72x64xf32, #tpu.memory_space<vmem>>, vector<8x64xf32>
    tpu.vector_store %arg9[%c56_126, %c0_127], %113 {strides = array<i32>} : memref<72x64xf32, #tpu.memory_space<vmem>>, vector<8x64xf32>,
    %c0_128 = arith.constant 0 : index
    %c0_129 = arith.constant 0 : index
    %115 = vector.load %arg9[%c0_128, %c0_129] : memref<72x64xf32, #tpu.memory_space<vmem>>, vector<72x64xf32>
    %116 = arith.truncf %115 : vector<72x64xf32> to vector<72x64xbf16>
    %117 = vector.extract_strided_slice %116 {offsets = [0, 0], sizes = [70, 64], strides = [1, 1]} : vector<72x64xbf16> to vector<70x64xbf16>
    %c336 = arith.constant 336 : index
    %c0_130 = arith.constant 0 : index
    %118 = vector.load %arg2[%c336, %c0_130] : memref<1232x128xbf16, #tpu.memory_space<vmem>>, vector<64x64xbf16>
    %cst_131 = arith.constant dense<0.000000e+00> : vector<70x64xf32>
    %119 = tpu.matmul %117, %118, %cst_131 {dimension_numbers = #tpu.dot_dimension_numbers<[1], [0], [0], [1], [0, 0, 1, 1], [], []>} : vector<70x64xbf16>, vector<64x64xbf16>, vector<70x64xf32> -> vector<70x64xf32>
    %120 = vector.extract_strided_slice %116 {offsets = [1, 0], sizes = [70, 64], strides = [1, 1]} : vector<72x64xbf16> to vector<70x64xbf16>
    %c400 = arith.constant 400 : index
    %c0_132 = arith.constant 0 : index
    %121 = vector.load %arg2[%c400, %c0_132] : memref<1232x128xbf16, #tpu.memory_space<vmem>>, vector<64x64xbf16>
    %cst_133 = arith.constant dense<0.000000e+00> : vector<70x64xf32>
    %122 = tpu.matmul %120, %121, %cst_133 {dimension_numbers = #tpu.dot_dimension_numbers<[1], [0], [0], [1], [0, 0, 1, 1], [], []>} : vector<70x64xbf16>, vector<64x64xbf16>, vector<70x64xf32> -> vector<70x64xf32>
    %123 = arith.addf %119, %122 : vector<70x64xf32>
    %124 = vector.extract_strided_slice %116 {offsets = [2, 0], sizes = [70, 64], strides = [1, 1]} : vector<72x64xbf16> to vector<70x64xbf16>
    %c464 = arith.constant 464 : index
    %c0_134 = arith.constant 0 : index
    %125 = vector.load %arg2[%c464, %c0_134] : memref<1232x128xbf16, #tpu.memory_space<vmem>>, vector<64x64xbf16>
    %cst_135 = arith.constant dense<0.000000e+00> : vector<70x64xf32>
    %126 = tpu.matmul %124, %125, %cst_135 {dimension_numbers = #tpu.dot_dimension_numbers<[1], [0], [0], [1], [0, 0, 1, 1], [], []>} : vector<70x64xbf16>, vector<64x64xbf16>, vector<70x64xf32> -> vector<70x64xf32>
    %127 = arith.addf %123, %126 : vector<70x64xf32>
    %c2 = arith.constant 2 : index
    %c0_136 = arith.constant 0 : index
    %128 = vector.load %arg3[%c2, %c0_136] : memref<8x128xf32, #tpu.memory_space<vmem>>, vector<1x64xf32>
    %129 = vector.broadcast %128 : vector<1x64xf32> to vector<70x64xf32>
    %130 = arith.addf %127, %129 : vector<70x64xf32>
    %c1_137 = arith.constant 1 : index
    %c0_138 = arith.constant 0 : index
    %131 = vector.load %arg8[%c1_137, %c0_138] : memref<72x64xf32, #tpu.memory_space<vmem>>, vector<70x64xf32>
    %132 = arith.addf %130, %131 : vector<70x64xf32>
    %cst_139 = arith.constant 0.000000e+00 : f32
    %133 = vector.broadcast %cst_139 : f32 to vector<70x64xf32>
    %134 = arith.maximumf %132, %133 : vector<70x64xf32>
    %cst_140 = arith.constant 0.000000e+00 : f32
    %135 = vector.broadcast %cst_140 : f32 to vector<8x64xf32>
    %c0_141 = arith.constant 0 : index
    %c0_142 = arith.constant 0 : index
    %136 = vector.load %arg10[%c0_141, %c0_142] : memref<72x64xf32, #tpu.memory_space<vmem>>, vector<8x64xf32>
    tpu.vector_store %arg10[%c0_141, %c0_142], %135 {strides = array<i32>} : memref<72x64xf32, #tpu.memory_space<vmem>>, vector<8x64xf32>,
    %cst_143 = arith.constant 0.000000e+00 : f32
    %137 = vector.broadcast %cst_143 : f32 to vector<8x64xf32>
    %c16_144 = arith.constant 16 : index
    %c0_145 = arith.constant 0 : index
    %138 = vector.load %arg10[%c16_144, %c0_145] : memref<72x64xf32, #tpu.memory_space<vmem>>, vector<8x64xf32>
    tpu.vector_store %arg10[%c16_144, %c0_145], %137 {strides = array<i32>} : memref<72x64xf32, #tpu.memory_space<vmem>>, vector<8x64xf32>,
    %cst_146 = arith.constant 0.000000e+00 : f32
    %139 = vector.broadcast %cst_146 : f32 to vector<8x64xf32>
    %c32_147 = arith.constant 32 : index
    %c0_148 = arith.constant 0 : index
    %140 = vector.load %arg10[%c32_147, %c0_148] : memref<72x64xf32, #tpu.memory_space<vmem>>, vector<8x64xf32>
    tpu.vector_store %arg10[%c32_147, %c0_148], %139 {strides = array<i32>} : memref<72x64xf32, #tpu.memory_space<vmem>>, vector<8x64xf32>,
    %cst_149 = arith.constant 0.000000e+00 : f32
    %141 = vector.broadcast %cst_149 : f32 to vector<8x64xf32>
    %c48_150 = arith.constant 48 : index
    %c0_151 = arith.constant 0 : index
    %142 = vector.load %arg10[%c48_150, %c0_151] : memref<72x64xf32, #tpu.memory_space<vmem>>, vector<8x64xf32>
    tpu.vector_store %arg10[%c48_150, %c0_151], %141 {strides = array<i32>} : memref<72x64xf32, #tpu.memory_space<vmem>>, vector<8x64xf32>,
    %cst_152 = arith.constant 0.000000e+00 : f32
    %143 = vector.broadcast %cst_152 : f32 to vector<8x64xf32>
    %c64_153 = arith.constant 64 : index
    %c0_154 = arith.constant 0 : index
    %144 = vector.load %arg10[%c64_153, %c0_154] : memref<72x64xf32, #tpu.memory_space<vmem>>, vector<8x64xf32>
    tpu.vector_store %arg10[%c64_153, %c0_154], %143 {strides = array<i32>} : memref<72x64xf32, #tpu.memory_space<vmem>>, vector<8x64xf32>,
    %145 = vector.extract_strided_slice %134 {offsets = [7, 0], sizes = [8, 64], strides = [1, 1]} : vector<70x64xf32> to vector<8x64xf32>
    %c8_155 = arith.constant 8 : index
    %c0_156 = arith.constant 0 : index
    %146 = vector.load %arg10[%c8_155, %c0_156] : memref<72x64xf32, #tpu.memory_space<vmem>>, vector<8x64xf32>
    tpu.vector_store %arg10[%c8_155, %c0_156], %145 {strides = array<i32>} : memref<72x64xf32, #tpu.memory_space<vmem>>, vector<8x64xf32>,
    %147 = vector.extract_strided_slice %134 {offsets = [23, 0], sizes = [8, 64], strides = [1, 1]} : vector<70x64xf32> to vector<8x64xf32>
    %c24_157 = arith.constant 24 : index
    %c0_158 = arith.constant 0 : index
    %148 = vector.load %arg10[%c24_157, %c0_158] : memref<72x64xf32, #tpu.memory_space<vmem>>, vector<8x64xf32>
    tpu.vector_store %arg10[%c24_157, %c0_158], %147 {strides = array<i32>} : memref<72x64xf32, #tpu.memory_space<vmem>>, vector<8x64xf32>,
    %149 = vector.extract_strided_slice %134 {offsets = [39, 0], sizes = [8, 64], strides = [1, 1]} : vector<70x64xf32> to vector<8x64xf32>
    %c40_159 = arith.constant 40 : index
    %c0_160 = arith.constant 0 : index
    %150 = vector.load %arg10[%c40_159, %c0_160] : memref<72x64xf32, #tpu.memory_space<vmem>>, vector<8x64xf32>
    tpu.vector_store %arg10[%c40_159, %c0_160], %149 {strides = array<i32>} : memref<72x64xf32, #tpu.memory_space<vmem>>, vector<8x64xf32>,
    %151 = vector.extract_strided_slice %134 {offsets = [55, 0], sizes = [8, 64], strides = [1, 1]} : vector<70x64xf32> to vector<8x64xf32>
    %c56_161 = arith.constant 56 : index
    %c0_162 = arith.constant 0 : index
    %152 = vector.load %arg10[%c56_161, %c0_162] : memref<72x64xf32, #tpu.memory_space<vmem>>, vector<8x64xf32>
    tpu.vector_store %arg10[%c56_161, %c0_162], %151 {strides = array<i32>} : memref<72x64xf32, #tpu.memory_space<vmem>>, vector<8x64xf32>,
    %cst_163 = arith.constant 0.000000e+00 : f32
    %153 = vector.broadcast %cst_163 : f32 to vector<8x64xf32>
    %c0_164 = arith.constant 0 : index
    %c0_165 = arith.constant 0 : index
    %154 = vector.load %arg11[%c0_164, %c0_165] : memref<40x64xf32, #tpu.memory_space<vmem>>, vector<8x64xf32>
    tpu.vector_store %arg11[%c0_164, %c0_165], %153 {strides = array<i32>} : memref<40x64xf32, #tpu.memory_space<vmem>>, vector<8x64xf32>,
    %cst_166 = arith.constant 0.000000e+00 : f32
    %155 = vector.broadcast %cst_166 : f32 to vector<4x64xf32>
    %c12 = arith.constant 12 : index
    %c0_167 = arith.constant 0 : index
    %156 = vector.load %arg11[%c12, %c0_167] : memref<40x64xf32, #tpu.memory_space<vmem>>, vector<4x64xf32>
    tpu.vector_store %arg11[%c12, %c0_167], %155 {strides = array<i32>} : memref<40x64xf32, #tpu.memory_space<vmem>>, vector<4x64xf32>,
    %cst_168 = arith.constant 0.000000e+00 : f32
    %157 = vector.broadcast %cst_168 : f32 to vector<4x64xf32>
    %c20 = arith.constant 20 : index
    %c0_169 = arith.constant 0 : index
    %158 = vector.load %arg11[%c20, %c0_169] : memref<40x64xf32, #tpu.memory_space<vmem>>, vector<4x64xf32>
    tpu.vector_store %arg11[%c20, %c0_169], %157 {strides = array<i32>} : memref<40x64xf32, #tpu.memory_space<vmem>>, vector<4x64xf32>,
    %cst_170 = arith.constant 0.000000e+00 : f32
    %159 = vector.broadcast %cst_170 : f32 to vector<4x64xf32>
    %c28 = arith.constant 28 : index
    %c0_171 = arith.constant 0 : index
    %160 = vector.load %arg11[%c28, %c0_171] : memref<40x64xf32, #tpu.memory_space<vmem>>, vector<4x64xf32>
    tpu.vector_store %arg11[%c28, %c0_171], %159 {strides = array<i32>} : memref<40x64xf32, #tpu.memory_space<vmem>>, vector<4x64xf32>,
    %cst_172 = arith.constant 0.000000e+00 : f32
    %161 = vector.broadcast %cst_172 : f32 to vector<4x64xf32>
    %c36 = arith.constant 36 : index
    %c0_173 = arith.constant 0 : index
    %162 = vector.load %arg11[%c36, %c0_173] : memref<40x64xf32, #tpu.memory_space<vmem>>, vector<4x64xf32>
    tpu.vector_store %arg11[%c36, %c0_173], %161 {strides = array<i32>} : memref<40x64xf32, #tpu.memory_space<vmem>>, vector<4x64xf32>,
    %cst_174 = arith.constant 0.000000e+00 : f32
    %163 = vector.broadcast %cst_174 : f32 to vector<8x64xf32>
    %c0_175 = arith.constant 0 : index
    %c0_176 = arith.constant 0 : index
    %164 = vector.load %arg12[%c0_175, %c0_176] : memref<40x64xf32, #tpu.memory_space<vmem>>, vector<8x64xf32>
    tpu.vector_store %arg12[%c0_175, %c0_176], %163 {strides = array<i32>} : memref<40x64xf32, #tpu.memory_space<vmem>>, vector<8x64xf32>,
    %cst_177 = arith.constant 0.000000e+00 : f32
    %165 = vector.broadcast %cst_177 : f32 to vector<4x64xf32>
    %c12_178 = arith.constant 12 : index
    %c0_179 = arith.constant 0 : index
    %166 = vector.load %arg12[%c12_178, %c0_179] : memref<40x64xf32, #tpu.memory_space<vmem>>, vector<4x64xf32>
    tpu.vector_store %arg12[%c12_178, %c0_179], %165 {strides = array<i32>} : memref<40x64xf32, #tpu.memory_space<vmem>>, vector<4x64xf32>,
    %cst_180 = arith.constant 0.000000e+00 : f32
    %167 = vector.broadcast %cst_180 : f32 to vector<4x64xf32>
    %c20_181 = arith.constant 20 : index
    %c0_182 = arith.constant 0 : index
    %168 = vector.load %arg12[%c20_181, %c0_182] : memref<40x64xf32, #tpu.memory_space<vmem>>, vector<4x64xf32>
    tpu.vector_store %arg12[%c20_181, %c0_182], %167 {strides = array<i32>} : memref<40x64xf32, #tpu.memory_space<vmem>>, vector<4x64xf32>,
    %cst_183 = arith.constant 0.000000e+00 : f32
    %169 = vector.broadcast %cst_183 : f32 to vector<4x64xf32>
    %c28_184 = arith.constant 28 : index
    %c0_185 = arith.constant 0 : index
    %170 = vector.load %arg12[%c28_184, %c0_185] : memref<40x64xf32, #tpu.memory_space<vmem>>, vector<4x64xf32>
    tpu.vector_store %arg12[%c28_184, %c0_185], %169 {strides = array<i32>} : memref<40x64xf32, #tpu.memory_space<vmem>>, vector<4x64xf32>,
    %cst_186 = arith.constant 0.000000e+00 : f32
    %171 = vector.broadcast %cst_186 : f32 to vector<4x64xf32>
    %c36_187 = arith.constant 36 : index
    %c0_188 = arith.constant 0 : index
    %172 = vector.load %arg12[%c36_187, %c0_188] : memref<40x64xf32, #tpu.memory_space<vmem>>, vector<4x64xf32>
    tpu.vector_store %arg12[%c36_187, %c0_188], %171 {strides = array<i32>} : memref<40x64xf32, #tpu.memory_space<vmem>>, vector<4x64xf32>,
    %c8_189 = arith.constant 8 : index
    %c0_190 = arith.constant 0 : index
    %173 = tpu.strided_load %arg10[%c8_189, %c0_190] {strides = array<i32: 2, 1>} : memref<72x64xf32, #tpu.memory_space<vmem>>, vector<4x64xf32>
    %c8_191 = arith.constant 8 : index
    %c0_192 = arith.constant 0 : index
    %174 = vector.load %arg11[%c8_191, %c0_192] : memref<40x64xf32, #tpu.memory_space<vmem>>, vector<4x64xf32>
    tpu.vector_store %arg11[%c8_191, %c0_192], %173 {strides = array<i32>} : memref<40x64xf32, #tpu.memory_space<vmem>>, vector<4x64xf32>,
    %c9 = arith.constant 9 : index
    %c0_193 = arith.constant 0 : index
    %175 = tpu.strided_load %arg10[%c9, %c0_193] {strides = array<i32: 2, 1>} : memref<72x64xf32, #tpu.memory_space<vmem>>, vector<4x64xf32>
    %c8_194 = arith.constant 8 : index
    %c0_195 = arith.constant 0 : index
    %176 = vector.load %arg12[%c8_194, %c0_195] : memref<40x64xf32, #tpu.memory_space<vmem>>, vector<4x64xf32>
    tpu.vector_store %arg12[%c8_194, %c0_195], %175 {strides = array<i32>} : memref<40x64xf32, #tpu.memory_space<vmem>>, vector<4x64xf32>,
    %c24_196 = arith.constant 24 : index
    %c0_197 = arith.constant 0 : index
    %177 = tpu.strided_load %arg10[%c24_196, %c0_197] {strides = array<i32: 2, 1>} : memref<72x64xf32, #tpu.memory_space<vmem>>, vector<4x64xf32>
    %c16_198 = arith.constant 16 : index
    %c0_199 = arith.constant 0 : index
    %178 = vector.load %arg11[%c16_198, %c0_199] : memref<40x64xf32, #tpu.memory_space<vmem>>, vector<4x64xf32>
    tpu.vector_store %arg11[%c16_198, %c0_199], %177 {strides = array<i32>} : memref<40x64xf32, #tpu.memory_space<vmem>>, vector<4x64xf32>,
    %c25 = arith.constant 25 : index
    %c0_200 = arith.constant 0 : index
    %179 = tpu.strided_load %arg10[%c25, %c0_200] {strides = array<i32: 2, 1>} : memref<72x64xf32, #tpu.memory_space<vmem>>, vector<4x64xf32>
    %c16_201 = arith.constant 16 : index
    %c0_202 = arith.constant 0 : index
    %180 = vector.load %arg12[%c16_201, %c0_202] : memref<40x64xf32, #tpu.memory_space<vmem>>, vector<4x64xf32>
    tpu.vector_store %arg12[%c16_201, %c0_202], %179 {strides = array<i32>} : memref<40x64xf32, #tpu.memory_space<vmem>>, vector<4x64xf32>,
    %c40_203 = arith.constant 40 : index
    %c0_204 = arith.constant 0 : index
    %181 = tpu.strided_load %arg10[%c40_203, %c0_204] {strides = array<i32: 2, 1>} : memref<72x64xf32, #tpu.memory_space<vmem>>, vector<4x64xf32>
    %c24_205 = arith.constant 24 : index
    %c0_206 = arith.constant 0 : index
    %182 = vector.load %arg11[%c24_205, %c0_206] : memref<40x64xf32, #tpu.memory_space<vmem>>, vector<4x64xf32>
    tpu.vector_store %arg11[%c24_205, %c0_206], %181 {strides = array<i32>} : memref<40x64xf32, #tpu.memory_space<vmem>>, vector<4x64xf32>,
    %c41 = arith.constant 41 : index
    %c0_207 = arith.constant 0 : index
    %183 = tpu.strided_load %arg10[%c41, %c0_207] {strides = array<i32: 2, 1>} : memref<72x64xf32, #tpu.memory_space<vmem>>, vector<4x64xf32>
    %c24_208 = arith.constant 24 : index
    %c0_209 = arith.constant 0 : index
    %184 = vector.load %arg12[%c24_208, %c0_209] : memref<40x64xf32, #tpu.memory_space<vmem>>, vector<4x64xf32>
    tpu.vector_store %arg12[%c24_208, %c0_209], %183 {strides = array<i32>} : memref<40x64xf32, #tpu.memory_space<vmem>>, vector<4x64xf32>,
    %c56_210 = arith.constant 56 : index
    %c0_211 = arith.constant 0 : index
    %185 = tpu.strided_load %arg10[%c56_210, %c0_211] {strides = array<i32: 2, 1>} : memref<72x64xf32, #tpu.memory_space<vmem>>, vector<4x64xf32>
    %c32_212 = arith.constant 32 : index
    %c0_213 = arith.constant 0 : index
    %186 = vector.load %arg11[%c32_212, %c0_213] : memref<40x64xf32, #tpu.memory_space<vmem>>, vector<4x64xf32>
    tpu.vector_store %arg11[%c32_212, %c0_213], %185 {strides = array<i32>} : memref<40x64xf32, #tpu.memory_space<vmem>>, vector<4x64xf32>,
    %c57 = arith.constant 57 : index
    %c0_214 = arith.constant 0 : index
    %187 = tpu.strided_load %arg10[%c57, %c0_214] {strides = array<i32: 2, 1>} : memref<72x64xf32, #tpu.memory_space<vmem>>, vector<4x64xf32>
    %c32_215 = arith.constant 32 : index
    %c0_216 = arith.constant 0 : index
    %188 = vector.load %arg12[%c32_215, %c0_216] : memref<40x64xf32, #tpu.memory_space<vmem>>, vector<4x64xf32>
    tpu.vector_store %arg12[%c32_215, %c0_216], %187 {strides = array<i32>} : memref<40x64xf32, #tpu.memory_space<vmem>>, vector<4x64xf32>,
    %c0_217 = arith.constant 0 : index
    %c0_218 = arith.constant 0 : index
    %189 = vector.load %arg11[%c0_217, %c0_218] : memref<40x64xf32, #tpu.memory_space<vmem>>, vector<40x64xf32>
    %190 = arith.truncf %189 : vector<40x64xf32> to vector<40x64xbf16>
    %c0_219 = arith.constant 0 : index
    %c0_220 = arith.constant 0 : index
    %191 = vector.load %arg12[%c0_219, %c0_220] : memref<40x64xf32, #tpu.memory_space<vmem>>, vector<40x64xf32>
    %192 = arith.truncf %191 : vector<40x64xf32> to vector<40x64xbf16>
    %193 = vector.extract_strided_slice %192 {offsets = [0, 0], sizes = [38, 64], strides = [1, 1]} : vector<40x64xbf16> to vector<38x64xbf16>
    %c528 = arith.constant 528 : index
    %c0_221 = arith.constant 0 : index
    %194 = vector.load %arg2[%c528, %c0_221] : memref<1232x128xbf16, #tpu.memory_space<vmem>>, vector<64x128xbf16>
    %cst_222 = arith.constant dense<0.000000e+00> : vector<38x128xf32>
    %195 = tpu.matmul %193, %194, %cst_222 {dimension_numbers = #tpu.dot_dimension_numbers<[1], [0], [0], [1], [0, 0, 1, 1], [], []>} : vector<38x64xbf16>, vector<64x128xbf16>, vector<38x128xf32> -> vector<38x128xf32>
    %196 = vector.extract_strided_slice %190 {offsets = [1, 0], sizes = [38, 64], strides = [1, 1]} : vector<40x64xbf16> to vector<38x64xbf16>
    %c592 = arith.constant 592 : index
    %c0_223 = arith.constant 0 : index
    %197 = vector.load %arg2[%c592, %c0_223] : memref<1232x128xbf16, #tpu.memory_space<vmem>>, vector<64x128xbf16>
    %cst_224 = arith.constant dense<0.000000e+00> : vector<38x128xf32>
    %198 = tpu.matmul %196, %197, %cst_224 {dimension_numbers = #tpu.dot_dimension_numbers<[1], [0], [0], [1], [0, 0, 1, 1], [], []>} : vector<38x64xbf16>, vector<64x128xbf16>, vector<38x128xf32> -> vector<38x128xf32>
    %199 = arith.addf %195, %198 : vector<38x128xf32>
    %200 = vector.extract_strided_slice %192 {offsets = [1, 0], sizes = [38, 64], strides = [1, 1]} : vector<40x64xbf16> to vector<38x64xbf16>
    %c656 = arith.constant 656 : index
    %c0_225 = arith.constant 0 : index
    %201 = vector.load %arg2[%c656, %c0_225] : memref<1232x128xbf16, #tpu.memory_space<vmem>>, vector<64x128xbf16>
    %cst_226 = arith.constant dense<0.000000e+00> : vector<38x128xf32>
    %202 = tpu.matmul %200, %201, %cst_226 {dimension_numbers = #tpu.dot_dimension_numbers<[1], [0], [0], [1], [0, 0, 1, 1], [], []>} : vector<38x64xbf16>, vector<64x128xbf16>, vector<38x128xf32> -> vector<38x128xf32>
    %203 = arith.addf %199, %202 : vector<38x128xf32>
    %c3 = arith.constant 3 : index
    %c0_227 = arith.constant 0 : index
    %204 = vector.load %arg3[%c3, %c0_227] : memref<8x128xf32, #tpu.memory_space<vmem>>, vector<1x128xf32>
    %205 = vector.broadcast %204 : vector<1x128xf32> to vector<38x128xf32>
    %206 = arith.addf %203, %205 : vector<38x128xf32>
    %207 = vector.extract_strided_slice %206 {offsets = [0, 0], sizes = [38, 64], strides = [1, 1]} : vector<38x128xf32> to vector<38x64xf32>
    %cst_228 = arith.constant 0.000000e+00 : f32
    %208 = vector.broadcast %cst_228 : f32 to vector<38x64xf32>
    %209 = arith.maximumf %207, %208 : vector<38x64xf32>
    %210 = vector.extract_strided_slice %206 {offsets = [0, 64], sizes = [38, 64], strides = [1, 1]} : vector<38x128xf32> to vector<38x64xf32>
    %cst_229 = arith.constant 0.000000e+00 : f32
    %211 = vector.broadcast %cst_229 : f32 to vector<8x64xf32>
    %c0_230 = arith.constant 0 : index
    %c0_231 = arith.constant 0 : index
    %212 = vector.load %arg13[%c0_230, %c0_231] : memref<40x64xf32, #tpu.memory_space<vmem>>, vector<8x64xf32>
    tpu.vector_store %arg13[%c0_230, %c0_231], %211 {strides = array<i32>} : memref<40x64xf32, #tpu.memory_space<vmem>>, vector<8x64xf32>,
    %cst_232 = arith.constant 0.000000e+00 : f32
    %213 = vector.broadcast %cst_232 : f32 to vector<4x64xf32>
    %c12_233 = arith.constant 12 : index
    %c0_234 = arith.constant 0 : index
    %214 = vector.load %arg13[%c12_233, %c0_234] : memref<40x64xf32, #tpu.memory_space<vmem>>, vector<4x64xf32>
    tpu.vector_store %arg13[%c12_233, %c0_234], %213 {strides = array<i32>} : memref<40x64xf32, #tpu.memory_space<vmem>>, vector<4x64xf32>,
    %cst_235 = arith.constant 0.000000e+00 : f32
    %215 = vector.broadcast %cst_235 : f32 to vector<4x64xf32>
    %c20_236 = arith.constant 20 : index
    %c0_237 = arith.constant 0 : index
    %216 = vector.load %arg13[%c20_236, %c0_237] : memref<40x64xf32, #tpu.memory_space<vmem>>, vector<4x64xf32>
    tpu.vector_store %arg13[%c20_236, %c0_237], %215 {strides = array<i32>} : memref<40x64xf32, #tpu.memory_space<vmem>>, vector<4x64xf32>,
    %cst_238 = arith.constant 0.000000e+00 : f32
    %217 = vector.broadcast %cst_238 : f32 to vector<4x64xf32>
    %c28_239 = arith.constant 28 : index
    %c0_240 = arith.constant 0 : index
    %218 = vector.load %arg13[%c28_239, %c0_240] : memref<40x64xf32, #tpu.memory_space<vmem>>, vector<4x64xf32>
    tpu.vector_store %arg13[%c28_239, %c0_240], %217 {strides = array<i32>} : memref<40x64xf32, #tpu.memory_space<vmem>>, vector<4x64xf32>,
    %cst_241 = arith.constant 0.000000e+00 : f32
    %219 = vector.broadcast %cst_241 : f32 to vector<4x64xf32>
    %c36_242 = arith.constant 36 : index
    %c0_243 = arith.constant 0 : index
    %220 = vector.load %arg13[%c36_242, %c0_243] : memref<40x64xf32, #tpu.memory_space<vmem>>, vector<4x64xf32>
    tpu.vector_store %arg13[%c36_242, %c0_243], %219 {strides = array<i32>} : memref<40x64xf32, #tpu.memory_space<vmem>>, vector<4x64xf32>,
    %221 = vector.extract_strided_slice %209 {offsets = [7, 0], sizes = [4, 64], strides = [1, 1]} : vector<38x64xf32> to vector<4x64xf32>
    %c8_244 = arith.constant 8 : index
    %c0_245 = arith.constant 0 : index
    %222 = vector.load %arg13[%c8_244, %c0_245] : memref<40x64xf32, #tpu.memory_space<vmem>>, vector<4x64xf32>
    tpu.vector_store %arg13[%c8_244, %c0_245], %221 {strides = array<i32>} : memref<40x64xf32, #tpu.memory_space<vmem>>, vector<4x64xf32>,
    %223 = vector.extract_strided_slice %209 {offsets = [15, 0], sizes = [4, 64], strides = [1, 1]} : vector<38x64xf32> to vector<4x64xf32>
    %c16_246 = arith.constant 16 : index
    %c0_247 = arith.constant 0 : index
    %224 = vector.load %arg13[%c16_246, %c0_247] : memref<40x64xf32, #tpu.memory_space<vmem>>, vector<4x64xf32>
    tpu.vector_store %arg13[%c16_246, %c0_247], %223 {strides = array<i32>} : memref<40x64xf32, #tpu.memory_space<vmem>>, vector<4x64xf32>,
    %225 = vector.extract_strided_slice %209 {offsets = [23, 0], sizes = [4, 64], strides = [1, 1]} : vector<38x64xf32> to vector<4x64xf32>
    %c24_248 = arith.constant 24 : index
    %c0_249 = arith.constant 0 : index
    %226 = vector.load %arg13[%c24_248, %c0_249] : memref<40x64xf32, #tpu.memory_space<vmem>>, vector<4x64xf32>
    tpu.vector_store %arg13[%c24_248, %c0_249], %225 {strides = array<i32>} : memref<40x64xf32, #tpu.memory_space<vmem>>, vector<4x64xf32>,
    %227 = vector.extract_strided_slice %209 {offsets = [31, 0], sizes = [4, 64], strides = [1, 1]} : vector<38x64xf32> to vector<4x64xf32>
    %c32_250 = arith.constant 32 : index
    %c0_251 = arith.constant 0 : index
    %228 = vector.load %arg13[%c32_250, %c0_251] : memref<40x64xf32, #tpu.memory_space<vmem>>, vector<4x64xf32>
    tpu.vector_store %arg13[%c32_250, %c0_251], %227 {strides = array<i32>} : memref<40x64xf32, #tpu.memory_space<vmem>>, vector<4x64xf32>,
    %c0_252 = arith.constant 0 : index
    %c0_253 = arith.constant 0 : index
    %229 = vector.load %arg13[%c0_252, %c0_253] : memref<40x64xf32, #tpu.memory_space<vmem>>, vector<40x64xf32>
    %230 = arith.truncf %229 : vector<40x64xf32> to vector<40x64xbf16>
    %231 = vector.extract_strided_slice %230 {offsets = [0, 0], sizes = [38, 64], strides = [1, 1]} : vector<40x64xbf16> to vector<38x64xbf16>
    %c720 = arith.constant 720 : index
    %c0_254 = arith.constant 0 : index
    %232 = vector.load %arg2[%c720, %c0_254] : memref<1232x128xbf16, #tpu.memory_space<vmem>>, vector<64x64xbf16>
    %cst_255 = arith.constant dense<0.000000e+00> : vector<38x64xf32>
    %233 = tpu.matmul %231, %232, %cst_255 {dimension_numbers = #tpu.dot_dimension_numbers<[1], [0], [0], [1], [0, 0, 1, 1], [], []>} : vector<38x64xbf16>, vector<64x64xbf16>, vector<38x64xf32> -> vector<38x64xf32>
    %234 = vector.extract_strided_slice %230 {offsets = [1, 0], sizes = [38, 64], strides = [1, 1]} : vector<40x64xbf16> to vector<38x64xbf16>
    %c784 = arith.constant 784 : index
    %c0_256 = arith.constant 0 : index
    %235 = vector.load %arg2[%c784, %c0_256] : memref<1232x128xbf16, #tpu.memory_space<vmem>>, vector<64x64xbf16>
    %cst_257 = arith.constant dense<0.000000e+00> : vector<38x64xf32>
    %236 = tpu.matmul %234, %235, %cst_257 {dimension_numbers = #tpu.dot_dimension_numbers<[1], [0], [0], [1], [0, 0, 1, 1], [], []>} : vector<38x64xbf16>, vector<64x64xbf16>, vector<38x64xf32> -> vector<38x64xf32>
    %237 = arith.addf %233, %236 : vector<38x64xf32>
    %238 = vector.extract_strided_slice %230 {offsets = [2, 0], sizes = [38, 64], strides = [1, 1]} : vector<40x64xbf16> to vector<38x64xbf16>
    %c848 = arith.constant 848 : index
    %c0_258 = arith.constant 0 : index
    %239 = vector.load %arg2[%c848, %c0_258] : memref<1232x128xbf16, #tpu.memory_space<vmem>>, vector<64x64xbf16>
    %cst_259 = arith.constant dense<0.000000e+00> : vector<38x64xf32>
    %240 = tpu.matmul %238, %239, %cst_259 {dimension_numbers = #tpu.dot_dimension_numbers<[1], [0], [0], [1], [0, 0, 1, 1], [], []>} : vector<38x64xbf16>, vector<64x64xbf16>, vector<38x64xf32> -> vector<38x64xf32>
    %241 = arith.addf %237, %240 : vector<38x64xf32>
    %c4 = arith.constant 4 : index
    %c0_260 = arith.constant 0 : index
    %242 = vector.load %arg3[%c4, %c0_260] : memref<8x128xf32, #tpu.memory_space<vmem>>, vector<1x64xf32>
    %243 = vector.broadcast %242 : vector<1x64xf32> to vector<38x64xf32>
    %244 = arith.addf %241, %243 : vector<38x64xf32>
    %245 = arith.addf %244, %210 : vector<38x64xf32>
    %cst_261 = arith.constant 0.000000e+00 : f32
    %246 = vector.broadcast %cst_261 : f32 to vector<38x64xf32>
    %247 = arith.maximumf %245, %246 : vector<38x64xf32>
    %c0_262 = arith.constant 0 : index
    %c0_263 = arith.constant 0 : index
    %248 = vector.load %arg14[%c0_262, %c0_263] : memref<40x64xf32, #tpu.memory_space<vmem>>, vector<38x64xf32>
    tpu.vector_store %arg14[%c0_262, %c0_263], %247 {strides = array<i32>} : memref<40x64xf32, #tpu.memory_space<vmem>>, vector<38x64xf32>,
    %cst_264 = arith.constant 0.000000e+00 : f32
    %249 = vector.broadcast %cst_264 : f32 to vector<2x64xf32>
    %c38 = arith.constant 38 : index
    %c0_265 = arith.constant 0 : index
    %250 = vector.load %arg14[%c38, %c0_265] : memref<40x64xf32, #tpu.memory_space<vmem>>, vector<2x64xf32>
    tpu.vector_store %arg14[%c38, %c0_265], %249 {strides = array<i32>} : memref<40x64xf32, #tpu.memory_space<vmem>>, vector<2x64xf32>,
    %cst_266 = arith.constant 0.000000e+00 : f32
    %251 = vector.broadcast %cst_266 : f32 to vector<8x256xf32>
    %c0_267 = arith.constant 0 : index
    %c0_268 = arith.constant 0 : index
    %252 = vector.load %arg15[%c0_267, %c0_268] : memref<8x256xf32, #tpu.memory_space<vmem>>, vector<8x256xf32>
    tpu.vector_store %arg15[%c0_267, %c0_268], %251 {strides = array<i32>} : memref<8x256xf32, #tpu.memory_space<vmem>>, vector<8x256xf32>,
    %c7_269 = arith.constant 7 : index
    %c0_270 = arith.constant 0 : index
    %253 = tpu.strided_load %arg14[%c7_269, %c0_270] {strides = array<i32: 8, 1>} : memref<40x64xf32, #tpu.memory_space<vmem>>, vector<4x64xf32>
    %c0_271 = arith.constant 0 : index
    %c0_272 = arith.constant 0 : index
    %254 = vector.load %arg15[%c0_271, %c0_272] : memref<8x256xf32, #tpu.memory_space<vmem>>, vector<4x64xf32>
    tpu.vector_store %arg15[%c0_271, %c0_272], %253 {strides = array<i32>} : memref<8x256xf32, #tpu.memory_space<vmem>>, vector<4x64xf32>,
    %c8_273 = arith.constant 8 : index
    %c0_274 = arith.constant 0 : index
    %255 = tpu.strided_load %arg14[%c8_273, %c0_274] {strides = array<i32: 8, 1>} : memref<40x64xf32, #tpu.memory_space<vmem>>, vector<4x64xf32>
    %c0_275 = arith.constant 0 : index
    %c64_276 = arith.constant 64 : index
    %256 = vector.load %arg15[%c0_275, %c64_276] : memref<8x256xf32, #tpu.memory_space<vmem>>, vector<4x64xf32>
    tpu.vector_store %arg15[%c0_275, %c64_276], %255 {strides = array<i32>} : memref<8x256xf32, #tpu.memory_space<vmem>>, vector<4x64xf32>,
    %c9_277 = arith.constant 9 : index
    %c0_278 = arith.constant 0 : index
    %257 = tpu.strided_load %arg14[%c9_277, %c0_278] {strides = array<i32: 8, 1>} : memref<40x64xf32, #tpu.memory_space<vmem>>, vector<4x64xf32>
    %c0_279 = arith.constant 0 : index
    %c128 = arith.constant 128 : index
    %258 = vector.load %arg15[%c0_279, %c128] : memref<8x256xf32, #tpu.memory_space<vmem>>, vector<4x64xf32>
    tpu.vector_store %arg15[%c0_279, %c128], %257 {strides = array<i32>} : memref<8x256xf32, #tpu.memory_space<vmem>>, vector<4x64xf32>,
    %c10 = arith.constant 10 : index
    %c0_280 = arith.constant 0 : index
    %259 = tpu.strided_load %arg14[%c10, %c0_280] {strides = array<i32: 8, 1>} : memref<40x64xf32, #tpu.memory_space<vmem>>, vector<4x64xf32>
    %c0_281 = arith.constant 0 : index
    %c192 = arith.constant 192 : index
    %260 = vector.load %arg15[%c0_281, %c192] : memref<8x256xf32, #tpu.memory_space<vmem>>, vector<4x64xf32>
    tpu.vector_store %arg15[%c0_281, %c192], %259 {strides = array<i32>} : memref<8x256xf32, #tpu.memory_space<vmem>>, vector<4x64xf32>,
    %c0_282 = arith.constant 0 : index
    %c0_283 = arith.constant 0 : index
    %261 = vector.load %arg15[%c0_282, %c0_283] : memref<8x256xf32, #tpu.memory_space<vmem>>, vector<8x256xf32>
    %c912 = arith.constant 912 : index
    %c0_284 = arith.constant 0 : index
    %262 = vector.load %arg2[%c912, %c0_284] : memref<1232x128xbf16, #tpu.memory_space<vmem>>, vector<256x32xbf16>
    %263 = arith.truncf %261 : vector<8x256xf32> to vector<8x256xbf16>
    %cst_285 = arith.constant dense<0.000000e+00> : vector<8x32xf32>
    %264 = tpu.matmul %263, %262, %cst_285 {dimension_numbers = #tpu.dot_dimension_numbers<[1], [0], [0], [1], [0, 0, 1, 1], [], []>} : vector<8x256xbf16>, vector<256x32xbf16>, vector<8x32xf32> -> vector<8x32xf32>
    %c5 = arith.constant 5 : index
    %c0_286 = arith.constant 0 : index
    %265 = vector.load %arg3[%c5, %c0_286] : memref<8x128xf32, #tpu.memory_space<vmem>>, vector<1x32xf32>
    %266 = vector.broadcast %265 : vector<1x32xf32> to vector<8x32xf32>
    %267 = arith.addf %264, %266 : vector<8x32xf32>
    %cst_287 = arith.constant 0.000000e+00 : f32
    %268 = vector.broadcast %cst_287 : f32 to vector<8x32xf32>
    %269 = arith.maximumf %267, %268 : vector<8x32xf32>
    %c1168 = arith.constant 1168 : index
    %c0_288 = arith.constant 0 : index
    %270 = vector.load %arg2[%c1168, %c0_288] : memref<1232x128xbf16, #tpu.memory_space<vmem>>, vector<32x32xbf16>
    %271 = arith.truncf %269 : vector<8x32xf32> to vector<8x32xbf16>
    %cst_289 = arith.constant dense<0.000000e+00> : vector<8x32xf32>
    %272 = tpu.matmul %271, %270, %cst_289 {dimension_numbers = #tpu.dot_dimension_numbers<[1], [0], [0], [1], [0, 0, 1, 1], [], []>} : vector<8x32xbf16>, vector<32x32xbf16>, vector<8x32xf32> -> vector<8x32xf32>
    %c6 = arith.constant 6 : index
    %c0_290 = arith.constant 0 : index
    %273 = vector.load %arg3[%c6, %c0_290] : memref<8x128xf32, #tpu.memory_space<vmem>>, vector<1x32xf32>
    %274 = vector.broadcast %273 : vector<1x32xf32> to vector<8x32xf32>
    %275 = arith.addf %272, %274 : vector<8x32xf32>
    %cst_291 = arith.constant 0.000000e+00 : f32
    %276 = vector.broadcast %cst_291 : f32 to vector<8x32xf32>
    %277 = arith.maximumf %275, %276 : vector<8x32xf32>
    %c1200 = arith.constant 1200 : index
    %c0_292 = arith.constant 0 : index
    %278 = vector.load %arg2[%c1200, %c0_292] : memref<1232x128xbf16, #tpu.memory_space<vmem>>, vector<32x8xbf16>
    %279 = arith.truncf %277 : vector<8x32xf32> to vector<8x32xbf16>
    %cst_293 = arith.constant dense<0.000000e+00> : vector<8x8xf32>
    %280 = tpu.matmul %279, %278, %cst_293 {dimension_numbers = #tpu.dot_dimension_numbers<[1], [0], [0], [1], [0, 0, 1, 1], [], []>} : vector<8x32xbf16>, vector<32x8xbf16>, vector<8x8xf32> -> vector<8x8xf32>
    %c7_294 = arith.constant 7 : index
    %c0_295 = arith.constant 0 : index
    %281 = vector.load %arg3[%c7_294, %c0_295] : memref<8x128xf32, #tpu.memory_space<vmem>>, vector<1x8xf32>
    %282 = vector.broadcast %281 : vector<1x8xf32> to vector<8x8xf32>
    %283 = arith.addf %280, %282 : vector<8x8xf32>
    %284 = vector.extract_strided_slice %283 {offsets = [0, 0], sizes = [2, 8], strides = [1, 1]} : vector<8x8xf32> to vector<2x8xf32>
    %c0_296 = arith.constant 0 : index
    %c0_297 = arith.constant 0 : index
    %285 = vector.load %arg4[%c0_296, %c0_297] : memref<2x8xf32, #tpu.memory_space<vmem>>, vector<2x8xf32>
    tpu.vector_store %arg4[%c0_296, %c0_297], %284 {strides = array<i32>} : memref<2x8xf32, #tpu.memory_space<vmem>>, vector<2x8xf32>,
    %286 = vector.extract_strided_slice %283 {offsets = [2, 0], sizes = [2, 8], strides = [1, 1]} : vector<8x8xf32> to vector<2x8xf32>
    %c0_298 = arith.constant 0 : index
    %c0_299 = arith.constant 0 : index
    %287 = vector.load %arg5[%c0_298, %c0_299] : memref<2x8xf32, #tpu.memory_space<vmem>>, vector<2x8xf32>
    tpu.vector_store %arg5[%c0_298, %c0_299], %286 {strides = array<i32>} : memref<2x8xf32, #tpu.memory_space<vmem>>, vector<2x8xf32>,
    return
  }
}

</mosaic_0001>

<llo_original>
// kernel: siamese_forward.1
$region0: #{siamese_forward.1}
  #allocation0 [shape = 'u32[]', space=smem, size = 0x4, offset = 0x4, fixed_abs, tag = 'smem constant byte address 0x4 - core index']
  #allocation1 [shape = 'u32[144,128]{1,0:T(1,128)}', space=vmem, size = 0x12000, scoped, tag = 'internal scratch']
  #allocation2 [shape = 'f32[104,48]{1,0:T(8,128)}', space=vmem, size = 0xd000, scoped, tag = 'scratch operand']
  #allocation3 [shape = 'f32[104,64]{1,0:T(8,128)}', space=vmem, size = 0xd000, scoped, tag = 'scratch operand']
  #allocation4 [shape = 'f32[72,64]{1,0:T(8,128)}', space=vmem, size = 0x9000, scoped, tag = 'scratch operand']
  #allocation5 [shape = 'f32[72,64]{1,0:T(8,128)}', space=vmem, size = 0x9000, scoped, tag = 'scratch operand']
  #allocation6 [shape = 'f32[72,64]{1,0:T(8,128)}', space=vmem, size = 0x9000, scoped, tag = 'scratch operand']
  #allocation7 [shape = 'f32[40,64]{1,0:T(8,128)}', space=vmem, size = 0x5000, scoped, tag = 'scratch operand']
  #allocation8 [shape = 'f32[40,64]{1,0:T(8,128)}', space=vmem, size = 0x5000, scoped, tag = 'scratch operand']
  #allocation9 [shape = 'f32[40,64]{1,0:T(8,128)}', space=vmem, size = 0x5000, scoped, tag = 'scratch operand']
  #allocation10 [shape = 'f32[40,64]{1,0:T(8,128)}', space=vmem, size = 0x5000, scoped, tag = 'scratch operand']
  #allocation11 [shape = 'f32[8,256]{1,0:T(8,128)}', space=vmem, size = 0x2000, scoped, tag = 'scratch operand']
  %s0 = inlined_call_operand.hbm [shape: f32[96,16], index: 0, kind: input, shape index: {}]
  %s1 = inlined_call_operand.hbm [shape: f32[96,16], index: 1, kind: input, shape index: {}]
  %s2 = inlined_call_operand.hbm [shape: bf16[1232,128], index: 2, kind: input, shape index: {}]
  %s3 = inlined_call_operand.vmem [shape: f32[8,128], index: 3, kind: input, shape index: {}]
  %s4 = inlined_call_operand.hbm [shape: f32[2,8], index: 4, kind: output, shape index: {0}]
  %s5 = inlined_call_operand.hbm [shape: f32[2,8], index: 5, kind: output, shape index: {1}]
  %6 = xla_tuple %s4, %s5
  %s7 = sld [smem:[#allocation0]]
  $region46: #{siamese_forward.1} parent=0
    _
  %s9 = ssub.s32 1, %s7
  %s10 = scalar_select 0, %s9, %s7
  $region1: #{siamese_forward.1} parent=0
    #allocation12 [shape = 'u8[49152]{0}', space=vmem, size = 0xc000, scoped, tag = 'input window, operand 0, single buffered']
    #allocation13 [shape = 's32[1]{0}', space=sflag, size = 0x4, scoped, tag = 'scoped memory for siamese_forward.1']
    #allocation14 [shape = 's32[1]{0}', space=sflag, size = 0x4, scoped, tag = 'scoped memory for siamese_forward.1']
    #allocation15 [shape = 'u8[49152]{0}', space=vmem, size = 0xc000, scoped, tag = 'input window, operand 1, single buffered']
    #allocation16 [shape = 's32[1]{0}', space=sflag, size = 0x4, scoped, tag = 'scoped memory for siamese_forward.1']
    #allocation17 [shape = 'u8[315392]{0}', space=vmem, size = 0x4d000, scoped, tag = 'input window, operand 2, single buffered']
    #allocation18 [shape = 'u8[1024]{0}', space=vmem, size = 0x400, scoped, tag = 'output window, operand 0, single buffered']
    #allocation19 [shape = 'u8[1024]{0}', space=vmem, size = 0x400, scoped, tag = 'output window, operand 1, single buffered']
    #allocation20 [shape = 's32[1]{0}', space=sflag, size = 0x4, scoped, tag = 'scoped memory for siamese_forward.1']
    %11 = vsyncpa [#allocation13], 0
    %12 = vsyncpa [#allocation16], 0
    %13 = vsyncpa [#allocation14], 0
    %14 = vsyncpa [#allocation20], 0
    // Predicated region
    $region2: #{siamese_forward.1} parent=1 // pred_check
      _
    $region3: #{siamese_forward.1} parent=1 // pred_check_branch
      %16 = sbr.rel (0) target = $region5
    $region4: #{siamese_forward.1} parent=1 // pred_region
      %s18 = ssub.s32 1536, 1536
      %19 = vsyncadd [#allocation13], %s18
      %s20 = sshll.u32 [#allocation12], 4
      %s21 = int_to_ptr.vmem [resolvable:$true] %s20
      %26 = dma.hbm_to_vmem [thread:$0]  %s0, 1536, %s21, [#allocation13], 128, 128, 8
    $region5: #{siamese_forward.1} parent=1 // pred_fallthru
      _
    // Predicated region
    $region6: #{siamese_forward.1} parent=1 // pred_check
      _
    $region7: #{siamese_forward.1} parent=1 // pred_check_branch
      %28 = sbr.rel (0) target = $region9
    $region8: #{siamese_forward.1} parent=1 // pred_region
      %s30 = ssub.s32 1536, 1536
      %31 = vsyncadd [#allocation16], %s30
      %s32 = sshll.u32 [#allocation15], 4
      %s33 = int_to_ptr.vmem [resolvable:$true] %s32
      %38 = dma.hbm_to_vmem [thread:$0]  %s1, 1536, %s33, [#allocation16], 128, 128, 8
    $region9: #{siamese_forward.1} parent=1 // pred_fallthru
      _
    // Predicated region
    $region10: #{siamese_forward.1} parent=1 // pred_check
      _
    $region11: #{siamese_forward.1} parent=1 // pred_check_branch
      %40 = sbr.rel (0) target = $region13
    $region12: #{siamese_forward.1} parent=1 // pred_region
      %s42 = ssub.s32 9856, 9856
      %43 = vsyncadd [#allocation16], %s42
      %s44 = sshll.u32 [#allocation17], 4
      %s45 = int_to_ptr.vmem [resolvable:$true] %s44
      %50 = dma.hbm_to_vmem [thread:$0]  %s2, 9856, %s45, [#allocation16], 64, 64, 4
    $region13: #{siamese_forward.1} parent=1 // pred_fallthru
      _
    // Predicated region
    $region14: #{siamese_forward.1} parent=1 // pred_check
      _
    $region15: #{siamese_forward.1} parent=1 // pred_check_branch
      %52 = sbr.rel (0) target = $region17
    $region16: #{siamese_forward.1} parent=1 // pred_region
      _
    $region17: #{siamese_forward.1} parent=1 // pred_fallthru
      _
    // Predicated region
    $region18: #{siamese_forward.1} parent=1 // pred_check
      _
    $region19: #{siamese_forward.1} parent=1 // pred_check_branch
      %54 = sbr.rel (0) target = $region21
    $region20: #{siamese_forward.1} parent=1 // pred_region
      %55 = dma.done [#allocation13], 1536
    $region21: #{siamese_forward.1} parent=1 // pred_fallthru
      _
    // Predicated region
    $region22: #{siamese_forward.1} parent=1 // pred_check
      _
    $region23: #{siamese_forward.1} parent=1 // pred_check_branch
      %57 = sbr.rel (0) target = $region25
    $region24: #{siamese_forward.1} parent=1 // pred_region
      %58 = dma.done [#allocation16], 1536
    $region25: #{siamese_forward.1} parent=1 // pred_fallthru
      _
    // Predicated region
    $region26: #{siamese_forward.1} parent=1 // pred_check
      _
    $region27: #{siamese_forward.1} parent=1 // pred_check_branch
      %60 = sbr.rel (0) target = $region29
    $region28: #{siamese_forward.1} parent=1 // pred_region
      %61 = dma.done [#allocation16], 9856
    $region29: #{siamese_forward.1} parent=1 // pred_fallthru
      _
    %vm63 = vcmask 392192
    %64 = vst.msk [vmem:[#allocation2] sm:$0xff] %vm63, 0.0
    %65 = vst.msk [vmem:[#allocation2 + $0x18] sm:$0xff] %vm63, 0.0
    %66 = vst.msk [vmem:[#allocation2 + $0x30] sm:$0xff] %vm63, 0.0
    %67 = vst.msk [vmem:[#allocation2 + $0x48] sm:$0xff] %vm63, 0.0
    %68 = vst.msk [vmem:[#allocation2 + $0x60] sm:$0xff] %vm63, 0.0
    %v69 = vld [vmem:[#allocation12] sm:$0xff]
    %v70 = vld [vmem:[#allocation12 + $0x8] sm:$0xff]
    %vm71 = vcmask 130048
    %72 = vst.msk [vmem:[#allocation2 + $0x8] sm:$0xff] %vm71, %v69
    %73 = vst.msk [vmem:[#allocation2 + $0x10] sm:$0xff] %vm71, %v70
    %v74 = vld [vmem:[#allocation12 + $0x10] sm:$0xff]
    %v75 = vld [vmem:[#allocation12 + $0x18] sm:$0xff]
    %78 = vrot.lane.b32.xlu0 %v74, 16
    %v79 = vpop.permute.xlu0 %78
    %80 = vrot.lane.b32.xlu0 %v75, 16
    %v81 = vpop.permute.xlu0 %80
    %vm84 = vcmask 261248
    %85 = vst.msk [vmem:[#allocation2 + $0x8] sm:$0xff] %vm84, %v79
    %86 = vst.msk [vmem:[#allocation2 + $0x10] sm:$0xff] %vm84, %v81
    %v87 = vld [vmem:[#allocation12 + $0x20] sm:$0xff]
    %v88 = vld [vmem:[#allocation12 + $0x28] sm:$0xff]
    %91 = vrot.lane.b32.xlu0 %v87, 32
    %v92 = vpop.permute.xlu0 %91
    %93 = vrot.lane.b32.xlu0 %v88, 32
    %v94 = vpop.permute.xlu0 %93
    %vm97 = vcmask 392448
    %98 = vst.msk [vmem:[#allocation2 + $0x8] sm:$0xff] %vm97, %v92
    %99 = vst.msk [vmem:[#allocation2 + $0x10] sm:$0xff] %vm97, %v94
    %v100 = vld [vmem:[#allocation12 + $0x30] sm:$0xff]
    %v101 = vld [vmem:[#allocation12 + $0x38] sm:$0xff]
    %102 = vst.msk [vmem:[#allocation2 + $0x20] sm:$0xff] %vm71, %v100
    %103 = vst.msk [vmem:[#allocation2 + $0x28] sm:$0xff] %vm71, %v101
    %v104 = vld [vmem:[#allocation12 + $0x40] sm:$0xff]
    %v105 = vld [vmem:[#allocation12 + $0x48] sm:$0xff]
    %108 = vrot.lane.b32.xlu0 %v104, 16
    %v109 = vpop.permute.xlu0 %108
    %110 = vrot.lane.b32.xlu0 %v105, 16
    %v111 = vpop.permute.xlu0 %110
    %114 = vst.msk [vmem:[#allocation2 + $0x20] sm:$0xff] %vm84, %v109
    %115 = vst.msk [vmem:[#allocation2 + $0x28] sm:$0xff] %vm84, %v111
    %v116 = vld [vmem:[#allocation12 + $0x50] sm:$0xff]
    %v117 = vld [vmem:[#allocation12 + $0x58] sm:$0xff]
    %120 = vrot.lane.b32.xlu0 %v116, 32
    %v121 = vpop.permute.xlu0 %120
    %122 = vrot.lane.b32.xlu0 %v117, 32
    %v123 = vpop.permute.xlu0 %122
    %126 = vst.msk [vmem:[#allocation2 + $0x20] sm:$0xff] %vm97, %v121
    %127 = vst.msk [vmem:[#allocation2 + $0x28] sm:$0xff] %vm97, %v123
    %v128 = vld [vmem:[#allocation15] sm:$0xff]
    %v129 = vld [vmem:[#allocation15 + $0x8] sm:$0xff]
    %130 = vst.msk [vmem:[#allocation2 + $0x38] sm:$0xff] %vm71, %v128
    %131 = vst.msk [vmem:[#allocation2 + $0x40] sm:$0xff] %vm71, %v129
    %v132 = vld [vmem:[#allocation15 + $0x10] sm:$0xff]
    %v133 = vld [vmem:[#allocation15 + $0x18] sm:$0xff]
    %136 = vrot.lane.b32.xlu0 %v132, 16
    %v137 = vpop.permute.xlu0 %136
    %138 = vrot.lane.b32.xlu0 %v133, 16
    %v139 = vpop.permute.xlu0 %138
    %142 = vst.msk [vmem:[#allocation2 + $0x38] sm:$0xff] %vm84, %v137
    %143 = vst.msk [vmem:[#allocation2 + $0x40] sm:$0xff] %vm84, %v139
    %v144 = vld [vmem:[#allocation15 + $0x20] sm:$0xff]
    %v145 = vld [vmem:[#allocation15 + $0x28] sm:$0xff]
    %148 = vrot.lane.b32.xlu0 %v144, 32
    %v149 = vpop.permute.xlu0 %148
    %150 = vrot.lane.b32.xlu0 %v145, 32
    %v151 = vpop.permute.xlu0 %150
    %154 = vst.msk [vmem:[#allocation2 + $0x38] sm:$0xff] %vm97, %v149
    %155 = vst.msk [vmem:[#allocation2 + $0x40] sm:$0xff] %vm97, %v151
    %v156 = vld [vmem:[#allocation15 + $0x30] sm:$0xff]
    %v157 = vld [vmem:[#allocation15 + $0x38] sm:$0xff]
    %158 = vst.msk [vmem:[#allocation2 + $0x50] sm:$0xff] %vm71, %v156
    %159 = vst.msk [vmem:[#allocation2 + $0x58] sm:$0xff] %vm71, %v157
    %v160 = vld [vmem:[#allocation15 + $0x40] sm:$0xff]
    %v161 = vld [vmem:[#allocation15 + $0x48] sm:$0xff]
    %164 = vrot.lane.b32.xlu0 %v160, 16
    %v165 = vpop.permute.xlu0 %164
    %166 = vrot.lane.b32.xlu0 %v161, 16
    %v167 = vpop.permute.xlu0 %166
    %170 = vst.msk [vmem:[#allocation2 + $0x50] sm:$0xff] %vm84, %v165
    %171 = vst.msk [vmem:[#allocation2 + $0x58] sm:$0xff] %vm84, %v167
    %v172 = vld [vmem:[#allocation15 + $0x50] sm:$0xff]
    %v173 = vld [vmem:[#allocation15 + $0x58] sm:$0xff]
    %176 = vrot.lane.b32.xlu0 %v172, 32
    %v177 = vpop.permute.xlu0 %176
    %178 = vrot.lane.b32.xlu0 %v173, 32
    %v179 = vpop.permute.xlu0 %178
    %182 = vst.msk [vmem:[#allocation2 + $0x50] sm:$0xff] %vm97, %v177
    %183 = vst.msk [vmem:[#allocation2 + $0x58] sm:$0xff] %vm97, %v179
    %v184 = vld [vmem:[#allocation2] sm:$0xff]
    %v185 = vld [vmem:[#allocation2 + $0x8] sm:$0xff]
    %v186 = vld [vmem:[#allocation2 + $0x10] sm:$0xff]
    %v187 = vld [vmem:[#allocation2 + $0x18] sm:$0xff]
    %v188 = vld [vmem:[#allocation2 + $0x20] sm:$0xff]
    %v189 = vld [vmem:[#allocation2 + $0x28] sm:$0xff]
    %v190 = vld [vmem:[#allocation2 + $0x30] sm:$0xff]
    %v191 = vld [vmem:[#allocation2 + $0x38] sm:$0xff]
    %v192 = vld [vmem:[#allocation2 + $0x40] sm:$0xff]
    %v193 = vld [vmem:[#allocation2 + $0x48] sm:$0xff]
    %v194 = vld [vmem:[#allocation2 + $0x50] sm:$0xff]
    %v195 = vld [vmem:[#allocation2 + $0x58] sm:$0xff]
    %v196 = vld [vmem:[#allocation2 + $0x60] sm:$0xff]
    %v197 = vpack.c.bf16 %v185, %v184
    %v198 = vpack.c.bf16 %v187, %v186
    %v199 = vpack.c.bf16 %v189, %v188
    %v200 = vpack.c.bf16 %v191, %v190
    %v201 = vpack.c.bf16 %v193, %v192
    %v202 = vpack.c.bf16 %v195, %v194
    %v203 = vpack.c.bf16 %v196, %v196
    %v204 = vld [vmem:[#allocation17] sm:$0xf]
    %v205 = vld [vmem:[#allocation17 + $0x4] sm:$0xf]
    %v206 = vld [vmem:[#allocation17 + $0x8] sm:$0xf]
    %v207 = vld [vmem:[#allocation17 + $0xc] sm:$0xf]
    %v208 = vld [vmem:[#allocation17 + $0x10] sm:$0xf]
    %v209 = vld [vmem:[#allocation17 + $0x14] sm:$0xf]
    %v210 = vld [vmem:[#allocation17 + $0x18] sm:$0xf]
    %v211 = vld [vmem:[#allocation17 + $0x1c] sm:$0xf]
    %v212 = vld [vmem:[#allocation17 + $0x20] sm:$0xf]
    %v213 = vld [vmem:[#allocation17 + $0x24] sm:$0xf]
    %v214 = vld [vmem:[#allocation17 + $0x28] sm:$0xf]
    %v215 = vld [vmem:[#allocation17 + $0x2c] sm:$0xf]
    %vm216 = vsmask.f32 7424
    %v218 = vshrl.u32 %v197, 16
    %v220 = vshll.u32 %v197, 16
    %v222 = vrot.slane %v220, 1
    %v223 = vor.u32 %v218, %v222
    %v225 = vshll.u32 %v198, 16
    %v227 = vrot.slane %v225, 1
    %v228 = vsel %vm216, %v223, %v227
    %v229 = vshrl.u32 %v198, 16
    %v231 = vor.u32 %v229, %v227
    %v233 = vshll.u32 %v199, 16
    %v235 = vrot.slane %v233, 1
    %v236 = vsel %vm216, %v231, %v235
    %v237 = vshrl.u32 %v199, 16
    %v239 = vor.u32 %v237, %v235
    %v241 = vshll.u32 %v200, 16
    %v243 = vrot.slane %v241, 1
    %v244 = vsel %vm216, %v239, %v243
    %v245 = vshrl.u32 %v200, 16
    %v247 = vor.u32 %v245, %v243
    %v249 = vshll.u32 %v201, 16
    %v251 = vrot.slane %v249, 1
    %v252 = vsel %vm216, %v247, %v251
    %v253 = vshrl.u32 %v201, 16
    %v255 = vor.u32 %v253, %v251
    %v257 = vshll.u32 %v202, 16
    %v259 = vrot.slane %v257, 1
    %v260 = vsel %vm216, %v255, %v259
    %v261 = vshrl.u32 %v202, 16
    %v263 = vor.u32 %v261, %v259
    %v265 = vshll.u32 %v203, 16
    %v267 = vrot.slane %v265, 1
    %v268 = vsel %vm216, %v263, %v267
    %v269 = vshrl.u32 %v203, 16
    %v271 = vor.u32 %v269, %v267
    %v278 = vunpack.c.l.b16 %v210
    %v279 = vunpack.c.l.b16 %v211
    %v280 = vunpack.c.l.b16 %v212
    %v281 = vunpack.c.l.b16 %v213
    %v282 = vunpack.c.l.b16 %v214
    %v283 = vunpack.c.l.b16 %v215
    %v284 = vpack.c.b16 %v279, %v278
    %v285 = vpack.c.b16 %v281, %v280
    %v286 = vpack.c.b16 %v283, %v282
    %v291 = vsel %vm63, %v228, 0
    %v294 = vsel %vm63, %v236, 0
    %v297 = vsel %vm63, %v244, 0
    %v300 = vsel %vm63, %v252, 0
    %v303 = vsel %vm63, %v260, 0
    %v306 = vsel %vm63, %v268, 0
    %v309 = vsel %vm63, %v271, 0
    %311 = vmatprep.subr.bf16.mxu0 0
    %312 = vmatpush1.bf16.msra.mxu0 %v284
    %313 = vmatprep.subr.bf16.mxu0 0
    %314 = vmatpush1.bf16.msra.mxu0 %v285
    %315 = vmatprep.subr.bf16.mxu0 0
    %316 = vmatpush1.bf16.msra.mxu0 %v286
    %317 = vmatprep.subr.bf16.mxu0 0
    %318 = vmatpush1.bf16.msra.mxu0 0
    %319 = vmatprep.subr.bf16.mxu0 0
    %320 = vmatpush1.bf16.msra.mxu0 0
    %321 = vmatprep.subr.bf16.mxu0 0
    %322 = vmatpush1.bf16.msra.mxu0 0
    %323 = vmatprep.subr.bf16.mxu0 0
    %324 = vmatpush1.bf16.msra.mxu0 0
    %325 = vmatprep.subr.bf16.mxu0 0
    %326 = vmatpush1.bf16.msra.mxu0 0
    %327 = vmatprep.subr.bf16.mxu0 0
    %328 = vmatpush1.bf16.msra.mxu0 0
    %329 = vmatprep.subr.bf16.mxu0 0
    %330 = vmatpush1.bf16.msra.mxu0 0
    %331 = vmatprep.subr.bf16.mxu0 0
    %332 = vmatpush1.bf16.msra.mxu0 0
    %333 = vmatprep.subr.bf16.mxu0 0
    %334 = vmatpush1.bf16.msra.mxu0 0
    %335 = vmatprep.subr.bf16.mxu0 0
    %336 = vmatpush1.bf16.msra.mxu0 0
    %337 = vmatprep.subr.bf16.mxu0 0
    %338 = vmatpush1.bf16.msra.mxu0 0
    %339 = vmatprep.subr.bf16.mxu0 0
    %340 = vmatpush1.bf16.msra.mxu0 0
    %341 = vmatprep.subr.bf16.mxu0 0
    %342 = vmatpush1.bf16.msra.mxu0 0
    %343 = vmatprep.mubr.bf16.mxu0 0
    %344 = vmatmul.mubr.bf16.gmra.mrb[0].mxu0 %v291
    %v345 = vpop.f32.mrb[0].mxu0
    %v346 = vadd.f32 0.0, %v345
    %v347 = vpop.f32.mrb[0].mxu0
    %v348 = vpop.f32.mrb[0].mxu0
    %v349 = vadd.f32 0.0, %v348
    %v350 = vpop.f32.mrb[0].mxu0
    %351 = vmatprep.mubr.bf16.mxu0 0
    %352 = vmatmul.mubr.bf16.gmra.mrb[0].mxu0 %v294
    %v353 = vpop.f32.mrb[0].mxu0
    %v354 = vadd.f32 0.0, %v353
    %v355 = vpop.f32.mrb[0].mxu0
    %v356 = vpop.f32.mrb[0].mxu0
    %v357 = vadd.f32 0.0, %v356
    %v358 = vpop.f32.mrb[0].mxu0
    %359 = vmatprep.mubr.bf16.mxu0 0
    %360 = vmatmul.mubr.bf16.gmra.mrb[0].mxu0 %v297
    %v361 = vpop.f32.mrb[0].mxu0
    %v362 = vadd.f32 0.0, %v361
    %v363 = vpop.f32.mrb[0].mxu0
    %v364 = vpop.f32.mrb[0].mxu0
    %v365 = vadd.f32 0.0, %v364
    %v366 = vpop.f32.mrb[0].mxu0
    %367 = vmatprep.mubr.bf16.mxu0 0
    %368 = vmatmul.mubr.bf16.gmra.mrb[0].mxu0 %v300
    %v369 = vpop.f32.mrb[0].mxu0
    %v370 = vadd.f32 0.0, %v369
    %v371 = vpop.f32.mrb[0].mxu0
    %v372 = vpop.f32.mrb[0].mxu0
    %v373 = vadd.f32 0.0, %v372
    %v374 = vpop.f32.mrb[0].mxu0
    %375 = vmatprep.mubr.bf16.mxu0 0
    %376 = vmatmul.mubr.bf16.gmra.mrb[0].mxu0 %v303
    %v377 = vpop.f32.mrb[0].mxu0
    %v378 = vadd.f32 0.0, %v377
    %v379 = vpop.f32.mrb[0].mxu0
    %v380 = vpop.f32.mrb[0].mxu0
    %v381 = vadd.f32 0.0, %v380
    %v382 = vpop.f32.mrb[0].mxu0
    %383 = vmatprep.mubr.bf16.mxu0 0
    %384 = vmatmul.mubr.bf16.gmra.mrb[0].mxu0 %v306
    %v385 = vpop.f32.mrb[0].mxu0
    %v386 = vadd.f32 0.0, %v385
    %v387 = vpop.f32.mrb[0].mxu0
    %v388 = vpop.f32.mrb[0].mxu0
    %v389 = vadd.f32 0.0, %v388
    %v390 = vpop.f32.mrb[0].mxu0
    %391 = vmatprep.mubr.bf16.mxu0 0
    %392 = vmatmul.mubr.bf16.gmra.mrb[0].mxu0 %v309
    %v393 = vpop.f32.mrb[0].mxu0
    %v394 = vadd.f32 0.0, %v393
    %v395 = vpop.f32.mrb[0].mxu0
    %v396 = vpop.f32.mrb[0].mxu0
    %v397 = vpop.f32.mrb[0].mxu0
    %398 = vdwg.mxu0
    %v405 = vunpack.c.l.b16 %v204
    %v406 = vunpack.c.l.b16 %v205
    %v407 = vunpack.c.l.b16 %v206
    %v408 = vunpack.c.l.b16 %v207
    %v409 = vunpack.c.l.b16 %v208
    %v410 = vunpack.c.l.b16 %v209
    %v411 = vpack.c.b16 %v406, %v405
    %v412 = vpack.c.b16 %v408, %v407
    %v413 = vpack.c.b16 %v410, %v409
    %v417 = vsel %vm63, %v197, 0
    %v419 = vsel %vm63, %v198, 0
    %v421 = vsel %vm63, %v199, 0
    %v423 = vsel %vm63, %v200, 0
    %v425 = vsel %vm63, %v201, 0
    %v427 = vsel %vm63, %v202, 0
    %v429 = vsel %vm63, %v203, 0
    %431 = vmatprep.subr.bf16.mxu0 0
    %432 = vmatpush1.bf16.msra.mxu0 %v411
    %433 = vmatprep.subr.bf16.mxu0 0
    %434 = vmatpush1.bf16.msra.mxu0 %v412
    %435 = vmatprep.subr.bf16.mxu0 0
    %436 = vmatpush1.bf16.msra.mxu0 %v413
    %437 = vmatprep.subr.bf16.mxu0 0
    %438 = vmatpush1.bf16.msra.mxu0 0
    %439 = vmatprep.subr.bf16.mxu0 0
    %440 = vmatpush1.bf16.msra.mxu0 0
    %441 = vmatprep.subr.bf16.mxu0 0
    %442 = vmatpush1.bf16.msra.mxu0 0
    %443 = vmatprep.subr.bf16.mxu0 0
    %444 = vmatpush1.bf16.msra.mxu0 0
    %445 = vmatprep.subr.bf16.mxu0 0
    %446 = vmatpush1.bf16.msra.mxu0 0
    %447 = vmatprep.subr.bf16.mxu0 0
    %448 = vmatpush1.bf16.msra.mxu0 0
    %449 = vmatprep.subr.bf16.mxu0 0
    %450 = vmatpush1.bf16.msra.mxu0 0
    %451 = vmatprep.subr.bf16.mxu0 0
    %452 = vmatpush1.bf16.msra.mxu0 0
    %453 = vmatprep.subr.bf16.mxu0 0
    %454 = vmatpush1.bf16.msra.mxu0 0
    %455 = vmatprep.subr.bf16.mxu0 0
    %456 = vmatpush1.bf16.msra.mxu0 0
    %457 = vmatprep.subr.bf16.mxu0 0
    %458 = vmatpush1.bf16.msra.mxu0 0
    %459 = vmatprep.subr.bf16.mxu0 0
    %460 = vmatpush1.bf16.msra.mxu0 0
    %461 = vmatprep.subr.bf16.mxu0 0
    %462 = vmatpush1.bf16.msra.mxu0 0
    %463 = vmatprep.mubr.bf16.mxu0 0
    %464 = vmatmul.mubr.bf16.gmra.mrb[0].mxu0 %v417
    %v465 = vpop.f32.mrb[0].mxu0
    %v466 = vadd.f32 %v346, %v465
    %v467 = vpop.f32.mrb[0].mxu0
    %v468 = vpop.f32.mrb[0].mxu0
    %v469 = vadd.f32 %v349, %v468
    %v470 = vpop.f32.mrb[0].mxu0
    %471 = vmatprep.mubr.bf16.mxu0 0
    %472 = vmatmul.mubr.bf16.gmra.mrb[0].mxu0 %v419
    %v473 = vpop.f32.mrb[0].mxu0
    %v474 = vadd.f32 %v354, %v473
    %v475 = vpop.f32.mrb[0].mxu0
    %v476 = vpop.f32.mrb[0].mxu0
    %v477 = vadd.f32 %v357, %v476
    %v478 = vpop.f32.mrb[0].mxu0
    %479 = vmatprep.mubr.bf16.mxu0 0
    %480 = vmatmul.mubr.bf16.gmra.mrb[0].mxu0 %v421
    %v481 = vpop.f32.mrb[0].mxu0
    %v482 = vadd.f32 %v362, %v481
    %v483 = vpop.f32.mrb[0].mxu0
    %v484 = vpop.f32.mrb[0].mxu0
    %v485 = vadd.f32 %v365, %v484
    %v486 = vpop.f32.mrb[0].mxu0
    %487 = vmatprep.mubr.bf16.mxu0 0
    %488 = vmatmul.mubr.bf16.gmra.mrb[0].mxu0 %v423
    %v489 = vpop.f32.mrb[0].mxu0
    %v490 = vadd.f32 %v370, %v489
    %v491 = vpop.f32.mrb[0].mxu0
    %v492 = vpop.f32.mrb[0].mxu0
    %v493 = vadd.f32 %v373, %v492
    %v494 = vpop.f32.mrb[0].mxu0
    %495 = vmatprep.mubr.bf16.mxu0 0
    %496 = vmatmul.mubr.bf16.gmra.mrb[0].mxu0 %v425
    %v497 = vpop.f32.mrb[0].mxu0
    %v498 = vadd.f32 %v378, %v497
    %v499 = vpop.f32.mrb[0].mxu0
    %v500 = vpop.f32.mrb[0].mxu0
    %v501 = vadd.f32 %v381, %v500
    %v502 = vpop.f32.mrb[0].mxu0
    %503 = vmatprep.mubr.bf16.mxu0 0
    %504 = vmatmul.mubr.bf16.gmra.mrb[0].mxu0 %v427
    %v505 = vpop.f32.mrb[0].mxu0
    %v506 = vadd.f32 %v386, %v505
    %v507 = vpop.f32.mrb[0].mxu0
    %v508 = vpop.f32.mrb[0].mxu0
    %v509 = vadd.f32 %v389, %v508
    %v510 = vpop.f32.mrb[0].mxu0
    %511 = vmatprep.mubr.bf16.mxu0 0
    %512 = vmatmul.mubr.bf16.gmra.mrb[0].mxu0 %v429
    %v513 = vpop.f32.mrb[0].mxu0
    %v514 = vadd.f32 %v394, %v513
    %v515 = vpop.f32.mrb[0].mxu0
    %v516 = vpop.f32.mrb[0].mxu0
    %v517 = vpop.f32.mrb[0].mxu0
    %518 = vdwg.mxu0
    %v519 = vld [vmem:[#allocation17 + $0x30] sm:$0xf]
    %v520 = vld [vmem:[#allocation17 + $0x34] sm:$0xf]
    %v521 = vld [vmem:[#allocation17 + $0x38] sm:$0xf]
    %v522 = vld [vmem:[#allocation17 + $0x3c] sm:$0xf]
    %v523 = vld [vmem:[#allocation17 + $0x40] sm:$0xf]
    %v524 = vld [vmem:[#allocation17 + $0x44] sm:$0xf]
    %vm532 = vcmask 1046528
    %v533 = vrot.slane %v197, 1
    %v534 = vrot.slane %v198, 1
    %v535 = vsel %vm532, %v533, %v534
    %v536 = vrot.slane %v199, 1
    %v537 = vsel %vm532, %v534, %v536
    %v538 = vrot.slane %v200, 1
    %v539 = vsel %vm532, %v536, %v538
    %v540 = vrot.slane %v201, 1
    %v541 = vsel %vm532, %v538, %v540
    %v542 = vrot.slane %v202, 1
    %v543 = vsel %vm532, %v540, %v542
    %v544 = vrot.slane %v203, 1
    %v545 = vsel %vm532, %v542, %v544
    %v552 = vunpack.c.l.b16 %v519
    %v553 = vunpack.c.l.b16 %v520
    %v554 = vunpack.c.l.b16 %v521
    %v555 = vunpack.c.l.b16 %v522
    %v556 = vunpack.c.l.b16 %v523
    %v557 = vunpack.c.l.b16 %v524
    %v558 = vpack.c.b16 %v553, %v552
    %v559 = vpack.c.b16 %v555, %v554
    %v560 = vpack.c.b16 %v557, %v556
    %v565 = vsel %vm63, %v535, 0
    %v568 = vsel %vm63, %v537, 0
    %v571 = vsel %vm63, %v539, 0
    %v574 = vsel %vm63, %v541, 0
    %v577 = vsel %vm63, %v543, 0
    %v580 = vsel %vm63, %v545, 0
    %v583 = vsel %vm63, %v544, 0
    %585 = vmatprep.subr.bf16.mxu0 0
    %586 = vmatpush1.bf16.msra.mxu0 %v558
    %587 = vmatprep.subr.bf16.mxu0 0
    %588 = vmatpush1.bf16.msra.mxu0 %v559
    %589 = vmatprep.subr.bf16.mxu0 0
    %590 = vmatpush1.bf16.msra.mxu0 %v560
    %591 = vmatprep.subr.bf16.mxu0 0
    %592 = vmatpush1.bf16.msra.mxu0 0
    %593 = vmatprep.subr.bf16.mxu0 0
    %594 = vmatpush1.bf16.msra.mxu0 0
    %595 = vmatprep.subr.bf16.mxu0 0
    %596 = vmatpush1.bf16.msra.mxu0 0
    %597 = vmatprep.subr.bf16.mxu0 0
    %598 = vmatpush1.bf16.msra.mxu0 0
    %599 = vmatprep.subr.bf16.mxu0 0
    %600 = vmatpush1.bf16.msra.mxu0 0
    %601 = vmatprep.subr.bf16.mxu0 0
    %602 = vmatpush1.bf16.msra.mxu0 0
    %603 = vmatprep.subr.bf16.mxu0 0
    %604 = vmatpush1.bf16.msra.mxu0 0
    %605 = vmatprep.subr.bf16.mxu0 0
    %606 = vmatpush1.bf16.msra.mxu0 0
    %607 = vmatprep.subr.bf16.mxu0 0
    %608 = vmatpush1.bf16.msra.mxu0 0
    %609 = vmatprep.subr.bf16.mxu0 0
    %610 = vmatpush1.bf16.msra.mxu0 0
    %611 = vmatprep.subr.bf16.mxu0 0
    %612 = vmatpush1.bf16.msra.mxu0 0
    %613 = vmatprep.subr.bf16.mxu0 0
    %614 = vmatpush1.bf16.msra.mxu0 0
    %615 = vmatprep.subr.bf16.mxu0 0
    %616 = vmatpush1.bf16.msra.mxu0 0
    %617 = vmatprep.mubr.bf16.mxu0 0
    %618 = vmatmul.mubr.bf16.gmra.mrb[0].mxu0 %v565
    %v619 = vpop.f32.mrb[0].mxu0
    %v620 = vadd.f32 0.0, %v619
    %v621 = vpop.f32.mrb[0].mxu0
    %v622 = vpop.f32.mrb[0].mxu0
    %v623 = vadd.f32 0.0, %v622
    %v624 = vpop.f32.mrb[0].mxu0
    %625 = vmatprep.mubr.bf16.mxu0 0
    %626 = vmatmul.mubr.bf16.gmra.mrb[0].mxu0 %v568
    %v627 = vpop.f32.mrb[0].mxu0
    %v628 = vadd.f32 0.0, %v627
    %v629 = vpop.f32.mrb[0].mxu0
    %v630 = vpop.f32.mrb[0].mxu0
    %v631 = vadd.f32 0.0, %v630
    %v632 = vpop.f32.mrb[0].mxu0
    %633 = vmatprep.mubr.bf16.mxu0 0
    %634 = vmatmul.mubr.bf16.gmra.mrb[0].mxu0 %v571
    %v635 = vpop.f32.mrb[0].mxu0
    %v636 = vadd.f32 0.0, %v635
    %v637 = vpop.f32.mrb[0].mxu0
    %v638 = vpop.f32.mrb[0].mxu0
    %v639 = vadd.f32 0.0, %v638
    %v640 = vpop.f32.mrb[0].mxu0
    %641 = vmatprep.mubr.bf16.mxu0 0
    %642 = vmatmul.mubr.bf16.gmra.mrb[0].mxu0 %v574
    %v643 = vpop.f32.mrb[0].mxu0
    %v644 = vadd.f32 0.0, %v643
    %v645 = vpop.f32.mrb[0].mxu0
    %v646 = vpop.f32.mrb[0].mxu0
    %v647 = vadd.f32 0.0, %v646
    %v648 = vpop.f32.mrb[0].mxu0
    %649 = vmatprep.mubr.bf16.mxu0 0
    %650 = vmatmul.mubr.bf16.gmra.mrb[0].mxu0 %v577
    %v651 = vpop.f32.mrb[0].mxu0
    %v652 = vadd.f32 0.0, %v651
    %v653 = vpop.f32.mrb[0].mxu0
    %v654 = vpop.f32.mrb[0].mxu0
    %v655 = vadd.f32 0.0, %v654
    %v656 = vpop.f32.mrb[0].mxu0
    %657 = vmatprep.mubr.bf16.mxu0 0
    %658 = vmatmul.mubr.bf16.gmra.mrb[0].mxu0 %v580
    %v659 = vpop.f32.mrb[0].mxu0
    %v660 = vadd.f32 0.0, %v659
    %v661 = vpop.f32.mrb[0].mxu0
    %v662 = vpop.f32.mrb[0].mxu0
    %v663 = vadd.f32 0.0, %v662
    %v664 = vpop.f32.mrb[0].mxu0
    %665 = vmatprep.mubr.bf16.mxu0 0
    %666 = vmatmul.mubr.bf16.gmra.mrb[0].mxu0 %v583
    %v667 = vpop.f32.mrb[0].mxu0
    %v668 = vadd.f32 0.0, %v667
    %v669 = vpop.f32.mrb[0].mxu0
    %v670 = vpop.f32.mrb[0].mxu0
    %v671 = vpop.f32.mrb[0].mxu0
    %672 = vdwg.mxu0
    %v673 = vadd.f32 %v466, %v620
    %v674 = vadd.f32 %v469, %v623
    %v675 = vadd.f32 %v474, %v628
    %v676 = vadd.f32 %v477, %v631
    %v677 = vadd.f32 %v482, %v636
    %v678 = vadd.f32 %v485, %v639
    %v679 = vadd.f32 %v490, %v644
    %v680 = vadd.f32 %v493, %v647
    %v681 = vadd.f32 %v498, %v652
    %v682 = vadd.f32 %v501, %v655
    %v683 = vadd.f32 %v506, %v660
    %v684 = vadd.f32 %v509, %v663
    %v685 = vadd.f32 %v514, %v668
    %v686 = vld [vmem:[%s3] sm:$0x1]
    %v687 = vlaneseq
    %v688 = vshrl.u32 %v687, 7
    %v689 = vsub.s32 0, %v688
    %v690 = vrot.slane %v686, %v689
    %v691 = vadd.f32 %v673, %v690
    %v692 = vadd.f32 %v674, %v690
    %v693 = vadd.f32 %v675, %v690
    %v694 = vadd.f32 %v676, %v690
    %v695 = vadd.f32 %v677, %v690
    %v696 = vadd.f32 %v678, %v690
    %v697 = vadd.f32 %v679, %v690
    %v698 = vadd.f32 %v680, %v690
    %v699 = vadd.f32 %v681, %v690
    %v700 = vadd.f32 %v682, %v690
    %v701 = vadd.f32 %v683, %v690
    %v702 = vadd.f32 %v684, %v690
    %v703 = vadd.f32 %v685, %v690
    %v704 = vmax.f32 %v691, 0.0
    %v705 = vmax.f32 %v692, 0.0
    %v706 = vmax.f32 %v693, 0.0
    %v707 = vmax.f32 %v694, 0.0
    %v708 = vmax.f32 %v695, 0.0
    %v709 = vmax.f32 %v696, 0.0
    %v710 = vmax.f32 %v697, 0.0
    %v711 = vmax.f32 %v698, 0.0
    %v712 = vmax.f32 %v699, 0.0
    %v713 = vmax.f32 %v700, 0.0
    %v714 = vmax.f32 %v701, 0.0
    %v715 = vmax.f32 %v702, 0.0
    %v716 = vmax.f32 %v703, 0.0
    %730 = vrot.lane.b32.xlu0 %v704, 64
    %v731 = vpop.permute.xlu0 %730
    %732 = vrot.lane.b32.xlu0 %v705, 64
    %v733 = vpop.permute.xlu0 %732
    %734 = vrot.lane.b32.xlu0 %v706, 64
    %v735 = vpop.permute.xlu0 %734
    %736 = vrot.lane.b32.xlu0 %v707, 64
    %v737 = vpop.permute.xlu0 %736
    %738 = vrot.lane.b32.xlu0 %v708, 64
    %v739 = vpop.permute.xlu0 %738
    %740 = vrot.lane.b32.xlu0 %v709, 64
    %v741 = vpop.permute.xlu0 %740
    %742 = vrot.lane.b32.xlu0 %v710, 64
    %v743 = vpop.permute.xlu0 %742
    %744 = vrot.lane.b32.xlu0 %v711, 64
    %v745 = vpop.permute.xlu0 %744
    %746 = vrot.lane.b32.xlu0 %v712, 64
    %v747 = vpop.permute.xlu0 %746
    %748 = vrot.lane.b32.xlu0 %v713, 64
    %v749 = vpop.permute.xlu0 %748
    %750 = vrot.lane.b32.xlu0 %v714, 64
    %v751 = vpop.permute.xlu0 %750
    %752 = vrot.lane.b32.xlu0 %v715, 64
    %v753 = vpop.permute.xlu0 %752
    %754 = vrot.lane.b32.xlu0 %v716, 64
    %v755 = vpop.permute.xlu0 %754
    %v769 = vmax.f32 %v704, %v731
    %v770 = vmax.f32 %v705, %v733
    %v771 = vmax.f32 %v706, %v735
    %v772 = vmax.f32 %v707, %v737
    %v773 = vmax.f32 %v708, %v739
    %v774 = vmax.f32 %v709, %v741
    %v775 = vmax.f32 %v710, %v743
    %v776 = vmax.f32 %v711, %v745
    %v777 = vmax.f32 %v712, %v747
    %v778 = vmax.f32 %v713, %v749
    %v779 = vmax.f32 %v714, %v751
    %v780 = vmax.f32 %v715, %v753
    %v781 = vmax.f32 %v716, %v755
    %vm795 = vcmask 1046528
    %v796 = vrot.slane %v769, 1
    %v797 = vrot.slane %v770, 1
    %v798 = vsel %vm795, %v796, %v797
    %v799 = vrot.slane %v771, 1
    %v800 = vsel %vm795, %v797, %v799
    %v801 = vrot.slane %v772, 1
    %v802 = vsel %vm795, %v799, %v801
    %v803 = vrot.slane %v773, 1
    %v804 = vsel %vm795, %v801, %v803
    %v805 = vrot.slane %v774, 1
    %v806 = vsel %vm795, %v803, %v805
    %v807 = vrot.slane %v775, 1
    %v808 = vsel %vm795, %v805, %v807
    %v809 = vrot.slane %v776, 1
    %v810 = vsel %vm795, %v807, %v809
    %v811 = vrot.slane %v777, 1
    %v812 = vsel %vm795, %v809, %v811
    %v813 = vrot.slane %v778, 1
    %v814 = vsel %vm795, %v811, %v813
    %v815 = vrot.slane %v779, 1
    %v816 = vsel %vm795, %v813, %v815
    %v817 = vrot.slane %v780, 1
    %v818 = vsel %vm795, %v815, %v817
    %v819 = vrot.slane %v781, 1
    %v820 = vsel %vm795, %v817, %v819
    %v834 = vmax.f32 %v769, %v798
    %v835 = vmax.f32 %v770, %v800
    %v836 = vmax.f32 %v771, %v802
    %v837 = vmax.f32 %v772, %v804
    %v838 = vmax.f32 %v773, %v806
    %v839 = vmax.f32 %v774, %v808
    %v840 = vmax.f32 %v775, %v810
    %v841 = vmax.f32 %v776, %v812
    %v842 = vmax.f32 %v777, %v814
    %v843 = vmax.f32 %v778, %v816
    %v844 = vmax.f32 %v779, %v818
    %v845 = vmax.f32 %v780, %v820
    %v846 = vmax.f32 %v781, %v819
    %vm847 = vcmask 523264
    %848 = vst.msk [vmem:[#allocation3] sm:$0xff] %vm847, %v834
    %849 = vst.msk [vmem:[#allocation3 + $0x8] sm:$0xff] %vm847, %v835
    %850 = vst.msk [vmem:[#allocation3 + $0x10] sm:$0xff] %vm847, %v836
    %851 = vst.msk [vmem:[#allocation3 + $0x18] sm:$0xff] %vm847, %v837
    %852 = vst.msk [vmem:[#allocation3 + $0x20] sm:$0xff] %vm847, %v838
    %853 = vst.msk [vmem:[#allocation3 + $0x28] sm:$0xff] %vm847, %v839
    %854 = vst.msk [vmem:[#allocation3 + $0x30] sm:$0xff] %vm847, %v840
    %855 = vst.msk [vmem:[#allocation3 + $0x38] sm:$0xff] %vm847, %v841
    %856 = vst.msk [vmem:[#allocation3 + $0x40] sm:$0xff] %vm847, %v842
    %857 = vst.msk [vmem:[#allocation3 + $0x48] sm:$0xff] %vm847, %v843
    %858 = vst.msk [vmem:[#allocation3 + $0x50] sm:$0xff] %vm847, %v844
    %859 = vst.msk [vmem:[#allocation3 + $0x58] sm:$0xff] %vm847, %v845
    %vm860 = vcmask 520192
    %861 = vst.msk [vmem:[#allocation3 + $0x60] sm:$0x1f] %vm860, %v846
    %vm862 = vcmask 518144
    %863 = vst.msk [vmem:[#allocation3 + $0x65] sm:$0x7] %vm862, 0.0
    %864 = vst.msk [vmem:[#allocation4] sm:$0xff] %vm847, 0.0
    %865 = vst.msk [vmem:[#allocation4 + $0x10] sm:$0xff] %vm847, 0.0
    %866 = vst.msk [vmem:[#allocation4 + $0x20] sm:$0xff] %vm847, 0.0
    %867 = vst.msk [vmem:[#allocation4 + $0x30] sm:$0xff] %vm847, 0.0
    %868 = vst.msk [vmem:[#allocation4 + $0x40] sm:$0xff] %vm847, 0.0
    %s869 = scalar_lea.vmem [#allocation3], 7
    %v870 = vld [vmem:[%s869] ss:$2 sm:$0xff]
    %871 = vst.msk [vmem:[#allocation4 + $0x8] sm:$0xff] %vm847, %v870
    %s872 = scalar_lea.vmem [#allocation3], 31
    %v873 = vld [vmem:[%s872] ss:$2 sm:$0xff]
    %874 = vst.msk [vmem:[#allocation4 + $0x18] sm:$0xff] %vm847, %v873
    %s875 = scalar_lea.vmem [#allocation3], 55
    %v876 = vld [vmem:[%s875] ss:$2 sm:$0xff]
    %877 = vst.msk [vmem:[#allocation4 + $0x28] sm:$0xff] %vm847, %v876
    %s878 = scalar_lea.vmem [#allocation3], 79
    %v879 = vld [vmem:[%s878] ss:$2 sm:$0xff]
    %880 = vst.msk [vmem:[#allocation4 + $0x38] sm:$0xff] %vm847, %v879
    %v881 = vld [vmem:[#allocation4] sm:$0xff]
    %v882 = vld [vmem:[#allocation4 + $0x8] sm:$0xff]
    %v883 = vld [vmem:[#allocation4 + $0x10] sm:$0xff]
    %v884 = vld [vmem:[#allocation4 + $0x18] sm:$0xff]
    %v885 = vld [vmem:[#allocation4 + $0x20] sm:$0xff]
    %v886 = vld [vmem:[#allocation4 + $0x28] sm:$0xff]
    %v887 = vld [vmem:[#allocation4 + $0x30] sm:$0xff]
    %v888 = vld [vmem:[#allocation4 + $0x38] sm:$0xff]
    %v889 = vld [vmem:[#allocation4 + $0x40] sm:$0xff]
    %v890 = vpack.c.bf16 %v882, %v881
    %v891 = vpack.c.bf16 %v884, %v883
    %v892 = vpack.c.bf16 %v886, %v885
    %v893 = vpack.c.bf16 %v888, %v887
    %v894 = vpack.c.bf16 %v889, %v889
    %v895 = vld [vmem:[#allocation17 + $0x48] sm:$0xf]
    %v896 = vld [vmem:[#allocation17 + $0x4c] sm:$0xf]
    %v897 = vld [vmem:[#allocation17 + $0x50] sm:$0xf]
    %v898 = vld [vmem:[#allocation17 + $0x54] sm:$0xf]
    %v899 = vld [vmem:[#allocation17 + $0x58] sm:$0xf]
    %v900 = vld [vmem:[#allocation17 + $0x5c] sm:$0xf]
    %v901 = vld [vmem:[#allocation17 + $0x60] sm:$0xf]
    %v902 = vld [vmem:[#allocation17 + $0x64] sm:$0xf]
    %v903 = vld [vmem:[#allocation17 + $0x68] sm:$0xf]
    %v904 = vld [vmem:[#allocation17 + $0x6c] sm:$0xf]
    %v905 = vld [vmem:[#allocation17 + $0x70] sm:$0xf]
    %v906 = vld [vmem:[#allocation17 + $0x74] sm:$0xf]
    %v907 = vld [vmem:[#allocation17 + $0x78] sm:$0xf]
    %v908 = vld [vmem:[#allocation17 + $0x7c] sm:$0xf]
    %v909 = vld [vmem:[#allocation17 + $0x80] sm:$0xf]
    %v910 = vld [vmem:[#allocation17 + $0x84] sm:$0xf]
    %v912 = vshrl.u32 %v890, 16
    %v914 = vshll.u32 %v890, 16
    %v916 = vrot.slane %v914, 1
    %v917 = vor.u32 %v912, %v916
    %v919 = vshll.u32 %v891, 16
    %v921 = vrot.slane %v919, 1
    %v922 = vsel %vm216, %v917, %v921
    %v923 = vshrl.u32 %v891, 16
    %v925 = vor.u32 %v923, %v921
    %v927 = vshll.u32 %v892, 16
    %v929 = vrot.slane %v927, 1
    %v930 = vsel %vm216, %v925, %v929
    %v931 = vshrl.u32 %v892, 16
    %v933 = vor.u32 %v931, %v929
    %v935 = vshll.u32 %v893, 16
    %v937 = vrot.slane %v935, 1
    %v938 = vsel %vm216, %v933, %v937
    %v939 = vshrl.u32 %v893, 16
    %v941 = vor.u32 %v939, %v937
    %v943 = vshll.u32 %v894, 16
    %v945 = vrot.slane %v943, 1
    %v946 = vsel %vm216, %v941, %v945
    %v947 = vshrl.u32 %v894, 16
    %v949 = vor.u32 %v947, %v945
    %v958 = vunpack.c.l.b16 %v903
    %v959 = vunpack.c.l.b16 %v904
    %v960 = vunpack.c.l.b16 %v905
    %v961 = vunpack.c.l.b16 %v906
    %v962 = vunpack.c.l.b16 %v907
    %v963 = vunpack.c.l.b16 %v908
    %v964 = vunpack.c.l.b16 %v909
    %v965 = vunpack.c.l.b16 %v910
    %v966 = vpack.c.b16 %v959, %v958
    %v967 = vpack.c.b16 %v961, %v960
    %v968 = vpack.c.b16 %v963, %v962
    %v969 = vpack.c.b16 %v965, %v964
    %v975 = vsel %vm847, %v922, 0
    %v978 = vsel %vm847, %v930, 0
    %v981 = vsel %vm847, %v938, 0
    %v984 = vsel %vm847, %v946, 0
    %v987 = vsel %vm847, %v949, 0
    %989 = vmatprep.subr.bf16.mxu0 0
    %990 = vmatpush1.bf16.msra.mxu0 %v966
    %991 = vmatprep.subr.bf16.mxu0 0
    %992 = vmatpush1.bf16.msra.mxu0 %v967
    %993 = vmatprep.subr.bf16.mxu0 0
    %994 = vmatpush1.bf16.msra.mxu0 %v968
    %995 = vmatprep.subr.bf16.mxu0 0
    %996 = vmatpush1.bf16.msra.mxu0 %v969
    %997 = vmatprep.subr.bf16.mxu0 0
    %998 = vmatpush1.bf16.msra.mxu0 0
    %999 = vmatprep.subr.bf16.mxu0 0
    %1000 = vmatpush1.bf16.msra.mxu0 0
    %1001 = vmatprep.subr.bf16.mxu0 0
    %1002 = vmatpush1.bf16.msra.mxu0 0
    %1003 = vmatprep.subr.bf16.mxu0 0
    %1004 = vmatpush1.bf16.msra.mxu0 0
    %1005 = vmatprep.subr.bf16.mxu0 0
    %1006 = vmatpush1.bf16.msra.mxu0 0
    %1007 = vmatprep.subr.bf16.mxu0 0
    %1008 = vmatpush1.bf16.msra.mxu0 0
    %1009 = vmatprep.subr.bf16.mxu0 0
    %1010 = vmatpush1.bf16.msra.mxu0 0
    %1011 = vmatprep.subr.bf16.mxu0 0
    %1012 = vmatpush1.bf16.msra.mxu0 0
    %1013 = vmatprep.subr.bf16.mxu0 0
    %1014 = vmatpush1.bf16.msra.mxu0 0
    %1015 = vmatprep.subr.bf16.mxu0 0
    %1016 = vmatpush1.bf16.msra.mxu0 0
    %1017 = vmatprep.subr.bf16.mxu0 0
    %1018 = vmatpush1.bf16.msra.mxu0 0
    %1019 = vmatprep.subr.bf16.mxu0 0
    %1020 = vmatpush1.bf16.msra.mxu0 0
    %1021 = vmatprep.mubr.bf16.mxu0 0
    %1022 = vmatmul.mubr.bf16.gmra.mrb[0].mxu0 %v975
    %v1023 = vpop.f32.mrb[0].mxu0
    %v1024 = vadd.f32 0.0, %v1023
    %v1025 = vpop.f32.mrb[0].mxu0
    %v1026 = vpop.f32.mrb[0].mxu0
    %v1027 = vadd.f32 0.0, %v1026
    %v1028 = vpop.f32.mrb[0].mxu0
    %1029 = vmatprep.mubr.bf16.mxu0 0
    %1030 = vmatmul.mubr.bf16.gmra.mrb[0].mxu0 %v978
    %v1031 = vpop.f32.mrb[0].mxu0
    %v1032 = vadd.f32 0.0, %v1031
    %v1033 = vpop.f32.mrb[0].mxu0
    %v1034 = vpop.f32.mrb[0].mxu0
    %v1035 = vadd.f32 0.0, %v1034
    %v1036 = vpop.f32.mrb[0].mxu0
    %1037 = vmatprep.mubr.bf16.mxu0 0
    %1038 = vmatmul.mubr.bf16.gmra.mrb[0].mxu0 %v981
    %v1039 = vpop.f32.mrb[0].mxu0
    %v1040 = vadd.f32 0.0, %v1039
    %v1041 = vpop.f32.mrb[0].mxu0
    %v1042 = vpop.f32.mrb[0].mxu0
    %v1043 = vadd.f32 0.0, %v1042
    %v1044 = vpop.f32.mrb[0].mxu0
    %1045 = vmatprep.mubr.bf16.mxu0 0
    %1046 = vmatmul.mubr.bf16.gmra.mrb[0].mxu0 %v984
    %v1047 = vpop.f32.mrb[0].mxu0
    %v1048 = vadd.f32 0.0, %v1047
    %v1049 = vpop.f32.mrb[0].mxu0
    %v1050 = vpop.f32.mrb[0].mxu0
    %v1051 = vadd.f32 0.0, %v1050
    %v1052 = vpop.f32.mrb[0].mxu0
    %1053 = vmatprep.mubr.bf16.mxu0 0
    %1054 = vmatmul.mubr.bf16.gmra.mrb[0].mxu0 %v987
    %v1055 = vpop.f32.mrb[0].mxu0
    %v1056 = vpop.f32.mrb[0].mxu0
    %v1057 = vpop.f32.mrb[0].mxu0
    %v1058 = vpop.f32.mrb[0].mxu0
    %1059 = vdwg.mxu0
    %v1068 = vunpack.c.l.b16 %v895
    %v1069 = vunpack.c.l.b16 %v896
    %v1070 = vunpack.c.l.b16 %v897
    %v1071 = vunpack.c.l.b16 %v898
    %v1072 = vunpack.c.l.b16 %v899
    %v1073 = vunpack.c.l.b16 %v900
    %v1074 = vunpack.c.l.b16 %v901
    %v1075 = vunpack.c.l.b16 %v902
    %v1076 = vpack.c.b16 %v1069, %v1068
    %v1077 = vpack.c.b16 %v1071, %v1070
    %v1078 = vpack.c.b16 %v1073, %v1072
    %v1079 = vpack.c.b16 %v1075, %v1074
    %v1084 = vsel %vm847, %v890, 0
    %v1086 = vsel %vm847, %v891, 0
    %v1088 = vsel %vm847, %v892, 0
    %v1090 = vsel %vm847, %v893, 0
    %v1092 = vsel %vm847, %v894, 0
    %1094 = vmatprep.subr.bf16.mxu0 0
    %1095 = vmatpush1.bf16.msra.mxu0 %v1076
    %1096 = vmatprep.subr.bf16.mxu0 0
    %1097 = vmatpush1.bf16.msra.mxu0 %v1077
    %1098 = vmatprep.subr.bf16.mxu0 0
    %1099 = vmatpush1.bf16.msra.mxu0 %v1078
    %1100 = vmatprep.subr.bf16.mxu0 0
    %1101 = vmatpush1.bf16.msra.mxu0 %v1079
    %1102 = vmatprep.subr.bf16.mxu0 0
    %1103 = vmatpush1.bf16.msra.mxu0 0
    %1104 = vmatprep.subr.bf16.mxu0 0
    %1105 = vmatpush1.bf16.msra.mxu0 0
    %1106 = vmatprep.subr.bf16.mxu0 0
    %1107 = vmatpush1.bf16.msra.mxu0 0
    %1108 = vmatprep.subr.bf16.mxu0 0
    %1109 = vmatpush1.bf16.msra.mxu0 0
    %1110 = vmatprep.subr.bf16.mxu0 0
    %1111 = vmatpush1.bf16.msra.mxu0 0
    %1112 = vmatprep.subr.bf16.mxu0 0
    %1113 = vmatpush1.bf16.msra.mxu0 0
    %1114 = vmatprep.subr.bf16.mxu0 0
    %1115 = vmatpush1.bf16.msra.mxu0 0
    %1116 = vmatprep.subr.bf16.mxu0 0
    %1117 = vmatpush1.bf16.msra.mxu0 0
    %1118 = vmatprep.subr.bf16.mxu0 0
    %1119 = vmatpush1.bf16.msra.mxu0 0
    %1120 = vmatprep.subr.bf16.mxu0 0
    %1121 = vmatpush1.bf16.msra.mxu0 0
    %1122 = vmatprep.subr.bf16.mxu0 0
    %1123 = vmatpush1.bf16.msra.mxu0 0
    %1124 = vmatprep.subr.bf16.mxu0 0
    %1125 = vmatpush1.bf16.msra.mxu0 0
    %1126 = vmatprep.mubr.bf16.mxu0 0
    %1127 = vmatmul.mubr.bf16.gmra.mrb[0].mxu0 %v1084
    %v1128 = vpop.f32.mrb[0].mxu0
    %v1129 = vadd.f32 %v1024, %v1128
    %v1130 = vpop.f32.mrb[0].mxu0
    %v1131 = vpop.f32.mrb[0].mxu0
    %v1132 = vadd.f32 %v1027, %v1131
    %v1133 = vpop.f32.mrb[0].mxu0
    %1134 = vmatprep.mubr.bf16.mxu0 0
    %1135 = vmatmul.mubr.bf16.gmra.mrb[0].mxu0 %v1086
    %v1136 = vpop.f32.mrb[0].mxu0
    %v1137 = vadd.f32 %v1032, %v1136
    %v1138 = vpop.f32.mrb[0].mxu0
    %v1139 = vpop.f32.mrb[0].mxu0
    %v1140 = vadd.f32 %v1035, %v1139
    %v1141 = vpop.f32.mrb[0].mxu0
    %1142 = vmatprep.mubr.bf16.mxu0 0
    %1143 = vmatmul.mubr.bf16.gmra.mrb[0].mxu0 %v1088
    %v1144 = vpop.f32.mrb[0].mxu0
    %v1145 = vadd.f32 %v1040, %v1144
    %v1146 = vpop.f32.mrb[0].mxu0
    %v1147 = vpop.f32.mrb[0].mxu0
    %v1148 = vadd.f32 %v1043, %v1147
    %v1149 = vpop.f32.mrb[0].mxu0
    %1150 = vmatprep.mubr.bf16.mxu0 0
    %1151 = vmatmul.mubr.bf16.gmra.mrb[0].mxu0 %v1090
    %v1152 = vpop.f32.mrb[0].mxu0
    %v1153 = vadd.f32 %v1048, %v1152
    %v1154 = vpop.f32.mrb[0].mxu0
    %v1155 = vpop.f32.mrb[0].mxu0
    %v1156 = vadd.f32 %v1051, %v1155
    %v1157 = vpop.f32.mrb[0].mxu0
    %1158 = vmatprep.mubr.bf16.mxu0 0
    %1159 = vmatmul.mubr.bf16.gmra.mrb[0].mxu0 %v1092
    %v1160 = vpop.f32.mrb[0].mxu0
    %v1161 = vpop.f32.mrb[0].mxu0
    %v1162 = vpop.f32.mrb[0].mxu0
    %v1163 = vpop.f32.mrb[0].mxu0
    %1164 = vdwg.mxu0
    %v1165 = vld [vmem:[#allocation17 + $0x88] sm:$0xf]
    %v1166 = vld [vmem:[#allocation17 + $0x8c] sm:$0xf]
    %v1167 = vld [vmem:[#allocation17 + $0x90] sm:$0xf]
    %v1168 = vld [vmem:[#allocation17 + $0x94] sm:$0xf]
    %v1169 = vld [vmem:[#allocation17 + $0x98] sm:$0xf]
    %v1170 = vld [vmem:[#allocation17 + $0x9c] sm:$0xf]
    %v1171 = vld [vmem:[#allocation17 + $0xa0] sm:$0xf]
    %v1172 = vld [vmem:[#allocation17 + $0xa4] sm:$0xf]
    %v1178 = vrot.slane %v890, 1
    %v1179 = vrot.slane %v891, 1
    %v1180 = vsel %vm532, %v1178, %v1179
    %v1181 = vrot.slane %v892, 1
    %v1182 = vsel %vm532, %v1179, %v1181
    %v1183 = vrot.slane %v893, 1
    %v1184 = vsel %vm532, %v1181, %v1183
    %v1185 = vrot.slane %v894, 1
    %v1186 = vsel %vm532, %v1183, %v1185
    %v1195 = vunpack.c.l.b16 %v1165
    %v1196 = vunpack.c.l.b16 %v1166
    %v1197 = vunpack.c.l.b16 %v1167
    %v1198 = vunpack.c.l.b16 %v1168
    %v1199 = vunpack.c.l.b16 %v1169
    %v1200 = vunpack.c.l.b16 %v1170
    %v1201 = vunpack.c.l.b16 %v1171
    %v1202 = vunpack.c.l.b16 %v1172
    %v1203 = vpack.c.b16 %v1196, %v1195
    %v1204 = vpack.c.b16 %v1198, %v1197
    %v1205 = vpack.c.b16 %v1200, %v1199
    %v1206 = vpack.c.b16 %v1202, %v1201
    %v1212 = vsel %vm847, %v1180, 0
    %v1215 = vsel %vm847, %v1182, 0
    %v1218 = vsel %vm847, %v1184, 0
    %v1221 = vsel %vm847, %v1186, 0
    %v1224 = vsel %vm847, %v1185, 0
    %1226 = vmatprep.subr.bf16.mxu0 0
    %1227 = vmatpush1.bf16.msra.mxu0 %v1203
    %1228 = vmatprep.subr.bf16.mxu0 0
    %1229 = vmatpush1.bf16.msra.mxu0 %v1204
    %1230 = vmatprep.subr.bf16.mxu0 0
    %1231 = vmatpush1.bf16.msra.mxu0 %v1205
    %1232 = vmatprep.subr.bf16.mxu0 0
    %1233 = vmatpush1.bf16.msra.mxu0 %v1206
    %1234 = vmatprep.subr.bf16.mxu0 0
    %1235 = vmatpush1.bf16.msra.mxu0 0
    %1236 = vmatprep.subr.bf16.mxu0 0
    %1237 = vmatpush1.bf16.msra.mxu0 0
    %1238 = vmatprep.subr.bf16.mxu0 0
    %1239 = vmatpush1.bf16.msra.mxu0 0
    %1240 = vmatprep.subr.bf16.mxu0 0
    %1241 = vmatpush1.bf16.msra.mxu0 0
    %1242 = vmatprep.subr.bf16.mxu0 0
    %1243 = vmatpush1.bf16.msra.mxu0 0
    %1244 = vmatprep.subr.bf16.mxu0 0
    %1245 = vmatpush1.bf16.msra.mxu0 0
    %1246 = vmatprep.subr.bf16.mxu0 0
    %1247 = vmatpush1.bf16.msra.mxu0 0
    %1248 = vmatprep.subr.bf16.mxu0 0
    %1249 = vmatpush1.bf16.msra.mxu0 0
    %1250 = vmatprep.subr.bf16.mxu0 0
    %1251 = vmatpush1.bf16.msra.mxu0 0
    %1252 = vmatprep.subr.bf16.mxu0 0
    %1253 = vmatpush1.bf16.msra.mxu0 0
    %1254 = vmatprep.subr.bf16.mxu0 0
    %1255 = vmatpush1.bf16.msra.mxu0 0
    %1256 = vmatprep.subr.bf16.mxu0 0
    %1257 = vmatpush1.bf16.msra.mxu0 0
    %1258 = vmatprep.mubr.bf16.mxu0 0
    %1259 = vmatmul.mubr.bf16.gmra.mrb[0].mxu0 %v1212
    %v1260 = vpop.f32.mrb[0].mxu0
    %v1261 = vadd.f32 0.0, %v1260
    %v1262 = vpop.f32.mrb[0].mxu0
    %v1263 = vpop.f32.mrb[0].mxu0
    %v1264 = vadd.f32 0.0, %v1263
    %v1265 = vpop.f32.mrb[0].mxu0
    %1266 = vmatprep.mubr.bf16.mxu0 0
    %1267 = vmatmul.mubr.bf16.gmra.mrb[0].mxu0 %v1215
    %v1268 = vpop.f32.mrb[0].mxu0
    %v1269 = vadd.f32 0.0, %v1268
    %v1270 = vpop.f32.mrb[0].mxu0
    %v1271 = vpop.f32.mrb[0].mxu0
    %v1272 = vadd.f32 0.0, %v1271
    %v1273 = vpop.f32.mrb[0].mxu0
    %1274 = vmatprep.mubr.bf16.mxu0 0
    %1275 = vmatmul.mubr.bf16.gmra.mrb[0].mxu0 %v1218
    %v1276 = vpop.f32.mrb[0].mxu0
    %v1277 = vadd.f32 0.0, %v1276
    %v1278 = vpop.f32.mrb[0].mxu0
    %v1279 = vpop.f32.mrb[0].mxu0
    %v1280 = vadd.f32 0.0, %v1279
    %v1281 = vpop.f32.mrb[0].mxu0
    %1282 = vmatprep.mubr.bf16.mxu0 0
    %1283 = vmatmul.mubr.bf16.gmra.mrb[0].mxu0 %v1221
    %v1284 = vpop.f32.mrb[0].mxu0
    %v1285 = vadd.f32 0.0, %v1284
    %v1286 = vpop.f32.mrb[0].mxu0
    %v1287 = vpop.f32.mrb[0].mxu0
    %v1288 = vadd.f32 0.0, %v1287
    %v1289 = vpop.f32.mrb[0].mxu0
    %1290 = vmatprep.mubr.bf16.mxu0 0
    %1291 = vmatmul.mubr.bf16.gmra.mrb[0].mxu0 %v1224
    %v1292 = vpop.f32.mrb[0].mxu0
    %v1293 = vpop.f32.mrb[0].mxu0
    %v1294 = vpop.f32.mrb[0].mxu0
    %v1295 = vpop.f32.mrb[0].mxu0
    %1296 = vdwg.mxu0
    %v1297 = vadd.f32 %v1129, %v1261
    %v1298 = vadd.f32 %v1132, %v1264
    %v1299 = vadd.f32 %v1137, %v1269
    %v1300 = vadd.f32 %v1140, %v1272
    %v1301 = vadd.f32 %v1145, %v1277
    %v1302 = vadd.f32 %v1148, %v1280
    %v1303 = vadd.f32 %v1153, %v1285
    %v1304 = vadd.f32 %v1156, %v1288
    %v1305 = vld [vmem:[%s3 + $0x1] sm:$0x1]
    %v1306 = vlaneseq
    %v1307 = vshrl.u32 %v1306, 7
    %v1308 = vsub.s32 0, %v1307
    %v1309 = vrot.slane %v1305, %v1308
    %v1310 = vadd.f32 %v1297, %v1309
    %v1311 = vadd.f32 %v1298, %v1309
    %v1312 = vadd.f32 %v1299, %v1309
    %v1313 = vadd.f32 %v1300, %v1309
    %v1314 = vadd.f32 %v1301, %v1309
    %v1315 = vadd.f32 %v1302, %v1309
    %v1316 = vadd.f32 %v1303, %v1309
    %v1317 = vadd.f32 %v1304, %v1309
    %v1318 = vmax.f32 %v1310, 0.0
    %v1319 = vmax.f32 %v1311, 0.0
    %v1320 = vmax.f32 %v1312, 0.0
    %v1321 = vmax.f32 %v1313, 0.0
    %v1322 = vmax.f32 %v1314, 0.0
    %v1323 = vmax.f32 %v1315, 0.0
    %v1324 = vmax.f32 %v1316, 0.0
    %v1325 = vmax.f32 %v1317, 0.0
    %1326 = vst.msk [vmem:[#allocation5] sm:$0xff] %vm847, 0.0
    %1327 = vst.msk [vmem:[#allocation5 + $0x10] sm:$0xff] %vm847, 0.0
    %1328 = vst.msk [vmem:[#allocation5 + $0x20] sm:$0xff] %vm847, 0.0
    %1329 = vst.msk [vmem:[#allocation5 + $0x30] sm:$0xff] %vm847, 0.0
    %1330 = vst.msk [vmem:[#allocation5 + $0x40] sm:$0xff] %vm847, 0.0
    %vm1331 = vcmask 523271
    %1332 = vst.msk [vmem:[#allocation5 + $0x1] sm:$0x80] %vm1331, %v1318
    %vm1333 = vcmask 522240
    %1334 = vst.msk [vmem:[#allocation5 + $0x9] sm:$0x7f] %vm1333, %v1319
    %1335 = vst.msk [vmem:[#allocation5 + $0x11] sm:$0x80] %vm1331, %v1320
    %1336 = vst.msk [vmem:[#allocation5 + $0x19] sm:$0x7f] %vm1333, %v1321
    %1337 = vst.msk [vmem:[#allocation5 + $0x21] sm:$0x80] %vm1331, %v1322
    %1338 = vst.msk [vmem:[#allocation5 + $0x29] sm:$0x7f] %vm1333, %v1323
    %1339 = vst.msk [vmem:[#allocation5 + $0x31] sm:$0x80] %vm1331, %v1324
    %1340 = vst.msk [vmem:[#allocation5 + $0x39] sm:$0x7f] %vm1333, %v1325
    %v1341 = vld [vmem:[#allocation5] sm:$0xff]
    %v1342 = vld [vmem:[#allocation5 + $0x8] sm:$0xff]
    %v1343 = vld [vmem:[#allocation5 + $0x10] sm:$0xff]
    %v1344 = vld [vmem:[#allocation5 + $0x18] sm:$0xff]
    %v1345 = vld [vmem:[#allocation5 + $0x20] sm:$0xff]
    %v1346 = vld [vmem:[#allocation5 + $0x28] sm:$0xff]
    %v1347 = vld [vmem:[#allocation5 + $0x30] sm:$0xff]
    %v1348 = vld [vmem:[#allocation5 + $0x38] sm:$0xff]
    %v1349 = vld [vmem:[#allocation5 + $0x40] sm:$0xff]
    %v1350 = vpack.c.bf16 %v1342, %v1341
    %v1351 = vpack.c.bf16 %v1344, %v1343
    %v1352 = vpack.c.bf16 %v1346, %v1345
    %v1353 = vpack.c.bf16 %v1348, %v1347
    %v1354 = vpack.c.bf16 %v1349, %v1349
    %v1355 = vld [vmem:[#allocation17 + $0xa8] sm:$0xf]
    %v1356 = vld [vmem:[#allocation17 + $0xac] sm:$0xf]
    %v1357 = vld [vmem:[#allocation17 + $0xb0] sm:$0xf]
    %v1358 = vld [vmem:[#allocation17 + $0xb4] sm:$0xf]
    %v1359 = vld [vmem:[#allocation17 + $0xb8] sm:$0xf]
    %v1360 = vld [vmem:[#allocation17 + $0xbc] sm:$0xf]
    %v1361 = vld [vmem:[#allocation17 + $0xc0] sm:$0xf]
    %v1362 = vld [vmem:[#allocation17 + $0xc4] sm:$0xf]
    %v1363 = vld [vmem:[#allocation17 + $0xc8] sm:$0xf]
    %v1364 = vld [vmem:[#allocation17 + $0xcc] sm:$0xf]
    %v1365 = vld [vmem:[#allocation17 + $0xd0] sm:$0xf]
    %v1366 = vld [vmem:[#allocation17 + $0xd4] sm:$0xf]
    %v1367 = vld [vmem:[#allocation17 + $0xd8] sm:$0xf]
    %v1368 = vld [vmem:[#allocation17 + $0xdc] sm:$0xf]
    %v1369 = vld [vmem:[#allocation17 + $0xe0] sm:$0xf]
    %v1370 = vld [vmem:[#allocation17 + $0xe4] sm:$0xf]
    %v1372 = vshrl.u32 %v1350, 16
    %v1374 = vshll.u32 %v1350, 16
    %v1376 = vrot.slane %v1374, 1
    %v1377 = vor.u32 %v1372, %v1376
    %v1379 = vshll.u32 %v1351, 16
    %v1381 = vrot.slane %v1379, 1
    %v1382 = vsel %vm216, %v1377, %v1381
    %v1383 = vshrl.u32 %v1351, 16
    %v1385 = vor.u32 %v1383, %v1381
    %v1387 = vshll.u32 %v1352, 16
    %v1389 = vrot.slane %v1387, 1
    %v1390 = vsel %vm216, %v1385, %v1389
    %v1391 = vshrl.u32 %v1352, 16
    %v1393 = vor.u32 %v1391, %v1389
    %v1395 = vshll.u32 %v1353, 16
    %v1397 = vrot.slane %v1395, 1
    %v1398 = vsel %vm216, %v1393, %v1397
    %v1399 = vshrl.u32 %v1353, 16
    %v1401 = vor.u32 %v1399, %v1397
    %v1403 = vshll.u32 %v1354, 16
    %v1405 = vrot.slane %v1403, 1
    %v1406 = vsel %vm216, %v1401, %v1405
    %v1407 = vshrl.u32 %v1354, 16
    %v1409 = vor.u32 %v1407, %v1405
    %v1418 = vunpack.c.l.b16 %v1363
    %v1419 = vunpack.c.l.b16 %v1364
    %v1420 = vunpack.c.l.b16 %v1365
    %v1421 = vunpack.c.l.b16 %v1366
    %v1422 = vunpack.c.l.b16 %v1367
    %v1423 = vunpack.c.l.b16 %v1368
    %v1424 = vunpack.c.l.b16 %v1369
    %v1425 = vunpack.c.l.b16 %v1370
    %v1426 = vpack.c.b16 %v1419, %v1418
    %v1427 = vpack.c.b16 %v1421, %v1420
    %v1428 = vpack.c.b16 %v1423, %v1422
    %v1429 = vpack.c.b16 %v1425, %v1424
    %v1435 = vsel %vm847, %v1382, 0
    %v1438 = vsel %vm847, %v1390, 0
    %v1441 = vsel %vm847, %v1398, 0
    %v1444 = vsel %vm847, %v1406, 0
    %v1447 = vsel %vm847, %v1409, 0
    %1449 = vmatprep.subr.bf16.mxu0 0
    %1450 = vmatpush1.bf16.msra.mxu0 %v1426
    %1451 = vmatprep.subr.bf16.mxu0 0
    %1452 = vmatpush1.bf16.msra.mxu0 %v1427
    %1453 = vmatprep.subr.bf16.mxu0 0
    %1454 = vmatpush1.bf16.msra.mxu0 %v1428
    %1455 = vmatprep.subr.bf16.mxu0 0
    %1456 = vmatpush1.bf16.msra.mxu0 %v1429
    %1457 = vmatprep.subr.bf16.mxu0 0
    %1458 = vmatpush1.bf16.msra.mxu0 0
    %1459 = vmatprep.subr.bf16.mxu0 0
    %1460 = vmatpush1.bf16.msra.mxu0 0
    %1461 = vmatprep.subr.bf16.mxu0 0
    %1462 = vmatpush1.bf16.msra.mxu0 0
    %1463 = vmatprep.subr.bf16.mxu0 0
    %1464 = vmatpush1.bf16.msra.mxu0 0
    %1465 = vmatprep.subr.bf16.mxu0 0
    %1466 = vmatpush1.bf16.msra.mxu0 0
    %1467 = vmatprep.subr.bf16.mxu0 0
    %1468 = vmatpush1.bf16.msra.mxu0 0
    %1469 = vmatprep.subr.bf16.mxu0 0
    %1470 = vmatpush1.bf16.msra.mxu0 0
    %1471 = vmatprep.subr.bf16.mxu0 0
    %1472 = vmatpush1.bf16.msra.mxu0 0
    %1473 = vmatprep.subr.bf16.mxu0 0
    %1474 = vmatpush1.bf16.msra.mxu0 0
    %1475 = vmatprep.subr.bf16.mxu0 0
    %1476 = vmatpush1.bf16.msra.mxu0 0
    %1477 = vmatprep.subr.bf16.mxu0 0
    %1478 = vmatpush1.bf16.msra.mxu0 0
    %1479 = vmatprep.subr.bf16.mxu0 0
    %1480 = vmatpush1.bf16.msra.mxu0 0
    %1481 = vmatprep.mubr.bf16.mxu0 0
    %1482 = vmatmul.mubr.bf16.gmra.mrb[0].mxu0 %v1435
    %v1483 = vpop.f32.mrb[0].mxu0
    %v1484 = vadd.f32 0.0, %v1483
    %v1485 = vpop.f32.mrb[0].mxu0
    %v1486 = vpop.f32.mrb[0].mxu0
    %v1487 = vadd.f32 0.0, %v1486
    %v1488 = vpop.f32.mrb[0].mxu0
    %1489 = vmatprep.mubr.bf16.mxu0 0
    %1490 = vmatmul.mubr.bf16.gmra.mrb[0].mxu0 %v1438
    %v1491 = vpop.f32.mrb[0].mxu0
    %v1492 = vadd.f32 0.0, %v1491
    %v1493 = vpop.f32.mrb[0].mxu0
    %v1494 = vpop.f32.mrb[0].mxu0
    %v1495 = vadd.f32 0.0, %v1494
    %v1496 = vpop.f32.mrb[0].mxu0
    %1497 = vmatprep.mubr.bf16.mxu0 0
    %1498 = vmatmul.mubr.bf16.gmra.mrb[0].mxu0 %v1441
    %v1499 = vpop.f32.mrb[0].mxu0
    %v1500 = vadd.f32 0.0, %v1499
    %v1501 = vpop.f32.mrb[0].mxu0
    %v1502 = vpop.f32.mrb[0].mxu0
    %v1503 = vadd.f32 0.0, %v1502
    %v1504 = vpop.f32.mrb[0].mxu0
    %1505 = vmatprep.mubr.bf16.mxu0 0
    %1506 = vmatmul.mubr.bf16.gmra.mrb[0].mxu0 %v1444
    %v1507 = vpop.f32.mrb[0].mxu0
    %v1508 = vadd.f32 0.0, %v1507
    %v1509 = vpop.f32.mrb[0].mxu0
    %v1510 = vpop.f32.mrb[0].mxu0
    %v1511 = vadd.f32 0.0, %v1510
    %v1512 = vpop.f32.mrb[0].mxu0
    %1513 = vmatprep.mubr.bf16.mxu0 0
    %1514 = vmatmul.mubr.bf16.gmra.mrb[0].mxu0 %v1447
    %v1515 = vpop.f32.mrb[0].mxu0
    %v1516 = vpop.f32.mrb[0].mxu0
    %v1517 = vpop.f32.mrb[0].mxu0
    %v1518 = vpop.f32.mrb[0].mxu0
    %1519 = vdwg.mxu0
    %v1528 = vunpack.c.l.b16 %v1355
    %v1529 = vunpack.c.l.b16 %v1356
    %v1530 = vunpack.c.l.b16 %v1357
    %v1531 = vunpack.c.l.b16 %v1358
    %v1532 = vunpack.c.l.b16 %v1359
    %v1533 = vunpack.c.l.b16 %v1360
    %v1534 = vunpack.c.l.b16 %v1361
    %v1535 = vunpack.c.l.b16 %v1362
    %v1536 = vpack.c.b16 %v1529, %v1528
    %v1537 = vpack.c.b16 %v1531, %v1530
    %v1538 = vpack.c.b16 %v1533, %v1532
    %v1539 = vpack.c.b16 %v1535, %v1534
    %v1544 = vsel %vm847, %v1350, 0
    %v1546 = vsel %vm847, %v1351, 0
    %v1548 = vsel %vm847, %v1352, 0
    %v1550 = vsel %vm847, %v1353, 0
    %v1552 = vsel %vm847, %v1354, 0
    %1554 = vmatprep.subr.bf16.mxu0 0
    %1555 = vmatpush1.bf16.msra.mxu0 %v1536
    %1556 = vmatprep.subr.bf16.mxu0 0
    %1557 = vmatpush1.bf16.msra.mxu0 %v1537
    %1558 = vmatprep.subr.bf16.mxu0 0
    %1559 = vmatpush1.bf16.msra.mxu0 %v1538
    %1560 = vmatprep.subr.bf16.mxu0 0
    %1561 = vmatpush1.bf16.msra.mxu0 %v1539
    %1562 = vmatprep.subr.bf16.mxu0 0
    %1563 = vmatpush1.bf16.msra.mxu0 0
    %1564 = vmatprep.subr.bf16.mxu0 0
    %1565 = vmatpush1.bf16.msra.mxu0 0
    %1566 = vmatprep.subr.bf16.mxu0 0
    %1567 = vmatpush1.bf16.msra.mxu0 0
    %1568 = vmatprep.subr.bf16.mxu0 0
    %1569 = vmatpush1.bf16.msra.mxu0 0
    %1570 = vmatprep.subr.bf16.mxu0 0
    %1571 = vmatpush1.bf16.msra.mxu0 0
    %1572 = vmatprep.subr.bf16.mxu0 0
    %1573 = vmatpush1.bf16.msra.mxu0 0
    %1574 = vmatprep.subr.bf16.mxu0 0
    %1575 = vmatpush1.bf16.msra.mxu0 0
    %1576 = vmatprep.subr.bf16.mxu0 0
    %1577 = vmatpush1.bf16.msra.mxu0 0
    %1578 = vmatprep.subr.bf16.mxu0 0
    %1579 = vmatpush1.bf16.msra.mxu0 0
    %1580 = vmatprep.subr.bf16.mxu0 0
    %1581 = vmatpush1.bf16.msra.mxu0 0
    %1582 = vmatprep.subr.bf16.mxu0 0
    %1583 = vmatpush1.bf16.msra.mxu0 0
    %1584 = vmatprep.subr.bf16.mxu0 0
    %1585 = vmatpush1.bf16.msra.mxu0 0
    %1586 = vmatprep.mubr.bf16.mxu0 0
    %1587 = vmatmul.mubr.bf16.gmra.mrb[0].mxu0 %v1544
    %v1588 = vpop.f32.mrb[0].mxu0
    %v1589 = vadd.f32 %v1484, %v1588
    %v1590 = vpop.f32.mrb[0].mxu0
    %v1591 = vpop.f32.mrb[0].mxu0
    %v1592 = vadd.f32 %v1487, %v1591
    %v1593 = vpop.f32.mrb[0].mxu0
    %1594 = vmatprep.mubr.bf16.mxu0 0
    %1595 = vmatmul.mubr.bf16.gmra.mrb[0].mxu0 %v1546
    %v1596 = vpop.f32.mrb[0].mxu0
    %v1597 = vadd.f32 %v1492, %v1596
    %v1598 = vpop.f32.mrb[0].mxu0
    %v1599 = vpop.f32.mrb[0].mxu0
    %v1600 = vadd.f32 %v1495, %v1599
    %v1601 = vpop.f32.mrb[0].mxu0
    %1602 = vmatprep.mubr.bf16.mxu0 0
    %1603 = vmatmul.mubr.bf16.gmra.mrb[0].mxu0 %v1548
    %v1604 = vpop.f32.mrb[0].mxu0
    %v1605 = vadd.f32 %v1500, %v1604
    %v1606 = vpop.f32.mrb[0].mxu0
    %v1607 = vpop.f32.mrb[0].mxu0
    %v1608 = vadd.f32 %v1503, %v1607
    %v1609 = vpop.f32.mrb[0].mxu0
    %1610 = vmatprep.mubr.bf16.mxu0 0
    %1611 = vmatmul.mubr.bf16.gmra.mrb[0].mxu0 %v1550
    %v1612 = vpop.f32.mrb[0].mxu0
    %v1613 = vadd.f32 %v1508, %v1612
    %v1614 = vpop.f32.mrb[0].mxu0
    %v1615 = vpop.f32.mrb[0].mxu0
    %v1616 = vadd.f32 %v1511, %v1615
    %v1617 = vpop.f32.mrb[0].mxu0
    %1618 = vmatprep.mubr.bf16.mxu0 0
    %1619 = vmatmul.mubr.bf16.gmra.mrb[0].mxu0 %v1552
    %v1620 = vpop.f32.mrb[0].mxu0
    %v1621 = vpop.f32.mrb[0].mxu0
    %v1622 = vpop.f32.mrb[0].mxu0
    %v1623 = vpop.f32.mrb[0].mxu0
    %1624 = vdwg.mxu0
    %v1625 = vld [vmem:[#allocation17 + $0xe8] sm:$0xf]
    %v1626 = vld [vmem:[#allocation17 + $0xec] sm:$0xf]
    %v1627 = vld [vmem:[#allocation17 + $0xf0] sm:$0xf]
    %v1628 = vld [vmem:[#allocation17 + $0xf4] sm:$0xf]
    %v1629 = vld [vmem:[#allocation17 + $0xf8] sm:$0xf]
    %v1630 = vld [vmem:[#allocation17 + $0xfc] sm:$0xf]
    %v1631 = vld [vmem:[#allocation17 + $0x100] sm:$0xf]
    %v1632 = vld [vmem:[#allocation17 + $0x104] sm:$0xf]
    %v1638 = vrot.slane %v1350, 1
    %v1639 = vrot.slane %v1351, 1
    %v1640 = vsel %vm532, %v1638, %v1639
    %v1641 = vrot.slane %v1352, 1
    %v1642 = vsel %vm532, %v1639, %v1641
    %v1643 = vrot.slane %v1353, 1
    %v1644 = vsel %vm532, %v1641, %v1643
    %v1645 = vrot.slane %v1354, 1
    %v1646 = vsel %vm532, %v1643, %v1645
    %v1655 = vunpack.c.l.b16 %v1625
    %v1656 = vunpack.c.l.b16 %v1626
    %v1657 = vunpack.c.l.b16 %v1627
    %v1658 = vunpack.c.l.b16 %v1628
    %v1659 = vunpack.c.l.b16 %v1629
    %v1660 = vunpack.c.l.b16 %v1630
    %v1661 = vunpack.c.l.b16 %v1631
    %v1662 = vunpack.c.l.b16 %v1632
    %v1663 = vpack.c.b16 %v1656, %v1655
    %v1664 = vpack.c.b16 %v1658, %v1657
    %v1665 = vpack.c.b16 %v1660, %v1659
    %v1666 = vpack.c.b16 %v1662, %v1661
    %v1672 = vsel %vm847, %v1640, 0
    %v1675 = vsel %vm847, %v1642, 0
    %v1678 = vsel %vm847, %v1644, 0
    %v1681 = vsel %vm847, %v1646, 0
    %v1684 = vsel %vm847, %v1645, 0
    %1686 = vmatprep.subr.bf16.mxu0 0
    %1687 = vmatpush1.bf16.msra.mxu0 %v1663
    %1688 = vmatprep.subr.bf16.mxu0 0
    %1689 = vmatpush1.bf16.msra.mxu0 %v1664
    %1690 = vmatprep.subr.bf16.mxu0 0
    %1691 = vmatpush1.bf16.msra.mxu0 %v1665
    %1692 = vmatprep.subr.bf16.mxu0 0
    %1693 = vmatpush1.bf16.msra.mxu0 %v1666
    %1694 = vmatprep.subr.bf16.mxu0 0
    %1695 = vmatpush1.bf16.msra.mxu0 0
    %1696 = vmatprep.subr.bf16.mxu0 0
    %1697 = vmatpush1.bf16.msra.mxu0 0
    %1698 = vmatprep.subr.bf16.mxu0 0
    %1699 = vmatpush1.bf16.msra.mxu0 0
    %1700 = vmatprep.subr.bf16.mxu0 0
    %1701 = vmatpush1.bf16.msra.mxu0 0
    %1702 = vmatprep.subr.bf16.mxu0 0
    %1703 = vmatpush1.bf16.msra.mxu0 0
    %1704 = vmatprep.subr.bf16.mxu0 0
    %1705 = vmatpush1.bf16.msra.mxu0 0
    %1706 = vmatprep.subr.bf16.mxu0 0
    %1707 = vmatpush1.bf16.msra.mxu0 0
    %1708 = vmatprep.subr.bf16.mxu0 0
    %1709 = vmatpush1.bf16.msra.mxu0 0
    %1710 = vmatprep.subr.bf16.mxu0 0
    %1711 = vmatpush1.bf16.msra.mxu0 0
    %1712 = vmatprep.subr.bf16.mxu0 0
    %1713 = vmatpush1.bf16.msra.mxu0 0
    %1714 = vmatprep.subr.bf16.mxu0 0
    %1715 = vmatpush1.bf16.msra.mxu0 0
    %1716 = vmatprep.subr.bf16.mxu0 0
    %1717 = vmatpush1.bf16.msra.mxu0 0
    %1718 = vmatprep.mubr.bf16.mxu0 0
    %1719 = vmatmul.mubr.bf16.gmra.mrb[0].mxu0 %v1672
    %v1720 = vpop.f32.mrb[0].mxu0
    %v1721 = vadd.f32 0.0, %v1720
    %v1722 = vpop.f32.mrb[0].mxu0
    %v1723 = vpop.f32.mrb[0].mxu0
    %v1724 = vadd.f32 0.0, %v1723
    %v1725 = vpop.f32.mrb[0].mxu0
    %1726 = vmatprep.mubr.bf16.mxu0 0
    %1727 = vmatmul.mubr.bf16.gmra.mrb[0].mxu0 %v1675
    %v1728 = vpop.f32.mrb[0].mxu0
    %v1729 = vadd.f32 0.0, %v1728
    %v1730 = vpop.f32.mrb[0].mxu0
    %v1731 = vpop.f32.mrb[0].mxu0
    %v1732 = vadd.f32 0.0, %v1731
    %v1733 = vpop.f32.mrb[0].mxu0
    %1734 = vmatprep.mubr.bf16.mxu0 0
    %1735 = vmatmul.mubr.bf16.gmra.mrb[0].mxu0 %v1678
    %v1736 = vpop.f32.mrb[0].mxu0
    %v1737 = vadd.f32 0.0, %v1736
    %v1738 = vpop.f32.mrb[0].mxu0
    %v1739 = vpop.f32.mrb[0].mxu0
    %v1740 = vadd.f32 0.0, %v1739
    %v1741 = vpop.f32.mrb[0].mxu0
    %1742 = vmatprep.mubr.bf16.mxu0 0
    %1743 = vmatmul.mubr.bf16.gmra.mrb[0].mxu0 %v1681
    %v1744 = vpop.f32.mrb[0].mxu0
    %v1745 = vadd.f32 0.0, %v1744
    %v1746 = vpop.f32.mrb[0].mxu0
    %v1747 = vpop.f32.mrb[0].mxu0
    %v1748 = vadd.f32 0.0, %v1747
    %v1749 = vpop.f32.mrb[0].mxu0
    %1750 = vmatprep.mubr.bf16.mxu0 0
    %1751 = vmatmul.mubr.bf16.gmra.mrb[0].mxu0 %v1684
    %v1752 = vpop.f32.mrb[0].mxu0
    %v1753 = vpop.f32.mrb[0].mxu0
    %v1754 = vpop.f32.mrb[0].mxu0
    %v1755 = vpop.f32.mrb[0].mxu0
    %1756 = vdwg.mxu0
    %v1757 = vadd.f32 %v1589, %v1721
    %v1758 = vadd.f32 %v1592, %v1724
    %v1759 = vadd.f32 %v1597, %v1729
    %v1760 = vadd.f32 %v1600, %v1732
    %v1761 = vadd.f32 %v1605, %v1737
    %v1762 = vadd.f32 %v1608, %v1740
    %v1763 = vadd.f32 %v1613, %v1745
    %v1764 = vadd.f32 %v1616, %v1748
    %v1765 = vld [vmem:[%s3 + $0x2] sm:$0x1]
    %v1766 = vlaneseq
    %v1767 = vshrl.u32 %v1766, 7
    %v1768 = vsub.s32 0, %v1767
    %v1769 = vrot.slane %v1765, %v1768
    %v1770 = vadd.f32 %v1757, %v1769
    %v1771 = vadd.f32 %v1758, %v1769
    %v1772 = vadd.f32 %v1759, %v1769
    %v1773 = vadd.f32 %v1760, %v1769
    %v1774 = vadd.f32 %v1761, %v1769
    %v1775 = vadd.f32 %v1762, %v1769
    %v1776 = vadd.f32 %v1763, %v1769
    %v1777 = vadd.f32 %v1764, %v1769
    %v1778 = vld [vmem:[#allocation4 + $0x1] sm:$0xff]
    %v1779 = vld [vmem:[#allocation4 + $0x9] sm:$0xff]
    %v1780 = vld [vmem:[#allocation4 + $0x11] sm:$0xff]
    %v1781 = vld [vmem:[#allocation4 + $0x19] sm:$0xff]
    %v1782 = vld [vmem:[#allocation4 + $0x21] sm:$0xff]
    %v1783 = vld [vmem:[#allocation4 + $0x29] sm:$0xff]
    %v1784 = vld [vmem:[#allocation4 + $0x31] sm:$0xff]
    %v1785 = vld [vmem:[#allocation4 + $0x39] sm:$0xff]
    %v1786 = vadd.f32 %v1770, %v1778
    %v1787 = vadd.f32 %v1771, %v1779
    %v1788 = vadd.f32 %v1772, %v1780
    %v1789 = vadd.f32 %v1773, %v1781
    %v1790 = vadd.f32 %v1774, %v1782
    %v1791 = vadd.f32 %v1775, %v1783
    %v1792 = vadd.f32 %v1776, %v1784
    %v1793 = vadd.f32 %v1777, %v1785
    %v1794 = vmax.f32 %v1786, 0.0
    %v1795 = vmax.f32 %v1787, 0.0
    %v1796 = vmax.f32 %v1788, 0.0
    %v1797 = vmax.f32 %v1789, 0.0
    %v1798 = vmax.f32 %v1790, 0.0
    %v1799 = vmax.f32 %v1791, 0.0
    %v1800 = vmax.f32 %v1792, 0.0
    %v1801 = vmax.f32 %v1793, 0.0
    %1802 = vst.msk [vmem:[#allocation6] sm:$0xff] %vm847, 0.0
    %1803 = vst.msk [vmem:[#allocation6 + $0x10] sm:$0xff] %vm847, 0.0
    %1804 = vst.msk [vmem:[#allocation6 + $0x20] sm:$0xff] %vm847, 0.0
    %1805 = vst.msk [vmem:[#allocation6 + $0x30] sm:$0xff] %vm847, 0.0
    %1806 = vst.msk [vmem:[#allocation6 + $0x40] sm:$0xff] %vm847, 0.0
    %1807 = vst.msk [vmem:[#allocation6 + $0x1] sm:$0x80] %vm1331, %v1794
    %1808 = vst.msk [vmem:[#allocation6 + $0x9] sm:$0x7f] %vm1333, %v1795
    %1809 = vst.msk [vmem:[#allocation6 + $0x11] sm:$0x80] %vm1331, %v1796
    %1810 = vst.msk [vmem:[#allocation6 + $0x19] sm:$0x7f] %vm1333, %v1797
    %1811 = vst.msk [vmem:[#allocation6 + $0x21] sm:$0x80] %vm1331, %v1798
    %1812 = vst.msk [vmem:[#allocation6 + $0x29] sm:$0x7f] %vm1333, %v1799
    %1813 = vst.msk [vmem:[#allocation6 + $0x31] sm:$0x80] %vm1331, %v1800
    %1814 = vst.msk [vmem:[#allocation6 + $0x39] sm:$0x7f] %vm1333, %v1801
    %1815 = vst.msk [vmem:[#allocation7] sm:$0xff] %vm847, 0.0
    %vm1816 = vcmask 519168
    %1817 = vst.msk [vmem:[#allocation7 + $0xc] sm:$0xf] %vm1816, 0.0
    %1818 = vst.msk [vmem:[#allocation7 + $0x14] sm:$0xf] %vm1816, 0.0
    %1819 = vst.msk [vmem:[#allocation7 + $0x1c] sm:$0xf] %vm1816, 0.0
    %1820 = vst.msk [vmem:[#allocation7 + $0x24] sm:$0xf] %vm1816, 0.0
    %1821 = vst.msk [vmem:[#allocation8] sm:$0xff] %vm847, 0.0
    %1822 = vst.msk [vmem:[#allocation8 + $0xc] sm:$0xf] %vm1816, 0.0
    %1823 = vst.msk [vmem:[#allocation8 + $0x14] sm:$0xf] %vm1816, 0.0
    %1824 = vst.msk [vmem:[#allocation8 + $0x1c] sm:$0xf] %vm1816, 0.0
    %1825 = vst.msk [vmem:[#allocation8 + $0x24] sm:$0xf] %vm1816, 0.0
    %s1826 = scalar_lea.vmem [#allocation6], 8
    %v1827 = vld [vmem:[%s1826] ss:$2 sm:$0xf]
    %1828 = vst.msk [vmem:[#allocation7 + $0x8] sm:$0xf] %vm1816, %v1827
    %s1829 = scalar_lea.vmem [#allocation6], 9
    %v1830 = vld [vmem:[%s1829] ss:$2 sm:$0xf]
    %1831 = vst.msk [vmem:[#allocation8 + $0x8] sm:$0xf] %vm1816, %v1830
    %s1832 = scalar_lea.vmem [#allocation6], 24
    %v1833 = vld [vmem:[%s1832] ss:$2 sm:$0xf]
    %1834 = vst.msk [vmem:[#allocation7 + $0x10] sm:$0xf] %vm1816, %v1833
    %s1835 = scalar_lea.vmem [#allocation6], 25
    %v1836 = vld [vmem:[%s1835] ss:$2 sm:$0xf]
    %1837 = vst.msk [vmem:[#allocation8 + $0x10] sm:$0xf] %vm1816, %v1836
    %s1838 = scalar_lea.vmem [#allocation6], 40
    %v1839 = vld [vmem:[%s1838] ss:$2 sm:$0xf]
    %1840 = vst.msk [vmem:[#allocation7 + $0x18] sm:$0xf] %vm1816, %v1839
    %s1841 = scalar_lea.vmem [#allocation6], 41
    %v1842 = vld [vmem:[%s1841] ss:$2 sm:$0xf]
    %1843 = vst.msk [vmem:[#allocation8 + $0x18] sm:$0xf] %vm1816, %v1842
    %s1844 = scalar_lea.vmem [#allocation6], 56
    %v1845 = vld [vmem:[%s1844] ss:$2 sm:$0xf]
    %1846 = vst.msk [vmem:[#allocation7 + $0x20] sm:$0xf] %vm1816, %v1845
    %s1847 = scalar_lea.vmem [#allocation6], 57
    %v1848 = vld [vmem:[%s1847] ss:$2 sm:$0xf]
    %1849 = vst.msk [vmem:[#allocation8 + $0x20] sm:$0xf] %vm1816, %v1848
    %v1850 = vld [vmem:[#allocation7] sm:$0xff]
    %v1851 = vld [vmem:[#allocation7 + $0x8] sm:$0xff]
    %v1852 = vld [vmem:[#allocation7 + $0x10] sm:$0xff]
    %v1853 = vld [vmem:[#allocation7 + $0x18] sm:$0xff]
    %v1854 = vld [vmem:[#allocation7 + $0x20] sm:$0xff]
    %v1855 = vpack.c.bf16 %v1851, %v1850
    %v1856 = vpack.c.bf16 %v1853, %v1852
    %v1857 = vpack.c.bf16 %v1854, %v1854
    %v1858 = vld [vmem:[#allocation8] sm:$0xff]
    %v1859 = vld [vmem:[#allocation8 + $0x8] sm:$0xff]
    %v1860 = vld [vmem:[#allocation8 + $0x10] sm:$0xff]
    %v1861 = vld [vmem:[#allocation8 + $0x18] sm:$0xff]
    %v1862 = vld [vmem:[#allocation8 + $0x20] sm:$0xff]
    %v1863 = vpack.c.bf16 %v1859, %v1858
    %v1864 = vpack.c.bf16 %v1861, %v1860
    %v1865 = vpack.c.bf16 %v1862, %v1862
    %v1866 = vld [vmem:[#allocation17 + $0x108] sm:$0xf]
    %v1867 = vld [vmem:[#allocation17 + $0x10c] sm:$0xf]
    %v1868 = vld [vmem:[#allocation17 + $0x110] sm:$0xf]
    %v1869 = vld [vmem:[#allocation17 + $0x114] sm:$0xf]
    %v1870 = vld [vmem:[#allocation17 + $0x118] sm:$0xf]
    %v1871 = vld [vmem:[#allocation17 + $0x11c] sm:$0xf]
    %v1872 = vld [vmem:[#allocation17 + $0x120] sm:$0xf]
    %v1873 = vld [vmem:[#allocation17 + $0x124] sm:$0xf]
    %v1874 = vld [vmem:[#allocation17 + $0x128] sm:$0xf]
    %v1875 = vld [vmem:[#allocation17 + $0x12c] sm:$0xf]
    %v1876 = vld [vmem:[#allocation17 + $0x130] sm:$0xf]
    %v1877 = vld [vmem:[#allocation17 + $0x134] sm:$0xf]
    %v1878 = vld [vmem:[#allocation17 + $0x138] sm:$0xf]
    %v1879 = vld [vmem:[#allocation17 + $0x13c] sm:$0xf]
    %v1880 = vld [vmem:[#allocation17 + $0x140] sm:$0xf]
    %v1881 = vld [vmem:[#allocation17 + $0x144] sm:$0xf]
    %v1883 = vshrl.u32 %v1855, 16
    %v1885 = vshll.u32 %v1855, 16
    %v1887 = vrot.slane %v1885, 1
    %v1888 = vor.u32 %v1883, %v1887
    %v1890 = vshll.u32 %v1856, 16
    %v1892 = vrot.slane %v1890, 1
    %v1893 = vsel %vm216, %v1888, %v1892
    %v1894 = vshrl.u32 %v1856, 16
    %v1896 = vor.u32 %v1894, %v1892
    %v1898 = vshll.u32 %v1857, 16
    %v1900 = vrot.slane %v1898, 1
    %v1901 = vsel %vm216, %v1896, %v1900
    %v1902 = vshrl.u32 %v1857, 16
    %v1904 = vor.u32 %v1902, %v1900
    %v1913 = vunpack.c.l.b16 %v1874
    %v1914 = vunpack.c.l.b16 %v1875
    %v1915 = vunpack.c.l.b16 %v1876
    %v1916 = vunpack.c.l.b16 %v1877
    %v1917 = vunpack.c.l.b16 %v1878
    %v1918 = vunpack.c.l.b16 %v1879
    %v1919 = vunpack.c.l.b16 %v1880
    %v1920 = vunpack.c.l.b16 %v1881
    %v1921 = vpack.c.b16 %v1914, %v1913
    %v1922 = vpack.c.b16 %v1916, %v1915
    %v1923 = vpack.c.b16 %v1918, %v1917
    %v1924 = vpack.c.b16 %v1920, %v1919
    %v1930 = vsel %vm847, %v1893, 0
    %v1933 = vsel %vm847, %v1901, 0
    %v1936 = vsel %vm847, %v1904, 0
    %1938 = vmatprep.subr.bf16.mxu0 0
    %1939 = vmatpush1.bf16.msra.mxu0 %v1921
    %1940 = vmatprep.subr.bf16.mxu0 0
    %1941 = vmatpush1.bf16.msra.mxu0 %v1922
    %1942 = vmatprep.subr.bf16.mxu0 0
    %1943 = vmatpush1.bf16.msra.mxu0 %v1923
    %1944 = vmatprep.subr.bf16.mxu0 0
    %1945 = vmatpush1.bf16.msra.mxu0 %v1924
    %1946 = vmatprep.subr.bf16.mxu0 0
    %1947 = vmatpush1.bf16.msra.mxu0 0
    %1948 = vmatprep.subr.bf16.mxu0 0
    %1949 = vmatpush1.bf16.msra.mxu0 0
    %1950 = vmatprep.subr.bf16.mxu0 0
    %1951 = vmatpush1.bf16.msra.mxu0 0
    %1952 = vmatprep.subr.bf16.mxu0 0
    %1953 = vmatpush1.bf16.msra.mxu0 0
    %1954 = vmatprep.subr.bf16.mxu0 0
    %1955 = vmatpush1.bf16.msra.mxu0 0
    %1956 = vmatprep.subr.bf16.mxu0 0
    %1957 = vmatpush1.bf16.msra.mxu0 0
    %1958 = vmatprep.subr.bf16.mxu0 0
    %1959 = vmatpush1.bf16.msra.mxu0 0
    %1960 = vmatprep.subr.bf16.mxu0 0
    %1961 = vmatpush1.bf16.msra.mxu0 0
    %1962 = vmatprep.subr.bf16.mxu0 0
    %1963 = vmatpush1.bf16.msra.mxu0 0
    %1964 = vmatprep.subr.bf16.mxu0 0
    %1965 = vmatpush1.bf16.msra.mxu0 0
    %1966 = vmatprep.subr.bf16.mxu0 0
    %1967 = vmatpush1.bf16.msra.mxu0 0
    %1968 = vmatprep.subr.bf16.mxu0 0
    %1969 = vmatpush1.bf16.msra.mxu0 0
    %1970 = vmatprep.mubr.bf16.mxu0 0
    %1971 = vmatmul.mubr.bf16.gmra.mrb[0].mxu0 %v1930
    %v1972 = vpop.f32.mrb[0].mxu0
    %v1973 = vadd.f32 0.0, %v1972
    %v1974 = vpop.f32.mrb[0].mxu0
    %v1975 = vpop.f32.mrb[0].mxu0
    %v1976 = vadd.f32 0.0, %v1975
    %v1977 = vpop.f32.mrb[0].mxu0
    %1978 = vmatprep.mubr.bf16.mxu0 0
    %1979 = vmatmul.mubr.bf16.gmra.mrb[0].mxu0 %v1933
    %v1980 = vpop.f32.mrb[0].mxu0
    %v1981 = vadd.f32 0.0, %v1980
    %v1982 = vpop.f32.mrb[0].mxu0
    %v1983 = vpop.f32.mrb[0].mxu0
    %v1984 = vadd.f32 0.0, %v1983
    %v1985 = vpop.f32.mrb[0].mxu0
    %1986 = vmatprep.mubr.bf16.mxu0 0
    %1987 = vmatmul.mubr.bf16.gmra.mrb[0].mxu0 %v1936
    %v1988 = vpop.f32.mrb[0].mxu0
    %v1989 = vadd.f32 0.0, %v1988
    %v1990 = vpop.f32.mrb[0].mxu0
    %v1991 = vpop.f32.mrb[0].mxu0
    %v1992 = vpop.f32.mrb[0].mxu0
    %1993 = vdwg.mxu0
    %v2002 = vunpack.c.l.b16 %v1866
    %v2003 = vunpack.c.l.b16 %v1867
    %v2004 = vunpack.c.l.b16 %v1868
    %v2005 = vunpack.c.l.b16 %v1869
    %v2006 = vunpack.c.l.b16 %v1870
    %v2007 = vunpack.c.l.b16 %v1871
    %v2008 = vunpack.c.l.b16 %v1872
    %v2009 = vunpack.c.l.b16 %v1873
    %v2010 = vpack.c.b16 %v2003, %v2002
    %v2011 = vpack.c.b16 %v2005, %v2004
    %v2012 = vpack.c.b16 %v2007, %v2006
    %v2013 = vpack.c.b16 %v2009, %v2008
    %v2019 = vsel %vm847, %v1863, 0
    %v2022 = vsel %vm847, %v1864, 0
    %v2025 = vsel %vm847, %v1865, 0
    %2027 = vmatprep.subr.bf16.mxu0 0
    %2028 = vmatpush1.bf16.msra.mxu0 %v2010
    %2029 = vmatprep.subr.bf16.mxu0 0
    %2030 = vmatpush1.bf16.msra.mxu0 %v2011
    %2031 = vmatprep.subr.bf16.mxu0 0
    %2032 = vmatpush1.bf16.msra.mxu0 %v2012
    %2033 = vmatprep.subr.bf16.mxu0 0
    %2034 = vmatpush1.bf16.msra.mxu0 %v2013
    %2035 = vmatprep.subr.bf16.mxu0 0
    %2036 = vmatpush1.bf16.msra.mxu0 0
    %2037 = vmatprep.subr.bf16.mxu0 0
    %2038 = vmatpush1.bf16.msra.mxu0 0
    %2039 = vmatprep.subr.bf16.mxu0 0
    %2040 = vmatpush1.bf16.msra.mxu0 0
    %2041 = vmatprep.subr.bf16.mxu0 0
    %2042 = vmatpush1.bf16.msra.mxu0 0
    %2043 = vmatprep.subr.bf16.mxu0 0
    %2044 = vmatpush1.bf16.msra.mxu0 0
    %2045 = vmatprep.subr.bf16.mxu0 0
    %2046 = vmatpush1.bf16.msra.mxu0 0
    %2047 = vmatprep.subr.bf16.mxu0 0
    %2048 = vmatpush1.bf16.msra.mxu0 0
    %2049 = vmatprep.subr.bf16.mxu0 0
    %2050 = vmatpush1.bf16.msra.mxu0 0
    %2051 = vmatprep.subr.bf16.mxu0 0
    %2052 = vmatpush1.bf16.msra.mxu0 0
    %2053 = vmatprep.subr.bf16.mxu0 0
    %2054 = vmatpush1.bf16.msra.mxu0 0
    %2055 = vmatprep.subr.bf16.mxu0 0
    %2056 = vmatpush1.bf16.msra.mxu0 0
    %2057 = vmatprep.subr.bf16.mxu0 0
    %2058 = vmatpush1.bf16.msra.mxu0 0
    %2059 = vmatprep.mubr.bf16.mxu0 0
    %2060 = vmatmul.mubr.bf16.gmra.mrb[0].mxu0 %v2019
    %v2061 = vpop.f32.mrb[0].mxu0
    %v2062 = vadd.f32 %v1973, %v2061
    %v2063 = vpop.f32.mrb[0].mxu0
    %v2064 = vpop.f32.mrb[0].mxu0
    %v2065 = vadd.f32 %v1976, %v2064
    %v2066 = vpop.f32.mrb[0].mxu0
    %2067 = vmatprep.mubr.bf16.mxu0 0
    %2068 = vmatmul.mubr.bf16.gmra.mrb[0].mxu0 %v2022
    %v2069 = vpop.f32.mrb[0].mxu0
    %v2070 = vadd.f32 %v1981, %v2069
    %v2071 = vpop.f32.mrb[0].mxu0
    %v2072 = vpop.f32.mrb[0].mxu0
    %v2073 = vadd.f32 %v1984, %v2072
    %v2074 = vpop.f32.mrb[0].mxu0
    %2075 = vmatprep.mubr.bf16.mxu0 0
    %2076 = vmatmul.mubr.bf16.gmra.mrb[0].mxu0 %v2025
    %v2077 = vpop.f32.mrb[0].mxu0
    %v2078 = vadd.f32 %v1989, %v2077
    %v2079 = vpop.f32.mrb[0].mxu0
    %v2080 = vpop.f32.mrb[0].mxu0
    %v2081 = vpop.f32.mrb[0].mxu0
    %2082 = vdwg.mxu0
    %v2083 = vld [vmem:[#allocation17 + $0x148] sm:$0xf]
    %v2084 = vld [vmem:[#allocation17 + $0x14c] sm:$0xf]
    %v2085 = vld [vmem:[#allocation17 + $0x150] sm:$0xf]
    %v2086 = vld [vmem:[#allocation17 + $0x154] sm:$0xf]
    %v2087 = vld [vmem:[#allocation17 + $0x158] sm:$0xf]
    %v2088 = vld [vmem:[#allocation17 + $0x15c] sm:$0xf]
    %v2089 = vld [vmem:[#allocation17 + $0x160] sm:$0xf]
    %v2090 = vld [vmem:[#allocation17 + $0x164] sm:$0xf]
    %v2091 = vshrl.u32 %v1863, 16
    %v2093 = vshll.u32 %v1863, 16
    %v2095 = vrot.slane %v2093, 1
    %v2096 = vor.u32 %v2091, %v2095
    %v2097 = vshll.u32 %v1864, 16
    %v2099 = vrot.slane %v2097, 1
    %v2100 = vsel %vm216, %v2096, %v2099
    %v2101 = vshrl.u32 %v1864, 16
    %v2103 = vor.u32 %v2101, %v2099
    %v2104 = vshll.u32 %v1865, 16
    %v2106 = vrot.slane %v2104, 1
    %v2107 = vsel %vm216, %v2103, %v2106
    %v2108 = vshrl.u32 %v1865, 16
    %v2110 = vor.u32 %v2108, %v2106
    %v2119 = vunpack.c.l.b16 %v2083
    %v2120 = vunpack.c.l.b16 %v2084
    %v2121 = vunpack.c.l.b16 %v2085
    %v2122 = vunpack.c.l.b16 %v2086
    %v2123 = vunpack.c.l.b16 %v2087
    %v2124 = vunpack.c.l.b16 %v2088
    %v2125 = vunpack.c.l.b16 %v2089
    %v2126 = vunpack.c.l.b16 %v2090
    %v2127 = vpack.c.b16 %v2120, %v2119
    %v2128 = vpack.c.b16 %v2122, %v2121
    %v2129 = vpack.c.b16 %v2124, %v2123
    %v2130 = vpack.c.b16 %v2126, %v2125
    %v2136 = vsel %vm847, %v2100, 0
    %v2139 = vsel %vm847, %v2107, 0
    %v2142 = vsel %vm847, %v2110, 0
    %2144 = vmatprep.subr.bf16.mxu0 0
    %2145 = vmatpush1.bf16.msra.mxu0 %v2127
    %2146 = vmatprep.subr.bf16.mxu0 0
    %2147 = vmatpush1.bf16.msra.mxu0 %v2128
    %2148 = vmatprep.subr.bf16.mxu0 0
    %2149 = vmatpush1.bf16.msra.mxu0 %v2129
    %2150 = vmatprep.subr.bf16.mxu0 0
    %2151 = vmatpush1.bf16.msra.mxu0 %v2130
    %2152 = vmatprep.subr.bf16.mxu0 0
    %2153 = vmatpush1.bf16.msra.mxu0 0
    %2154 = vmatprep.subr.bf16.mxu0 0
    %2155 = vmatpush1.bf16.msra.mxu0 0
    %2156 = vmatprep.subr.bf16.mxu0 0
    %2157 = vmatpush1.bf16.msra.mxu0 0
    %2158 = vmatprep.subr.bf16.mxu0 0
    %2159 = vmatpush1.bf16.msra.mxu0 0
    %2160 = vmatprep.subr.bf16.mxu0 0
    %2161 = vmatpush1.bf16.msra.mxu0 0
    %2162 = vmatprep.subr.bf16.mxu0 0
    %2163 = vmatpush1.bf16.msra.mxu0 0
    %2164 = vmatprep.subr.bf16.mxu0 0
    %2165 = vmatpush1.bf16.msra.mxu0 0
    %2166 = vmatprep.subr.bf16.mxu0 0
    %2167 = vmatpush1.bf16.msra.mxu0 0
    %2168 = vmatprep.subr.bf16.mxu0 0
    %2169 = vmatpush1.bf16.msra.mxu0 0
    %2170 = vmatprep.subr.bf16.mxu0 0
    %2171 = vmatpush1.bf16.msra.mxu0 0
    %2172 = vmatprep.subr.bf16.mxu0 0
    %2173 = vmatpush1.bf16.msra.mxu0 0
    %2174 = vmatprep.subr.bf16.mxu0 0
    %2175 = vmatpush1.bf16.msra.mxu0 0
    %2176 = vmatprep.mubr.bf16.mxu0 0
    %2177 = vmatmul.mubr.bf16.gmra.mrb[0].mxu0 %v2136
    %v2178 = vpop.f32.mrb[0].mxu0
    %v2179 = vadd.f32 0.0, %v2178
    %v2180 = vpop.f32.mrb[0].mxu0
    %v2181 = vpop.f32.mrb[0].mxu0
    %v2182 = vadd.f32 0.0, %v2181
    %v2183 = vpop.f32.mrb[0].mxu0
    %2184 = vmatprep.mubr.bf16.mxu0 0
    %2185 = vmatmul.mubr.bf16.gmra.mrb[0].mxu0 %v2139
    %v2186 = vpop.f32.mrb[0].mxu0
    %v2187 = vadd.f32 0.0, %v2186
    %v2188 = vpop.f32.mrb[0].mxu0
    %v2189 = vpop.f32.mrb[0].mxu0
    %v2190 = vadd.f32 0.0, %v2189
    %v2191 = vpop.f32.mrb[0].mxu0
    %2192 = vmatprep.mubr.bf16.mxu0 0
    %2193 = vmatmul.mubr.bf16.gmra.mrb[0].mxu0 %v2142
    %v2194 = vpop.f32.mrb[0].mxu0
    %v2195 = vadd.f32 0.0, %v2194
    %v2196 = vpop.f32.mrb[0].mxu0
    %v2197 = vpop.f32.mrb[0].mxu0
    %v2198 = vpop.f32.mrb[0].mxu0
    %2199 = vdwg.mxu0
    %v2200 = vadd.f32 %v2062, %v2179
    %v2201 = vadd.f32 %v2065, %v2182
    %v2202 = vadd.f32 %v2070, %v2187
    %v2203 = vadd.f32 %v2073, %v2190
    %v2204 = vadd.f32 %v2078, %v2195
    %v2205 = vld [vmem:[%s3 + $0x3] sm:$0x1]
    %v2206 = vlaneseq
    %v2207 = vshrl.u32 %v2206, 7
    %v2208 = vsub.s32 0, %v2207
    %v2209 = vrot.slane %v2205, %v2208
    %v2210 = vadd.f32 %v2200, %v2209
    %v2211 = vadd.f32 %v2201, %v2209
    %v2212 = vadd.f32 %v2202, %v2209
    %v2213 = vadd.f32 %v2203, %v2209
    %v2214 = vadd.f32 %v2204, %v2209
    %v2215 = vmax.f32 %v2210, 0.0
    %v2216 = vmax.f32 %v2211, 0.0
    %v2217 = vmax.f32 %v2212, 0.0
    %v2218 = vmax.f32 %v2213, 0.0
    %v2219 = vmax.f32 %v2214, 0.0
    %2220 = vst.msk [vmem:[#allocation9] sm:$0xff] %vm847, 0.0
    %2221 = vst.msk [vmem:[#allocation9 + $0xc] sm:$0xf] %vm1816, 0.0
    %2222 = vst.msk [vmem:[#allocation9 + $0x14] sm:$0xf] %vm1816, 0.0
    %2223 = vst.msk [vmem:[#allocation9 + $0x1c] sm:$0xf] %vm1816, 0.0
    %2224 = vst.msk [vmem:[#allocation9 + $0x24] sm:$0xf] %vm1816, 0.0
    %2225 = vst.msk [vmem:[#allocation9 + $0x1] sm:$0x80] %vm1331, %v2215
    %2226 = vst.msk [vmem:[#allocation9 + $0x9] sm:$0x7] %vm862, %v2216
    %2227 = vst.msk [vmem:[#allocation9 + $0x9] sm:$0x80] %vm1331, %v2216
    %2228 = vst.msk [vmem:[#allocation9 + $0x11] sm:$0x7] %vm862, %v2217
    %2229 = vst.msk [vmem:[#allocation9 + $0x11] sm:$0x80] %vm1331, %v2217
    %2230 = vst.msk [vmem:[#allocation9 + $0x19] sm:$0x7] %vm862, %v2218
    %2231 = vst.msk [vmem:[#allocation9 + $0x19] sm:$0x80] %vm1331, %v2218
    %2232 = vst.msk [vmem:[#allocation9 + $0x21] sm:$0x7] %vm862, %v2219
    %v2233 = vld [vmem:[#allocation9] sm:$0xff]
    %v2234 = vld [vmem:[#allocation9 + $0x8] sm:$0xff]
    %v2235 = vld [vmem:[#allocation9 + $0x10] sm:$0xff]
    %v2236 = vld [vmem:[#allocation9 + $0x18] sm:$0xff]
    %v2237 = vld [vmem:[#allocation9 + $0x20] sm:$0xff]
    %v2238 = vpack.c.bf16 %v2234, %v2233
    %v2239 = vpack.c.bf16 %v2236, %v2235
    %v2240 = vpack.c.bf16 %v2237, %v2237
    %v2241 = vld [vmem:[#allocation17 + $0x168] sm:$0xf]
    %v2242 = vld [vmem:[#allocation17 + $0x16c] sm:$0xf]
    %v2243 = vld [vmem:[#allocation17 + $0x170] sm:$0xf]
    %v2244 = vld [vmem:[#allocation17 + $0x174] sm:$0xf]
    %v2245 = vld [vmem:[#allocation17 + $0x178] sm:$0xf]
    %v2246 = vld [vmem:[#allocation17 + $0x17c] sm:$0xf]
    %v2247 = vld [vmem:[#allocation17 + $0x180] sm:$0xf]
    %v2248 = vld [vmem:[#allocation17 + $0x184] sm:$0xf]
    %v2249 = vld [vmem:[#allocation17 + $0x188] sm:$0xf]
    %v2250 = vld [vmem:[#allocation17 + $0x18c] sm:$0xf]
    %v2251 = vld [vmem:[#allocation17 + $0x190] sm:$0xf]
    %v2252 = vld [vmem:[#allocation17 + $0x194] sm:$0xf]
    %v2253 = vld [vmem:[#allocation17 + $0x198] sm:$0xf]
    %v2254 = vld [vmem:[#allocation17 + $0x19c] sm:$0xf]
    %v2255 = vld [vmem:[#allocation17 + $0x1a0] sm:$0xf]
    %v2256 = vld [vmem:[#allocation17 + $0x1a4] sm:$0xf]
    %v2258 = vshrl.u32 %v2238, 16
    %v2260 = vshll.u32 %v2238, 16
    %v2262 = vrot.slane %v2260, 1
    %v2263 = vor.u32 %v2258, %v2262
    %v2265 = vshll.u32 %v2239, 16
    %v2267 = vrot.slane %v2265, 1
    %v2268 = vsel %vm216, %v2263, %v2267
    %v2269 = vshrl.u32 %v2239, 16
    %v2271 = vor.u32 %v2269, %v2267
    %v2273 = vshll.u32 %v2240, 16
    %v2275 = vrot.slane %v2273, 1
    %v2276 = vsel %vm216, %v2271, %v2275
    %v2277 = vshrl.u32 %v2240, 16
    %v2279 = vor.u32 %v2277, %v2275
    %v2288 = vunpack.c.l.b16 %v2249
    %v2289 = vunpack.c.l.b16 %v2250
    %v2290 = vunpack.c.l.b16 %v2251
    %v2291 = vunpack.c.l.b16 %v2252
    %v2292 = vunpack.c.l.b16 %v2253
    %v2293 = vunpack.c.l.b16 %v2254
    %v2294 = vunpack.c.l.b16 %v2255
    %v2295 = vunpack.c.l.b16 %v2256
    %v2296 = vpack.c.b16 %v2289, %v2288
    %v2297 = vpack.c.b16 %v2291, %v2290
    %v2298 = vpack.c.b16 %v2293, %v2292
    %v2299 = vpack.c.b16 %v2295, %v2294
    %v2305 = vsel %vm847, %v2268, 0
    %v2308 = vsel %vm847, %v2276, 0
    %v2311 = vsel %vm847, %v2279, 0
    %2313 = vmatprep.subr.bf16.mxu0 0
    %2314 = vmatpush1.bf16.msra.mxu0 %v2296
    %2315 = vmatprep.subr.bf16.mxu0 0
    %2316 = vmatpush1.bf16.msra.mxu0 %v2297
    %2317 = vmatprep.subr.bf16.mxu0 0
    %2318 = vmatpush1.bf16.msra.mxu0 %v2298
    %2319 = vmatprep.subr.bf16.mxu0 0
    %2320 = vmatpush1.bf16.msra.mxu0 %v2299
    %2321 = vmatprep.subr.bf16.mxu0 0
    %2322 = vmatpush1.bf16.msra.mxu0 0
    %2323 = vmatprep.subr.bf16.mxu0 0
    %2324 = vmatpush1.bf16.msra.mxu0 0
    %2325 = vmatprep.subr.bf16.mxu0 0
    %2326 = vmatpush1.bf16.msra.mxu0 0
    %2327 = vmatprep.subr.bf16.mxu0 0
    %2328 = vmatpush1.bf16.msra.mxu0 0
    %2329 = vmatprep.subr.bf16.mxu0 0
    %2330 = vmatpush1.bf16.msra.mxu0 0
    %2331 = vmatprep.subr.bf16.mxu0 0
    %2332 = vmatpush1.bf16.msra.mxu0 0
    %2333 = vmatprep.subr.bf16.mxu0 0
    %2334 = vmatpush1.bf16.msra.mxu0 0
    %2335 = vmatprep.subr.bf16.mxu0 0
    %2336 = vmatpush1.bf16.msra.mxu0 0
    %2337 = vmatprep.subr.bf16.mxu0 0
    %2338 = vmatpush1.bf16.msra.mxu0 0
    %2339 = vmatprep.subr.bf16.mxu0 0
    %2340 = vmatpush1.bf16.msra.mxu0 0
    %2341 = vmatprep.subr.bf16.mxu0 0
    %2342 = vmatpush1.bf16.msra.mxu0 0
    %2343 = vmatprep.subr.bf16.mxu0 0
    %2344 = vmatpush1.bf16.msra.mxu0 0
    %2345 = vmatprep.mubr.bf16.mxu0 0
    %2346 = vmatmul.mubr.bf16.gmra.mrb[0].mxu0 %v2305
    %v2347 = vpop.f32.mrb[0].mxu0
    %v2348 = vadd.f32 0.0, %v2347
    %v2349 = vpop.f32.mrb[0].mxu0
    %v2350 = vpop.f32.mrb[0].mxu0
    %v2351 = vadd.f32 0.0, %v2350
    %v2352 = vpop.f32.mrb[0].mxu0
    %2353 = vmatprep.mubr.bf16.mxu0 0
    %2354 = vmatmul.mubr.bf16.gmra.mrb[0].mxu0 %v2308
    %v2355 = vpop.f32.mrb[0].mxu0
    %v2356 = vadd.f32 0.0, %v2355
    %v2357 = vpop.f32.mrb[0].mxu0
    %v2358 = vpop.f32.mrb[0].mxu0
    %v2359 = vadd.f32 0.0, %v2358
    %v2360 = vpop.f32.mrb[0].mxu0
    %2361 = vmatprep.mubr.bf16.mxu0 0
    %2362 = vmatmul.mubr.bf16.gmra.mrb[0].mxu0 %v2311
    %v2363 = vpop.f32.mrb[0].mxu0
    %v2364 = vadd.f32 0.0, %v2363
    %v2365 = vpop.f32.mrb[0].mxu0
    %v2366 = vpop.f32.mrb[0].mxu0
    %v2367 = vpop.f32.mrb[0].mxu0
    %2368 = vdwg.mxu0
    %v2377 = vunpack.c.l.b16 %v2241
    %v2378 = vunpack.c.l.b16 %v2242
    %v2379 = vunpack.c.l.b16 %v2243
    %v2380 = vunpack.c.l.b16 %v2244
    %v2381 = vunpack.c.l.b16 %v2245
    %v2382 = vunpack.c.l.b16 %v2246
    %v2383 = vunpack.c.l.b16 %v2247
    %v2384 = vunpack.c.l.b16 %v2248
    %v2385 = vpack.c.b16 %v2378, %v2377
    %v2386 = vpack.c.b16 %v2380, %v2379
    %v2387 = vpack.c.b16 %v2382, %v2381
    %v2388 = vpack.c.b16 %v2384, %v2383
    %v2393 = vsel %vm847, %v2238, 0
    %v2395 = vsel %vm847, %v2239, 0
    %v2397 = vsel %vm847, %v2240, 0
    %2399 = vmatprep.subr.bf16.mxu0 0
    %2400 = vmatpush1.bf16.msra.mxu0 %v2385
    %2401 = vmatprep.subr.bf16.mxu0 0
    %2402 = vmatpush1.bf16.msra.mxu0 %v2386
    %2403 = vmatprep.subr.bf16.mxu0 0
    %2404 = vmatpush1.bf16.msra.mxu0 %v2387
    %2405 = vmatprep.subr.bf16.mxu0 0
    %2406 = vmatpush1.bf16.msra.mxu0 %v2388
    %2407 = vmatprep.subr.bf16.mxu0 0
    %2408 = vmatpush1.bf16.msra.mxu0 0
    %2409 = vmatprep.subr.bf16.mxu0 0
    %2410 = vmatpush1.bf16.msra.mxu0 0
    %2411 = vmatprep.subr.bf16.mxu0 0
    %2412 = vmatpush1.bf16.msra.mxu0 0
    %2413 = vmatprep.subr.bf16.mxu0 0
    %2414 = vmatpush1.bf16.msra.mxu0 0
    %2415 = vmatprep.subr.bf16.mxu0 0
    %2416 = vmatpush1.bf16.msra.mxu0 0
    %2417 = vmatprep.subr.bf16.mxu0 0
    %2418 = vmatpush1.bf16.msra.mxu0 0
    %2419 = vmatprep.subr.bf16.mxu0 0
    %2420 = vmatpush1.bf16.msra.mxu0 0
    %2421 = vmatprep.subr.bf16.mxu0 0
    %2422 = vmatpush1.bf16.msra.mxu0 0
    %2423 = vmatprep.subr.bf16.mxu0 0
    %2424 = vmatpush1.bf16.msra.mxu0 0
    %2425 = vmatprep.subr.bf16.mxu0 0
    %2426 = vmatpush1.bf16.msra.mxu0 0
    %2427 = vmatprep.subr.bf16.mxu0 0
    %2428 = vmatpush1.bf16.msra.mxu0 0
    %2429 = vmatprep.subr.bf16.mxu0 0
    %2430 = vmatpush1.bf16.msra.mxu0 0
    %2431 = vmatprep.mubr.bf16.mxu0 0
    %2432 = vmatmul.mubr.bf16.gmra.mrb[0].mxu0 %v2393
    %v2433 = vpop.f32.mrb[0].mxu0
    %v2434 = vadd.f32 %v2348, %v2433
    %v2435 = vpop.f32.mrb[0].mxu0
    %v2436 = vpop.f32.mrb[0].mxu0
    %v2437 = vadd.f32 %v2351, %v2436
    %v2438 = vpop.f32.mrb[0].mxu0
    %2439 = vmatprep.mubr.bf16.mxu0 0
    %2440 = vmatmul.mubr.bf16.gmra.mrb[0].mxu0 %v2395
    %v2441 = vpop.f32.mrb[0].mxu0
    %v2442 = vadd.f32 %v2356, %v2441
    %v2443 = vpop.f32.mrb[0].mxu0
    %v2444 = vpop.f32.mrb[0].mxu0
    %v2445 = vadd.f32 %v2359, %v2444
    %v2446 = vpop.f32.mrb[0].mxu0
    %2447 = vmatprep.mubr.bf16.mxu0 0
    %2448 = vmatmul.mubr.bf16.gmra.mrb[0].mxu0 %v2397
    %v2449 = vpop.f32.mrb[0].mxu0
    %v2450 = vadd.f32 %v2364, %v2449
    %v2451 = vpop.f32.mrb[0].mxu0
    %v2452 = vpop.f32.mrb[0].mxu0
    %v2453 = vpop.f32.mrb[0].mxu0
    %2454 = vdwg.mxu0
    %v2455 = vld [vmem:[#allocation17 + $0x1a8] sm:$0xf]
    %v2456 = vld [vmem:[#allocation17 + $0x1ac] sm:$0xf]
    %v2457 = vld [vmem:[#allocation17 + $0x1b0] sm:$0xf]
    %v2458 = vld [vmem:[#allocation17 + $0x1b4] sm:$0xf]
    %v2459 = vld [vmem:[#allocation17 + $0x1b8] sm:$0xf]
    %v2460 = vld [vmem:[#allocation17 + $0x1bc] sm:$0xf]
    %v2461 = vld [vmem:[#allocation17 + $0x1c0] sm:$0xf]
    %v2462 = vld [vmem:[#allocation17 + $0x1c4] sm:$0xf]
    %v2466 = vrot.slane %v2238, 1
    %v2467 = vrot.slane %v2239, 1
    %v2468 = vsel %vm532, %v2466, %v2467
    %v2469 = vrot.slane %v2240, 1
    %v2470 = vsel %vm532, %v2467, %v2469
    %v2479 = vunpack.c.l.b16 %v2455
    %v2480 = vunpack.c.l.b16 %v2456
    %v2481 = vunpack.c.l.b16 %v2457
    %v2482 = vunpack.c.l.b16 %v2458
    %v2483 = vunpack.c.l.b16 %v2459
    %v2484 = vunpack.c.l.b16 %v2460
    %v2485 = vunpack.c.l.b16 %v2461
    %v2486 = vunpack.c.l.b16 %v2462
    %v2487 = vpack.c.b16 %v2480, %v2479
    %v2488 = vpack.c.b16 %v2482, %v2481
    %v2489 = vpack.c.b16 %v2484, %v2483
    %v2490 = vpack.c.b16 %v2486, %v2485
    %v2496 = vsel %vm847, %v2468, 0
    %v2499 = vsel %vm847, %v2470, 0
    %v2502 = vsel %vm847, %v2469, 0
    %2504 = vmatprep.subr.bf16.mxu0 0
    %2505 = vmatpush1.bf16.msra.mxu0 %v2487
    %2506 = vmatprep.subr.bf16.mxu0 0
    %2507 = vmatpush1.bf16.msra.mxu0 %v2488
    %2508 = vmatprep.subr.bf16.mxu0 0
    %2509 = vmatpush1.bf16.msra.mxu0 %v2489
    %2510 = vmatprep.subr.bf16.mxu0 0
    %2511 = vmatpush1.bf16.msra.mxu0 %v2490
    %2512 = vmatprep.subr.bf16.mxu0 0
    %2513 = vmatpush1.bf16.msra.mxu0 0
    %2514 = vmatprep.subr.bf16.mxu0 0
    %2515 = vmatpush1.bf16.msra.mxu0 0
    %2516 = vmatprep.subr.bf16.mxu0 0
    %2517 = vmatpush1.bf16.msra.mxu0 0
    %2518 = vmatprep.subr.bf16.mxu0 0
    %2519 = vmatpush1.bf16.msra.mxu0 0
    %2520 = vmatprep.subr.bf16.mxu0 0
    %2521 = vmatpush1.bf16.msra.mxu0 0
    %2522 = vmatprep.subr.bf16.mxu0 0
    %2523 = vmatpush1.bf16.msra.mxu0 0
    %2524 = vmatprep.subr.bf16.mxu0 0
    %2525 = vmatpush1.bf16.msra.mxu0 0
    %2526 = vmatprep.subr.bf16.mxu0 0
    %2527 = vmatpush1.bf16.msra.mxu0 0
    %2528 = vmatprep.subr.bf16.mxu0 0
    %2529 = vmatpush1.bf16.msra.mxu0 0
    %2530 = vmatprep.subr.bf16.mxu0 0
    %2531 = vmatpush1.bf16.msra.mxu0 0
    %2532 = vmatprep.subr.bf16.mxu0 0
    %2533 = vmatpush1.bf16.msra.mxu0 0
    %2534 = vmatprep.subr.bf16.mxu0 0
    %2535 = vmatpush1.bf16.msra.mxu0 0
    %2536 = vmatprep.mubr.bf16.mxu0 0
    %2537 = vmatmul.mubr.bf16.gmra.mrb[0].mxu0 %v2496
    %v2538 = vpop.f32.mrb[0].mxu0
    %v2539 = vadd.f32 0.0, %v2538
    %v2540 = vpop.f32.mrb[0].mxu0
    %v2541 = vpop.f32.mrb[0].mxu0
    %v2542 = vadd.f32 0.0, %v2541
    %v2543 = vpop.f32.mrb[0].mxu0
    %2544 = vmatprep.mubr.bf16.mxu0 0
    %2545 = vmatmul.mubr.bf16.gmra.mrb[0].mxu0 %v2499
    %v2546 = vpop.f32.mrb[0].mxu0
    %v2547 = vadd.f32 0.0, %v2546
    %v2548 = vpop.f32.mrb[0].mxu0
    %v2549 = vpop.f32.mrb[0].mxu0
    %v2550 = vadd.f32 0.0, %v2549
    %v2551 = vpop.f32.mrb[0].mxu0
    %2552 = vmatprep.mubr.bf16.mxu0 0
    %2553 = vmatmul.mubr.bf16.gmra.mrb[0].mxu0 %v2502
    %v2554 = vpop.f32.mrb[0].mxu0
    %v2555 = vadd.f32 0.0, %v2554
    %v2556 = vpop.f32.mrb[0].mxu0
    %v2557 = vpop.f32.mrb[0].mxu0
    %v2558 = vpop.f32.mrb[0].mxu0
    %2559 = vdwg.mxu0
    %v2560 = vadd.f32 %v2434, %v2539
    %v2561 = vadd.f32 %v2437, %v2542
    %v2562 = vadd.f32 %v2442, %v2547
    %v2563 = vadd.f32 %v2445, %v2550
    %v2564 = vadd.f32 %v2450, %v2555
    %v2565 = vld [vmem:[%s3 + $0x4] sm:$0x1]
    %v2566 = vlaneseq
    %v2567 = vshrl.u32 %v2566, 7
    %v2568 = vsub.s32 0, %v2567
    %v2569 = vrot.slane %v2565, %v2568
    %v2570 = vadd.f32 %v2560, %v2569
    %v2571 = vadd.f32 %v2561, %v2569
    %v2572 = vadd.f32 %v2562, %v2569
    %v2573 = vadd.f32 %v2563, %v2569
    %v2574 = vadd.f32 %v2564, %v2569
    %2580 = vrot.lane.b32.xlu0 %v2210, 64
    %v2581 = vpop.permute.xlu0 %2580
    %2582 = vrot.lane.b32.xlu0 %v2211, 64
    %v2583 = vpop.permute.xlu0 %2582
    %2584 = vrot.lane.b32.xlu0 %v2212, 64
    %v2585 = vpop.permute.xlu0 %2584
    %2586 = vrot.lane.b32.xlu0 %v2213, 64
    %v2587 = vpop.permute.xlu0 %2586
    %2588 = vrot.lane.b32.xlu0 %v2214, 64
    %v2589 = vpop.permute.xlu0 %2588
    %v2595 = vadd.f32 %v2570, %v2581
    %v2596 = vadd.f32 %v2571, %v2583
    %v2597 = vadd.f32 %v2572, %v2585
    %v2598 = vadd.f32 %v2573, %v2587
    %v2599 = vadd.f32 %v2574, %v2589
    %v2600 = vmax.f32 %v2595, 0.0
    %v2601 = vmax.f32 %v2596, 0.0
    %v2602 = vmax.f32 %v2597, 0.0
    %v2603 = vmax.f32 %v2598, 0.0
    %v2604 = vmax.f32 %v2599, 0.0
    %2605 = vst.msk [vmem:[#allocation10] sm:$0xff] %vm847, %v2600
    %2606 = vst.msk [vmem:[#allocation10 + $0x8] sm:$0xff] %vm847, %v2601
    %2607 = vst.msk [vmem:[#allocation10 + $0x10] sm:$0xff] %vm847, %v2602
    %2608 = vst.msk [vmem:[#allocation10 + $0x18] sm:$0xff] %vm847, %v2603
    %vm2609 = vcmask 521216
    %2610 = vst.msk [vmem:[#allocation10 + $0x20] sm:$0x3f] %vm2609, %v2604
    %vm2611 = vcmask 517120
    %2612 = vst.msk [vmem:[#allocation10 + $0x26] sm:$0x3] %vm2611, 0.0
    %2613 = vst [vmem:[#allocation11] sm:$0xff] 0.0
    %2614 = vst [vmem:[#allocation11 + $0x8] sm:$0xff] 0.0
    %s2615 = scalar_lea.vmem [#allocation10], 7
    %v2616 = vld [vmem:[%s2615] ss:$8 sm:$0xf]
    %2617 = vst.msk [vmem:[#allocation11] sm:$0xf] %vm1816, %v2616
    %s2618 = scalar_lea.vmem [#allocation10], 8
    %v2619 = vld [vmem:[%s2618] ss:$8 sm:$0xf]
    %2621 = vrot.lane.b32.xlu0 %v2619, 64
    %v2622 = vpop.permute.xlu0 %2621
    %vm2624 = vcmask 1043968
    %2625 = vst.msk [vmem:[#allocation11] sm:$0xf] %vm2624, %v2622
    %s2626 = scalar_lea.vmem [#allocation10], 9
    %v2627 = vld [vmem:[%s2626] ss:$8 sm:$0xf]
    %2628 = vst.msk [vmem:[#allocation11 + $0x8] sm:$0xf] %vm1816, %v2627
    %s2629 = scalar_lea.vmem [#allocation10], 10
    %v2630 = vld [vmem:[%s2629] ss:$8 sm:$0xf]
    %2632 = vrot.lane.b32.xlu0 %v2630, 64
    %v2633 = vpop.permute.xlu0 %2632
    %2635 = vst.msk [vmem:[#allocation11 + $0x8] sm:$0xf] %vm2624, %v2633
    %v2636 = vld [vmem:[#allocation11] sm:$0xff]
    %v2637 = vld [vmem:[#allocation11 + $0x8] sm:$0xff]
    %v2638 = vld [vmem:[#allocation17 + $0x1c8] sm:$0xf]
    %v2639 = vld [vmem:[#allocation17 + $0x1cc] sm:$0xf]
    %v2640 = vld [vmem:[#allocation17 + $0x1d0] sm:$0xf]
    %v2641 = vld [vmem:[#allocation17 + $0x1d4] sm:$0xf]
    %v2642 = vld [vmem:[#allocation17 + $0x1d8] sm:$0xf]
    %v2643 = vld [vmem:[#allocation17 + $0x1dc] sm:$0xf]
    %v2644 = vld [vmem:[#allocation17 + $0x1e0] sm:$0xf]
    %v2645 = vld [vmem:[#allocation17 + $0x1e4] sm:$0xf]
    %v2646 = vld [vmem:[#allocation17 + $0x1e8] sm:$0xf]
    %v2647 = vld [vmem:[#allocation17 + $0x1ec] sm:$0xf]
    %v2648 = vld [vmem:[#allocation17 + $0x1f0] sm:$0xf]
    %v2649 = vld [vmem:[#allocation17 + $0x1f4] sm:$0xf]
    %v2650 = vld [vmem:[#allocation17 + $0x1f8] sm:$0xf]
    %v2651 = vld [vmem:[#allocation17 + $0x1fc] sm:$0xf]
    %v2652 = vld [vmem:[#allocation17 + $0x200] sm:$0xf]
    %v2653 = vld [vmem:[#allocation17 + $0x204] sm:$0xf]
    %v2654 = vld [vmem:[#allocation17 + $0x208] sm:$0xf]
    %v2655 = vld [vmem:[#allocation17 + $0x20c] sm:$0xf]
    %v2656 = vld [vmem:[#allocation17 + $0x210] sm:$0xf]
    %v2657 = vld [vmem:[#allocation17 + $0x214] sm:$0xf]
    %v2658 = vld [vmem:[#allocation17 + $0x218] sm:$0xf]
    %v2659 = vld [vmem:[#allocation17 + $0x21c] sm:$0xf]
    %v2660 = vld [vmem:[#allocation17 + $0x220] sm:$0xf]
    %v2661 = vld [vmem:[#allocation17 + $0x224] sm:$0xf]
    %v2662 = vld [vmem:[#allocation17 + $0x228] sm:$0xf]
    %v2663 = vld [vmem:[#allocation17 + $0x22c] sm:$0xf]
    %v2664 = vld [vmem:[#allocation17 + $0x230] sm:$0xf]
    %v2665 = vld [vmem:[#allocation17 + $0x234] sm:$0xf]
    %v2666 = vld [vmem:[#allocation17 + $0x238] sm:$0xf]
    %v2667 = vld [vmem:[#allocation17 + $0x23c] sm:$0xf]
    %v2668 = vld [vmem:[#allocation17 + $0x240] sm:$0xf]
    %v2669 = vld [vmem:[#allocation17 + $0x244] sm:$0xf]
    %v2670 = vpack.c.bf16 %v2636, %v2636
    %v2671 = vpack.c.bf16 %v2637, %v2637
    %v2672 = vld [vmem:[%s3 + $0x5] sm:$0x1]
    %v2673 = vlaneseq
    %v2674 = vshrl.u32 %v2673, 7
    %v2675 = vsub.s32 0, %v2674
    %v2676 = vrot.slane %v2672, %v2675
    %v2709 = vunpack.c.l.b16 %v2638
    %v2710 = vunpack.c.l.b16 %v2639
    %v2711 = vunpack.c.l.b16 %v2640
    %v2712 = vunpack.c.l.b16 %v2641
    %v2713 = vunpack.c.l.b16 %v2642
    %v2714 = vunpack.c.l.b16 %v2643
    %v2715 = vunpack.c.l.b16 %v2644
    %v2716 = vunpack.c.l.b16 %v2645
    %v2717 = vunpack.c.l.b16 %v2646
    %v2718 = vunpack.c.l.b16 %v2647
    %v2719 = vunpack.c.l.b16 %v2648
    %v2720 = vunpack.c.l.b16 %v2649
    %v2721 = vunpack.c.l.b16 %v2650
    %v2722 = vunpack.c.l.b16 %v2651
    %v2723 = vunpack.c.l.b16 %v2652
    %v2724 = vunpack.c.l.b16 %v2653
    %v2725 = vunpack.c.l.b16 %v2654
    %v2726 = vunpack.c.l.b16 %v2655
    %v2727 = vunpack.c.l.b16 %v2656
    %v2728 = vunpack.c.l.b16 %v2657
    %v2729 = vunpack.c.l.b16 %v2658
    %v2730 = vunpack.c.l.b16 %v2659
    %v2731 = vunpack.c.l.b16 %v2660
    %v2732 = vunpack.c.l.b16 %v2661
    %v2733 = vunpack.c.l.b16 %v2662
    %v2734 = vunpack.c.l.b16 %v2663
    %v2735 = vunpack.c.l.b16 %v2664
    %v2736 = vunpack.c.l.b16 %v2665
    %v2737 = vunpack.c.l.b16 %v2666
    %v2738 = vunpack.c.l.b16 %v2667
    %v2739 = vunpack.c.l.b16 %v2668
    %v2740 = vunpack.c.l.b16 %v2669
    %v2741 = vpack.c.b16 %v2710, %v2709
    %v2742 = vpack.c.b16 %v2712, %v2711
    %v2743 = vpack.c.b16 %v2714, %v2713
    %v2744 = vpack.c.b16 %v2716, %v2715
    %v2745 = vpack.c.b16 %v2718, %v2717
    %v2746 = vpack.c.b16 %v2720, %v2719
    %v2747 = vpack.c.b16 %v2722, %v2721
    %v2748 = vpack.c.b16 %v2724, %v2723
    %v2749 = vpack.c.b16 %v2726, %v2725
    %v2750 = vpack.c.b16 %v2728, %v2727
    %v2751 = vpack.c.b16 %v2730, %v2729
    %v2752 = vpack.c.b16 %v2732, %v2731
    %v2753 = vpack.c.b16 %v2734, %v2733
    %v2754 = vpack.c.b16 %v2736, %v2735
    %v2755 = vpack.c.b16 %v2738, %v2737
    %v2756 = vpack.c.b16 %v2740, %v2739
    %2773 = vmatprep.subr.bf16.mxu0 0
    %2774 = vmatpush1.bf16.msra.mxu0 %v2741
    %2775 = vmatprep.subr.bf16.mxu0 0
    %2776 = vmatpush1.bf16.msra.mxu0 %v2742
    %2777 = vmatprep.subr.bf16.mxu0 0
    %2778 = vmatpush1.bf16.msra.mxu0 %v2743
    %2779 = vmatprep.subr.bf16.mxu0 0
    %2780 = vmatpush1.bf16.msra.mxu0 %v2744
    %2781 = vmatprep.subr.bf16.mxu0 0
    %2782 = vmatpush1.bf16.msra.mxu0 %v2745
    %2783 = vmatprep.subr.bf16.mxu0 0
    %2784 = vmatpush1.bf16.msra.mxu0 %v2746
    %2785 = vmatprep.subr.bf16.mxu0 0
    %2786 = vmatpush1.bf16.msra.mxu0 %v2747
    %2787 = vmatprep.subr.bf16.mxu0 0
    %2788 = vmatpush1.bf16.msra.mxu0 %v2748
    %2789 = vmatprep.subr.bf16.mxu0 0
    %2790 = vmatpush1.bf16.msra.mxu0 %v2749
    %2791 = vmatprep.subr.bf16.mxu0 0
    %2792 = vmatpush1.bf16.msra.mxu0 %v2750
    %2793 = vmatprep.subr.bf16.mxu0 0
    %2794 = vmatpush1.bf16.msra.mxu0 %v2751
    %2795 = vmatprep.subr.bf16.mxu0 0
    %2796 = vmatpush1.bf16.msra.mxu0 %v2752
    %2797 = vmatprep.subr.bf16.mxu0 0
    %2798 = vmatpush1.bf16.msra.mxu0 %v2753
    %2799 = vmatprep.subr.bf16.mxu0 0
    %2800 = vmatpush1.bf16.msra.mxu0 %v2754
    %2801 = vmatprep.subr.bf16.mxu0 0
    %2802 = vmatpush1.bf16.msra.mxu0 %v2755
    %2803 = vmatprep.subr.bf16.mxu0 0
    %2804 = vmatpush1.bf16.msra.mxu0 %v2756
    %2805 = vmatprep.mubr.bf16.mxu0 %v2671
    %2806 = vmatmul.mubr.bf16.gmra.mrb[0].mxu0 %v2670
    %v2807 = vpop.f32.mrb[0].mxu0
    %v2808 = vadd.f32 %v2676, %v2807
    %v2809 = vpop.f32.mrb[0].mxu0
    %v2810 = vpop.f32.mrb[0].mxu0
    %v2811 = vpop.f32.mrb[0].mxu0
    %2812 = vdwg.mxu0
    %v2813 = vmax.f32 %v2808, 0.0
    %v2814 = vld [vmem:[#allocation17 + $0x248] sm:$0xf]
    %v2815 = vld [vmem:[#allocation17 + $0x24c] sm:$0xf]
    %v2816 = vld [vmem:[#allocation17 + $0x250] sm:$0xf]
    %v2817 = vld [vmem:[#allocation17 + $0x254] sm:$0xf]
    %v2818 = vpack.c.bf16 %v2813, %v2813
    %v2819 = vld [vmem:[%s3 + $0x6] sm:$0x1]
    %v2820 = vlaneseq
    %v2821 = vshrl.u32 %v2820, 7
    %v2822 = vsub.s32 0, %v2821
    %v2823 = vrot.slane %v2819, %v2822
    %v2828 = vunpack.c.l.b16 %v2814
    %v2829 = vunpack.c.l.b16 %v2815
    %v2830 = vunpack.c.l.b16 %v2816
    %v2831 = vunpack.c.l.b16 %v2817
    %v2832 = vpack.c.b16 %v2829, %v2828
    %v2833 = vpack.c.b16 %v2831, %v2830
    %vm2836 = vcmask 261120
    %v2838 = vsel %vm2836, %v2818, 0
    %2840 = vmatprep.subr.bf16.mxu0 0
    %2841 = vmatpush1.bf16.msra.mxu0 %v2832
    %2842 = vmatprep.subr.bf16.mxu0 0
    %2843 = vmatpush1.bf16.msra.mxu0 %v2833
    %2844 = vmatprep.subr.bf16.mxu0 0
    %2845 = vmatpush1.bf16.msra.mxu0 0
    %2846 = vmatprep.subr.bf16.mxu0 0
    %2847 = vmatpush1.bf16.msra.mxu0 0
    %2848 = vmatprep.subr.bf16.mxu0 0
    %2849 = vmatpush1.bf16.msra.mxu0 0
    %2850 = vmatprep.subr.bf16.mxu0 0
    %2851 = vmatpush1.bf16.msra.mxu0 0
    %2852 = vmatprep.subr.bf16.mxu0 0
    %2853 = vmatpush1.bf16.msra.mxu0 0
    %2854 = vmatprep.subr.bf16.mxu0 0
    %2855 = vmatpush1.bf16.msra.mxu0 0
    %2856 = vmatprep.subr.bf16.mxu0 0
    %2857 = vmatpush1.bf16.msra.mxu0 0
    %2858 = vmatprep.subr.bf16.mxu0 0
    %2859 = vmatpush1.bf16.msra.mxu0 0
    %2860 = vmatprep.subr.bf16.mxu0 0
    %2861 = vmatpush1.bf16.msra.mxu0 0
    %2862 = vmatprep.subr.bf16.mxu0 0
    %2863 = vmatpush1.bf16.msra.mxu0 0
    %2864 = vmatprep.subr.bf16.mxu0 0
    %2865 = vmatpush1.bf16.msra.mxu0 0
    %2866 = vmatprep.subr.bf16.mxu0 0
    %2867 = vmatpush1.bf16.msra.mxu0 0
    %2868 = vmatprep.subr.bf16.mxu0 0
    %2869 = vmatpush1.bf16.msra.mxu0 0
    %2870 = vmatprep.subr.bf16.mxu0 0
    %2871 = vmatpush1.bf16.msra.mxu0 0
    %2872 = vmatprep.mubr.bf16.mxu0 0
    %2873 = vmatmul.mubr.bf16.gmra.mrb[0].mxu0 %v2838
    %v2874 = vpop.f32.mrb[0].mxu0
    %v2875 = vadd.f32 %v2823, %v2874
    %v2876 = vpop.f32.mrb[0].mxu0
    %v2877 = vpop.f32.mrb[0].mxu0
    %v2878 = vpop.f32.mrb[0].mxu0
    %2879 = vdwg.mxu0
    %v2880 = vmax.f32 %v2875, 0.0
    %v2881 = vld [vmem:[#allocation17 + $0x258] sm:$0xf]
    %v2882 = vld [vmem:[#allocation17 + $0x25c] sm:$0xf]
    %v2883 = vld [vmem:[#allocation17 + $0x260] sm:$0xf]
    %v2884 = vld [vmem:[#allocation17 + $0x264] sm:$0xf]
    %v2885 = vpack.c.bf16 %v2880, %v2880
    %v2886 = vld [vmem:[%s3 + $0x7] sm:$0x1]
    %v2887 = vlaneseq
    %v2888 = vshrl.u32 %v2887, 7
    %v2889 = vsub.s32 0, %v2888
    %v2890 = vrot.slane %v2886, %v2889
    %v2895 = vunpack.c.l.b16 %v2881
    %v2896 = vunpack.c.l.b16 %v2882
    %v2897 = vunpack.c.l.b16 %v2883
    %v2898 = vunpack.c.l.b16 %v2884
    %v2899 = vpack.c.b16 %v2896, %v2895
    %v2900 = vpack.c.b16 %v2898, %v2897
    %v2904 = vsel %vm2836, %v2885, 0
    %2906 = vmatprep.subr.bf16.mxu0 0
    %2907 = vmatpush1.bf16.msra.mxu0 %v2899
    %2908 = vmatprep.subr.bf16.mxu0 0
    %2909 = vmatpush1.bf16.msra.mxu0 %v2900
    %2910 = vmatprep.subr.bf16.mxu0 0
    %2911 = vmatpush1.bf16.msra.mxu0 0
    %2912 = vmatprep.subr.bf16.mxu0 0
    %2913 = vmatpush1.bf16.msra.mxu0 0
    %2914 = vmatprep.subr.bf16.mxu0 0
    %2915 = vmatpush1.bf16.msra.mxu0 0
    %2916 = vmatprep.subr.bf16.mxu0 0
    %2917 = vmatpush1.bf16.msra.mxu0 0
    %2918 = vmatprep.subr.bf16.mxu0 0
    %2919 = vmatpush1.bf16.msra.mxu0 0
    %2920 = vmatprep.subr.bf16.mxu0 0
    %2921 = vmatpush1.bf16.msra.mxu0 0
    %2922 = vmatprep.subr.bf16.mxu0 0
    %2923 = vmatpush1.bf16.msra.mxu0 0
    %2924 = vmatprep.subr.bf16.mxu0 0
    %2925 = vmatpush1.bf16.msra.mxu0 0
    %2926 = vmatprep.subr.bf16.mxu0 0
    %2927 = vmatpush1.bf16.msra.mxu0 0
    %2928 = vmatprep.subr.bf16.mxu0 0
    %2929 = vmatpush1.bf16.msra.mxu0 0
    %2930 = vmatprep.subr.bf16.mxu0 0
    %2931 = vmatpush1.bf16.msra.mxu0 0
    %2932 = vmatprep.subr.bf16.mxu0 0
    %2933 = vmatpush1.bf16.msra.mxu0 0
    %2934 = vmatprep.subr.bf16.mxu0 0
    %2935 = vmatpush1.bf16.msra.mxu0 0
    %2936 = vmatprep.subr.bf16.mxu0 0
    %2937 = vmatpush1.bf16.msra.mxu0 0
    %2938 = vmatprep.mubr.bf16.mxu0 0
    %2939 = vmatmul.mubr.bf16.gmra.mrb[0].mxu0 %v2904
    %v2940 = vpop.f32.mrb[0].mxu0
    %v2941 = vadd.f32 %v2890, %v2940
    %v2942 = vpop.f32.mrb[0].mxu0
    %v2943 = vpop.f32.mrb[0].mxu0
    %v2944 = vpop.f32.mrb[0].mxu0
    %2945 = vdwg.mxu0
    %vm2946 = vcmask 58368
    %2947 = vst.msk [vmem:[#allocation18] sm:$0x3] %vm2946, %v2941
    %vm2948 = vcmask 60418
    %2949 = vst.msk [vmem:[#allocation19 - $0x2] sm:$0xc] %vm2948, %v2941
    // Predicated region
    $region30: #{siamese_forward.1} parent=1 // pred_check
      _
    $region31: #{siamese_forward.1} parent=1 // pred_check_branch
      %2951 = sbr.rel (0) target = $region33
    $region32: #{siamese_forward.1} parent=1 // pred_region
      %s2953 = ssub.s32 32, 32
      %2954 = vsyncadd [#allocation14], %s2953
      %s2956 = sshll.u32 [#allocation18], 4
      %s2957 = int_to_ptr.vmem [resolvable:$true] %s2956
      %2959 = dma.vmem_to_hbm [thread:$0]  %s2957, 32, %s4, [#allocation14]
    $region33: #{siamese_forward.1} parent=1 // pred_fallthru
      _
    // Predicated region
    $region34: #{siamese_forward.1} parent=1 // pred_check
      _
    $region35: #{siamese_forward.1} parent=1 // pred_check_branch
      %2961 = sbr.rel (0) target = $region37
    $region36: #{siamese_forward.1} parent=1 // pred_region
      %s2963 = ssub.s32 32, 32
      %2964 = vsyncadd [#allocation20], %s2963
      %s2966 = sshll.u32 [#allocation19], 4
      %s2967 = int_to_ptr.vmem [resolvable:$true] %s2966
      %2969 = dma.vmem_to_hbm [thread:$0]  %s2967, 32, %s5, [#allocation20]
    $region37: #{siamese_forward.1} parent=1 // pred_fallthru
      _
    // Predicated region
    $region38: #{siamese_forward.1} parent=1 // pred_check
      _
    $region39: #{siamese_forward.1} parent=1 // pred_check_branch
      %2971 = sbr.rel (0) target = $region41
    $region40: #{siamese_forward.1} parent=1 // pred_region
      %2972 = dma.done [#allocation14], 32
    $region41: #{siamese_forward.1} parent=1 // pred_fallthru
      _
    // Predicated region
    $region42: #{siamese_forward.1} parent=1 // pred_check
      _
    $region43: #{siamese_forward.1} parent=1 // pred_check_branch
      %2974 = sbr.rel (0) target = $region45
    $region44: #{siamese_forward.1} parent=1 // pred_region
      %2975 = dma.done [#allocation20], 32
    $region45: #{siamese_forward.1} parent=1 // pred_fallthru
      _
    %2976 = vsyncpa [#allocation13], 1
    %2977 = vsyncpa [#allocation16], 1
    %2978 = vsyncpa [#allocation14], 1
    %2979 = vsyncpa [#allocation20], 1

</llo_original>
